<compile_context>
chip_gen: v7x
topology: tpu7x:2x2x1
jax: 0.10.0
libtpu: 0.0.40
codegen_flags: <defaults>
</compile_context>

<pallas_src>
import functools

import numpy as np
import jax
import jax.numpy as jnp
from jax.experimental import pallas as pl
from jax.experimental.pallas import tpu as pltpu

LANE = 128                 # lane-dense padding target for every matmul output dim
BT = 128                   # batch tile for the large-batch tiled path (256 also fine on v6e/v7x)
SINGLE_BLOCK_MAX_B = 512   # below this, run one full-array block (no padding, no slicing)


def _round_up(x, m):
    return (x + m - 1) // m * m


# ----------------------------------------------------------------------------- kernel
def model_kernel(x_ref, wc_ref, w12_ref, b_ref, out_ref):
    # x_ref   : (Bt, K)        flattened input rows (K = num * word_vec_size, un-padded)
    # wc_ref  : (K, 128)       Toeplitz-packed conv weight (col f = c*HOUT + h)
    # w12_ref : (2, 128, 128)  stacked linear weights (in-features x out-features)
    # b_ref   : (3, 128)       bias slab: row0 conv (repeated per h), row1 lin1, row2 lin2
    # out_ref : (Bt, 20 or 128) logits
    hi = jax.lax.Precision.HIGHEST
    feat = jnp.tanh(
        jnp.dot(x_ref[...], wc_ref[...],
                preferred_element_type=jnp.float32, precision=hi)
        + b_ref[0:1, :])
    h1 = jnp.tanh(
        jnp.dot(feat, w12_ref[0],
                preferred_element_type=jnp.float32, precision=hi)
        + b_ref[1:2, :])
    out = (jnp.dot(h1, w12_ref[1],
                   preferred_element_type=jnp.float32, precision=hi)
           + b_ref[2:3, :])
    out_ref[...] = out[:, : out_ref.shape[-1]]


# ----------------------------------------------------------------------------- packing (one-time, host-side)
def pack_params(conv_w, conv_b, lin1_w, lin1_b, lin2_w, lin2_b, *, num):
    """Hoists every transpose / permutation / Toeplitz build out of the forward.

    PyTorch layouts: conv_w (C,1,KH,WV), conv_b (C,), lin1_w (H1,F1), lin1_b (H1,),
    lin2_w (OUT,H1), lin2_b (OUT,)."""
    conv_w = np.asarray(conv_w, np.float32)
    conv_b = np.asarray(conv_b, np.float32)
    lin1_w = np.asarray(lin1_w, np.float32)
    lin1_b = np.asarray(lin1_b, np.float32)
    lin2_w = np.asarray(lin2_w, np.float32)
    lin2_b = np.asarray(lin2_b, np.float32)

    C, _, KH, WV = conv_w.shape
    HOUT = num - KH + 1
    F1 = C * HOUT
    H1 = lin1_w.shape[0]
    OUT = lin2_w.shape[0]
    assert F1 <= LANE and H1 <= LANE and OUT <= LANE
    K = num * WV

    # Toeplitz conv weight: wconv[n*WV + w, c*HOUT + h] = conv_w[c, 0, n-h, w]
    # (column index == PyTorch NCHW flatten index, so Flatten is free in-kernel)
    cw = np.transpose(conv_w[:, 0], (1, 2, 0))            # (KH, WV, C)
    w4 = np.zeros((num, WV, C, HOUT), np.float32)
    for kh in range(KH):
        for h in range(HOUT):
            w4[h + kh, :, :, h] = cw[kh]
    wconv = np.zeros((K, LANE), np.float32)
    wconv[:, :F1] = w4.reshape(K, F1)

    biases = np.zeros((3, LANE), np.float32)
    biases[0, :F1] = np.repeat(conv_b, HOUT)               # bias[c*HOUT + h] = conv_b[c]
    biases[1, :H1] = lin1_b
    biases[2, :OUT] = lin2_b

    w12 = np.zeros((2, LANE, LANE), np.float32)
    w12[0, :F1, :H1] = lin1_w.T
    w12[1, :H1, :OUT] = lin2_w.T

    packed = tuple(jnp.asarray(a) for a in (wconv, w12, biases))
    meta = dict(K=K, out=OUT)
    return packed, meta


# ----------------------------------------------------------------------------- forward
@functools.partial(jax.jit, static_argnames=("out_dim",))
def _model_forward(x_nchw, wconv, w12, biases, *, out_dim):
    B = x_nchw.shape[0]
    K = x_nchw.shape[2] * x_nchw.shape[3]
    # Contiguous NCHW flatten -> layout-compatible reshape (effectively a bitcast).
    x2d = x_nchw.reshape(B, K).astype(jnp.float32)

    weight_specs = [
        pl.BlockSpec((K, LANE), lambda i: (0, 0)),
        pl.BlockSpec((2, LANE, LANE), lambda i: (0, 0, 0)),
        pl.BlockSpec((3, LANE), lambda i: (0, 0)),
    ]

    if B <= SINGLE_BLOCK_MAX_B:
        # One grid step, full-array blocks (the "equal the full array dims" escape of
        # the (8,128) rule): no batch pad, no K pad, output written as (B, out_dim)
        # directly -> no extra XLA fusions around the kernel.
        return pl.pallas_call(
            model_kernel,
            out_shape=jax.ShapeDtypeStruct((B, out_dim), jnp.float32),
            grid=(1,),
            in_specs=[pl.BlockSpec((B, K), lambda i: (0, 0))] + weight_specs,
            out_specs=pl.BlockSpec((B, out_dim), lambda i: (0, 0)),
            compiler_params=pltpu.CompilerParams(
                dimension_semantics=("arbitrary",)),
        )(x2d, wconv, w12, biases)

    # Large batch: 128-row batch tiles fill the MXU M dim; lane-dense (BT,128) output
    # tiles (unmasked stores); tiles shard across TensorCores via "parallel".
    Bp = _round_up(B, BT)
    xp = jnp.pad(x2d, ((0, Bp - B), (0, 0)))
    out_pad = pl.pallas_call(
        model_kernel,
        out_shape=jax.ShapeDtypeStruct((Bp, LANE), jnp.float32),
        grid=(Bp // BT,),
        in_specs=[pl.BlockSpec((BT, K), lambda i: (i, 0))] + weight_specs,
        out_specs=pl.BlockSpec((BT, LANE), lambda i: (i, 0)),
        compiler_params=pltpu.CompilerParams(
            dimension_semantics=("parallel",)),
    )(xp, wconv, w12, biases)
    return out_pad[:B, :out_dim]


def model_forward(x_nchw, packed, meta):
    wconv, w12, biases = packed
    return _model_forward(x_nchw, wconv, w12, biases, out_dim=meta["out"])


# ----------------------------------------------------------------------------- reference
def ref_forward(x_nchw, conv_w, conv_b, lin1_w, lin1_b, lin2_w, lin2_b):
    hi = jax.lax.Precision.HIGHEST
    conv = jax.lax.conv_general_dilated(
        x_nchw, conv_w, window_strides=(1, 1), padding="VALID",
        dimension_numbers=("NCHW", "OIHW", "NCHW"), precision=hi)
    conv = jnp.tanh(conv + conv_b[None, :, None, None])       # (B, C, HOUT, 1)
    feat = conv.reshape(conv.shape[0], -1)                    # NCHW flatten (c*HOUT+h)
    h1 = jnp.tanh(jnp.dot(feat, lin1_w.T, precision=hi) + lin1_b)
    return jnp.dot(h1, lin2_w.T, precision=hi) + lin2_b
    # NOTE: like the PyTorch forward, no softmax is applied (self.softmax is unused).


# ----------------------------------------------------------------------------- main
if __name__ == "__main__":
    # Shapes consistent with the module: word_vec_size=50 (forced by conv kernel
    # width), num=16 (instead of default 80), batch=2, 8 conv channels.
    B, NUM, WV, C, KH = 2, 16, 50, 8, 3
    HOUT = NUM - KH + 1
    F1, H1, OUT = C * HOUT, 2 * HOUT, 20

    key = jax.random.PRNGKey(0)
    k = jax.random.split(key, 8)
    x = jax.random.normal(k[0], (B, 1, NUM, WV), dtype=jnp.float32)

    conv_w = 0.1 * jax.random.normal(k[1], (C, 1, KH, WV), dtype=jnp.float32)
    conv_b = 0.1 * jax.random.normal(k[2], (C,), dtype=jnp.float32)
    lin1_w = 0.1 * jax.random.normal(k[3], (H1, F1), dtype=jnp.float32)
    lin1_b = 0.1 * jax.random.normal(k[4], (H1,), dtype=jnp.float32)
    lin2_w = 0.1 * jax.random.normal(k[5], (OUT, H1), dtype=jnp.float32)
    lin2_b = 0.1 * jax.random.normal(k[6], (OUT,), dtype=jnp.float32)

    # One-time parameter packing (off the hot path).
    packed, meta = pack_params(conv_w, conv_b, lin1_w, lin1_b, lin2_w, lin2_b, num=NUM)

    # Small-batch (single full-array block, zero host-side padding) path.
    out = jax.block_until_ready(model_forward(x, packed, meta))
    ref = ref_forward(x, conv_w, conv_b, lin1_w, lin1_b, lin2_w, lin2_b)
    assert out.shape == (B, OUT)
    err = float(jnp.abs(out - ref).max())
    assert jnp.allclose(out, ref, atol=1e-4, rtol=1e-4), err

    # Large-batch tiled path (BT=128 batch tiles, "parallel" across TensorCores).
    B2 = 600
    x2 = jax.random.normal(k[7], (B2, 1, NUM, WV), dtype=jnp.float32)
    out2 = jax.block_until_ready(model_forward(x2, packed, meta))
    ref2 = ref_forward(x2, conv_w, conv_b, lin1_w, lin1_b, lin2_w, lin2_b)
    assert out2.shape == (B2, OUT)
    err2 = float(jnp.abs(out2 - ref2).max())
    assert jnp.allclose(out2, ref2, atol=1e-4, rtol=1e-4), err2

    print("KERNEL_OK")
</pallas_src>

<mosaic_0001>
module attributes {stable_mosaic.version = 11 : i64} {
  func.func @model_kernel(%arg0: i32, %arg1: memref<2x800xf32, #tpu.memory_space<vmem>>, %arg2: memref<800x128xf32, #tpu.memory_space<vmem>>, %arg3: memref<2x128x128xf32, #tpu.memory_space<vmem>>, %arg4: memref<3x128xf32, #tpu.memory_space<vmem>>, %arg5: memref<2x20xf32, #tpu.memory_space<vmem>>) attributes {dimension_semantics = [#tpu.dimension_semantics<arbitrary>], iteration_bounds = array<i64: 1>, scalar_prefetch = 0 : i64, scratch_operands = 0 : i64, tpu.core_type = #tpu.core_type<tc>, window_params = [{pipeline_mode = #tpu.pipeline_mode<synchronous>, transform_indices = @transform_0, window_bounds = array<i64: 2, 800>}, {pipeline_mode = #tpu.pipeline_mode<synchronous>, transform_indices = @transform_1, window_bounds = array<i64: 800, 128>}, {pipeline_mode = #tpu.pipeline_mode<synchronous>, transform_indices = @transform_2, window_bounds = array<i64: 2, 128, 128>}, {pipeline_mode = #tpu.pipeline_mode<synchronous>, transform_indices = @transform_3, window_bounds = array<i64: 3, 128>}, {pipeline_mode = #tpu.pipeline_mode<synchronous>, transform_indices = @transform_4, window_bounds = array<i64: 2, 20>}]} {
    %c0 = arith.constant 0 : index
    %c0_0 = arith.constant 0 : index
    %0 = vector.load %arg1[%c0, %c0_0] : memref<2x800xf32, #tpu.memory_space<vmem>>, vector<2x800xf32>
    %c0_1 = arith.constant 0 : index
    %c0_2 = arith.constant 0 : index
    %1 = vector.load %arg2[%c0_1, %c0_2] : memref<800x128xf32, #tpu.memory_space<vmem>>, vector<800x128xf32>
    %cst = arith.constant dense<0.000000e+00> : vector<2x128xf32>
    %2 = tpu.matmul %0, %1, %cst {dimension_numbers = #tpu.dot_dimension_numbers<[1], [0], [0], [1], [0, 0, 1, 1], [], []>, precision = #tpu.contract_precision<fp32>} : vector<2x800xf32>, vector<800x128xf32>, vector<2x128xf32> -> vector<2x128xf32>
    %c0_3 = arith.constant 0 : index
    %c0_4 = arith.constant 0 : index
    %3 = vector.load %arg4[%c0_3, %c0_4] : memref<3x128xf32, #tpu.memory_space<vmem>>, vector<1x128xf32>
    %4 = vector.broadcast %3 : vector<1x128xf32> to vector<2x128xf32>
    %5 = arith.addf %2, %4 : vector<2x128xf32>
    %6 = math.tanh %5 : vector<2x128xf32>
    %c0_5 = arith.constant 0 : index
    %c0_6 = arith.constant 0 : index
    %c0_7 = arith.constant 0 : index
    %7 = vector.load %arg3[%c0_5, %c0_6, %c0_7] : memref<2x128x128xf32, #tpu.memory_space<vmem>>, vector<1x128x128xf32>
    %8 = vector.shape_cast %7 : vector<1x128x128xf32> to vector<128x128xf32>
    %cst_8 = arith.constant dense<0.000000e+00> : vector<2x128xf32>
    %9 = tpu.matmul %6, %8, %cst_8 {dimension_numbers = #tpu.dot_dimension_numbers<[1], [0], [0], [1], [0, 0, 1, 1], [], []>, precision = #tpu.contract_precision<fp32>} : vector<2x128xf32>, vector<128x128xf32>, vector<2x128xf32> -> vector<2x128xf32>
    %c1 = arith.constant 1 : index
    %c0_9 = arith.constant 0 : index
    %10 = vector.load %arg4[%c1, %c0_9] : memref<3x128xf32, #tpu.memory_space<vmem>>, vector<1x128xf32>
    %11 = vector.broadcast %10 : vector<1x128xf32> to vector<2x128xf32>
    %12 = arith.addf %9, %11 : vector<2x128xf32>
    %13 = math.tanh %12 : vector<2x128xf32>
    %c1_10 = arith.constant 1 : index
    %c0_11 = arith.constant 0 : index
    %c0_12 = arith.constant 0 : index
    %14 = vector.load %arg3[%c1_10, %c0_11, %c0_12] : memref<2x128x128xf32, #tpu.memory_space<vmem>>, vector<1x128x128xf32>
    %15 = vector.shape_cast %14 : vector<1x128x128xf32> to vector<128x128xf32>
    %cst_13 = arith.constant dense<0.000000e+00> : vector<2x128xf32>
    %16 = tpu.matmul %13, %15, %cst_13 {dimension_numbers = #tpu.dot_dimension_numbers<[1], [0], [0], [1], [0, 0, 1, 1], [], []>, precision = #tpu.contract_precision<fp32>} : vector<2x128xf32>, vector<128x128xf32>, vector<2x128xf32> -> vector<2x128xf32>
    %c2 = arith.constant 2 : index
    %c0_14 = arith.constant 0 : index
    %17 = vector.load %arg4[%c2, %c0_14] : memref<3x128xf32, #tpu.memory_space<vmem>>, vector<1x128xf32>
    %18 = vector.broadcast %17 : vector<1x128xf32> to vector<2x128xf32>
    %19 = arith.addf %16, %18 : vector<2x128xf32>
    %20 = vector.extract_strided_slice %19 {offsets = [0, 0], sizes = [2, 20], strides = [1, 1]} : vector<2x128xf32> to vector<2x20xf32>
    %c0_15 = arith.constant 0 : index
    %c0_16 = arith.constant 0 : index
    %21 = vector.load %arg5[%c0_15, %c0_16] : memref<2x20xf32, #tpu.memory_space<vmem>>, vector<2x20xf32>
    tpu.vector_store %arg5[%c0_15, %c0_16], %20 {strides = array<i32>} : memref<2x20xf32, #tpu.memory_space<vmem>>, vector<2x20xf32>,
    return
  }
  func.func @transform_0(%arg0: i32) -> (i32, i32) {
    %c0_i32 = arith.constant 0 : i32
    %c0_i32_0 = arith.constant 0 : i32
    %c0_i32_1 = arith.constant 0 : i32
    return %c0_i32, %c0_i32_0 : i32, i32
  }
  func.func @transform_1(%arg0: i32) -> (i32, i32) {
    %c0_i32 = arith.constant 0 : i32
    %c0_i32_0 = arith.constant 0 : i32
    %c0_i32_1 = arith.constant 0 : i32
    return %c0_i32, %c0_i32_0 : i32, i32
  }
  func.func @transform_2(%arg0: i32) -> (i32, i32, i32) {
    %c0_i32 = arith.constant 0 : i32
    %c0_i32_0 = arith.constant 0 : i32
    %c0_i32_1 = arith.constant 0 : i32
    %c0_i32_2 = arith.constant 0 : i32
    return %c0_i32, %c0_i32_0, %c0_i32_1 : i32, i32, i32
  }
  func.func @transform_3(%arg0: i32) -> (i32, i32) {
    %c0_i32 = arith.constant 0 : i32
    %c0_i32_0 = arith.constant 0 : i32
    %c0_i32_1 = arith.constant 0 : i32
    return %c0_i32, %c0_i32_0 : i32, i32
  }
  func.func @transform_4(%arg0: i32) -> (i32, i32) {
    %c0_i32 = arith.constant 0 : i32
    %c0_i32_0 = arith.constant 0 : i32
    %c0_i32_1 = arith.constant 0 : i32
    return %c0_i32, %c0_i32_0 : i32, i32
  }
}

</mosaic_0001>

<llo_original>
// kernel: _model_forward.1
$region0: #{_model_forward.1}
  #allocation0 [shape = 'u32[]', space=smem, size = 0x4, offset = 0x4, fixed_abs, tag = 'smem constant byte address 0x4 - core index']
  #allocation1 [shape = 'u32[144,128]{1,0:T(1,128)}', space=vmem, size = 0x12000, scoped, tag = 'internal scratch']
  %s0 = inlined_call_operand.vmem [shape: f32[2,800], index: 0, kind: input, shape index: {}]
  %s1 = inlined_call_operand.hbm [shape: f32[800,128], index: 1, kind: input, shape index: {}]
  %s2 = inlined_call_operand.hbm [shape: f32[2,128,128], index: 2, kind: input, shape index: {}]
  %s3 = inlined_call_operand.vmem [shape: f32[3,128], index: 3, kind: input, shape index: {}]
  %s4 = inlined_call_operand.hbm [shape: f32[2,20], index: 4, kind: output, shape index: {}]
  %s5 = sld [smem:[#allocation0]]
  $region34: #{_model_forward.1} parent=0
    _
  %s7 = ssub.s32 1, %s5
  %s8 = scalar_select 0, %s7, %s5
  $region1: #{_model_forward.1} parent=0
    #allocation2 [shape = 'u8[409600]{0}', space=vmem, size = 0x64000, scoped, tag = 'input window, operand 1, single buffered']
    #allocation3 [shape = 's32[1]{0}', space=sflag, size = 0x4, scoped, tag = 'scoped memory for _model_forward.1']
    #allocation4 [shape = 's32[1]{0}', space=sflag, size = 0x4, scoped, tag = 'scoped memory for _model_forward.1']
    #allocation5 [shape = 'u8[131072]{0}', space=vmem, size = 0x20000, scoped, tag = 'input window, operand 2, single buffered']
    #allocation6 [shape = 's32[1]{0}', space=sflag, size = 0x4, scoped, tag = 'scoped memory for _model_forward.1']
    #allocation7 [shape = 'u8[1024]{0}', space=vmem, size = 0x400, scoped, tag = 'output window, operand 0, single buffered']
    %9 = vsyncpa [#allocation3], 0
    %10 = vsyncpa [#allocation6], 0
    %11 = vsyncpa [#allocation4], 0
    // Predicated region
    $region2: #{_model_forward.1} parent=1 // pred_check
      _
    $region3: #{_model_forward.1} parent=1 // pred_check_branch
      %13 = sbr.rel (0) target = $region5
    $region4: #{_model_forward.1} parent=1 // pred_region
      _
    $region5: #{_model_forward.1} parent=1 // pred_fallthru
      _
    // Predicated region
    $region6: #{_model_forward.1} parent=1 // pred_check
      _
    $region7: #{_model_forward.1} parent=1 // pred_check_branch
      %15 = sbr.rel (0) target = $region9
    $region8: #{_model_forward.1} parent=1 // pred_region
      %s17 = ssub.s32 12800, 12800
      %18 = vsyncadd [#allocation3], %s17
      %s19 = sshll.u32 [#allocation2], 4
      %s20 = int_to_ptr.vmem [resolvable:$true] %s19
      %25 = dma.hbm_to_vmem [thread:$0]  %s1, 12800, %s20, [#allocation3], 128, 128, 8
    $region9: #{_model_forward.1} parent=1 // pred_fallthru
      _
    // Predicated region
    $region10: #{_model_forward.1} parent=1 // pred_check
      _
    $region11: #{_model_forward.1} parent=1 // pred_check_branch
      %27 = sbr.rel (0) target = $region13
    $region12: #{_model_forward.1} parent=1 // pred_region
      %s29 = ssub.s32 4096, 4096
      %30 = vsyncadd [#allocation6], %s29
      %s31 = sshll.u32 [#allocation5], 4
      %s32 = int_to_ptr.vmem [resolvable:$true] %s31
      %37 = dma.hbm_to_vmem [thread:$0]  %s2, 4096, %s32, [#allocation6], 128, 128, 8
    $region13: #{_model_forward.1} parent=1 // pred_fallthru
      _
    // Predicated region
    $region14: #{_model_forward.1} parent=1 // pred_check
      _
    $region15: #{_model_forward.1} parent=1 // pred_check_branch
      %39 = sbr.rel (0) target = $region17
    $region16: #{_model_forward.1} parent=1 // pred_region
      _
    $region17: #{_model_forward.1} parent=1 // pred_fallthru
      _
    // Predicated region
    $region18: #{_model_forward.1} parent=1 // pred_check
      _
    $region19: #{_model_forward.1} parent=1 // pred_check_branch
      %41 = sbr.rel (0) target = $region21
    $region20: #{_model_forward.1} parent=1 // pred_region
      %42 = dma.done [#allocation3], 12800
    $region21: #{_model_forward.1} parent=1 // pred_fallthru
      _
    // Predicated region
    $region22: #{_model_forward.1} parent=1 // pred_check
      _
    $region23: #{_model_forward.1} parent=1 // pred_check_branch
      %44 = sbr.rel (0) target = $region25
    $region24: #{_model_forward.1} parent=1 // pred_region
      %45 = dma.done [#allocation6], 4096
    $region25: #{_model_forward.1} parent=1 // pred_fallthru
      _
    %v46 = vld [vmem:[%s0] sm:$0xff]
    %v47 = vld [vmem:[%s0 + $0x8] sm:$0x3f]
    %v48 = vld [vmem:[#allocation2] sm:$0xff]
    %v49 = vld [vmem:[#allocation2 + $0x8] sm:$0xff]
    %v50 = vld [vmem:[#allocation2 + $0x10] sm:$0xff]
    %v51 = vld [vmem:[#allocation2 + $0x18] sm:$0xff]
    %v52 = vld [vmem:[#allocation2 + $0x20] sm:$0xff]
    %v53 = vld [vmem:[#allocation2 + $0x28] sm:$0xff]
    %v54 = vld [vmem:[#allocation2 + $0x30] sm:$0xff]
    %v55 = vld [vmem:[#allocation2 + $0x38] sm:$0xff]
    %v56 = vld [vmem:[#allocation2 + $0x40] sm:$0xff]
    %v57 = vld [vmem:[#allocation2 + $0x48] sm:$0xff]
    %v58 = vld [vmem:[#allocation2 + $0x50] sm:$0xff]
    %v59 = vld [vmem:[#allocation2 + $0x58] sm:$0xff]
    %v60 = vld [vmem:[#allocation2 + $0x60] sm:$0xff]
    %v61 = vld [vmem:[#allocation2 + $0x68] sm:$0xff]
    %v62 = vld [vmem:[#allocation2 + $0x70] sm:$0xff]
    %v63 = vld [vmem:[#allocation2 + $0x78] sm:$0xff]
    %v64 = vld [vmem:[#allocation2 + $0x80] sm:$0xff]
    %v65 = vld [vmem:[#allocation2 + $0x88] sm:$0xff]
    %v66 = vld [vmem:[#allocation2 + $0x90] sm:$0xff]
    %v67 = vld [vmem:[#allocation2 + $0x98] sm:$0xff]
    %v68 = vld [vmem:[#allocation2 + $0xa0] sm:$0xff]
    %v69 = vld [vmem:[#allocation2 + $0xa8] sm:$0xff]
    %v70 = vld [vmem:[#allocation2 + $0xb0] sm:$0xff]
    %v71 = vld [vmem:[#allocation2 + $0xb8] sm:$0xff]
    %v72 = vld [vmem:[#allocation2 + $0xc0] sm:$0xff]
    %v73 = vld [vmem:[#allocation2 + $0xc8] sm:$0xff]
    %v74 = vld [vmem:[#allocation2 + $0xd0] sm:$0xff]
    %v75 = vld [vmem:[#allocation2 + $0xd8] sm:$0xff]
    %v76 = vld [vmem:[#allocation2 + $0xe0] sm:$0xff]
    %v77 = vld [vmem:[#allocation2 + $0xe8] sm:$0xff]
    %v78 = vld [vmem:[#allocation2 + $0xf0] sm:$0xff]
    %v79 = vld [vmem:[#allocation2 + $0xf8] sm:$0xff]
    %v80 = vld [vmem:[#allocation2 + $0x100] sm:$0xff]
    %v81 = vld [vmem:[#allocation2 + $0x108] sm:$0xff]
    %v82 = vld [vmem:[#allocation2 + $0x110] sm:$0xff]
    %v83 = vld [vmem:[#allocation2 + $0x118] sm:$0xff]
    %v84 = vld [vmem:[#allocation2 + $0x120] sm:$0xff]
    %v85 = vld [vmem:[#allocation2 + $0x128] sm:$0xff]
    %v86 = vld [vmem:[#allocation2 + $0x130] sm:$0xff]
    %v87 = vld [vmem:[#allocation2 + $0x138] sm:$0xff]
    %v88 = vld [vmem:[#allocation2 + $0x140] sm:$0xff]
    %v89 = vld [vmem:[#allocation2 + $0x148] sm:$0xff]
    %v90 = vld [vmem:[#allocation2 + $0x150] sm:$0xff]
    %v91 = vld [vmem:[#allocation2 + $0x158] sm:$0xff]
    %v92 = vld [vmem:[#allocation2 + $0x160] sm:$0xff]
    %v93 = vld [vmem:[#allocation2 + $0x168] sm:$0xff]
    %v94 = vld [vmem:[#allocation2 + $0x170] sm:$0xff]
    %v95 = vld [vmem:[#allocation2 + $0x178] sm:$0xff]
    %v96 = vld [vmem:[#allocation2 + $0x180] sm:$0xff]
    %v97 = vld [vmem:[#allocation2 + $0x188] sm:$0xff]
    %v98 = vld [vmem:[#allocation2 + $0x190] sm:$0xff]
    %v99 = vld [vmem:[#allocation2 + $0x198] sm:$0xff]
    %v100 = vld [vmem:[#allocation2 + $0x1a0] sm:$0xff]
    %v101 = vld [vmem:[#allocation2 + $0x1a8] sm:$0xff]
    %v102 = vld [vmem:[#allocation2 + $0x1b0] sm:$0xff]
    %v103 = vld [vmem:[#allocation2 + $0x1b8] sm:$0xff]
    %v104 = vld [vmem:[#allocation2 + $0x1c0] sm:$0xff]
    %v105 = vld [vmem:[#allocation2 + $0x1c8] sm:$0xff]
    %v106 = vld [vmem:[#allocation2 + $0x1d0] sm:$0xff]
    %v107 = vld [vmem:[#allocation2 + $0x1d8] sm:$0xff]
    %v108 = vld [vmem:[#allocation2 + $0x1e0] sm:$0xff]
    %v109 = vld [vmem:[#allocation2 + $0x1e8] sm:$0xff]
    %v110 = vld [vmem:[#allocation2 + $0x1f0] sm:$0xff]
    %v111 = vld [vmem:[#allocation2 + $0x1f8] sm:$0xff]
    %v112 = vld [vmem:[#allocation2 + $0x200] sm:$0xff]
    %v113 = vld [vmem:[#allocation2 + $0x208] sm:$0xff]
    %v114 = vld [vmem:[#allocation2 + $0x210] sm:$0xff]
    %v115 = vld [vmem:[#allocation2 + $0x218] sm:$0xff]
    %v116 = vld [vmem:[#allocation2 + $0x220] sm:$0xff]
    %v117 = vld [vmem:[#allocation2 + $0x228] sm:$0xff]
    %v118 = vld [vmem:[#allocation2 + $0x230] sm:$0xff]
    %v119 = vld [vmem:[#allocation2 + $0x238] sm:$0xff]
    %v120 = vld [vmem:[#allocation2 + $0x240] sm:$0xff]
    %v121 = vld [vmem:[#allocation2 + $0x248] sm:$0xff]
    %v122 = vld [vmem:[#allocation2 + $0x250] sm:$0xff]
    %v123 = vld [vmem:[#allocation2 + $0x258] sm:$0xff]
    %v124 = vld [vmem:[#allocation2 + $0x260] sm:$0xff]
    %v125 = vld [vmem:[#allocation2 + $0x268] sm:$0xff]
    %v126 = vld [vmem:[#allocation2 + $0x270] sm:$0xff]
    %v127 = vld [vmem:[#allocation2 + $0x278] sm:$0xff]
    %v128 = vld [vmem:[#allocation2 + $0x280] sm:$0xff]
    %v129 = vld [vmem:[#allocation2 + $0x288] sm:$0xff]
    %v130 = vld [vmem:[#allocation2 + $0x290] sm:$0xff]
    %v131 = vld [vmem:[#allocation2 + $0x298] sm:$0xff]
    %v132 = vld [vmem:[#allocation2 + $0x2a0] sm:$0xff]
    %v133 = vld [vmem:[#allocation2 + $0x2a8] sm:$0xff]
    %v134 = vld [vmem:[#allocation2 + $0x2b0] sm:$0xff]
    %v135 = vld [vmem:[#allocation2 + $0x2b8] sm:$0xff]
    %v136 = vld [vmem:[#allocation2 + $0x2c0] sm:$0xff]
    %v137 = vld [vmem:[#allocation2 + $0x2c8] sm:$0xff]
    %v138 = vld [vmem:[#allocation2 + $0x2d0] sm:$0xff]
    %v139 = vld [vmem:[#allocation2 + $0x2d8] sm:$0xff]
    %v140 = vld [vmem:[#allocation2 + $0x2e0] sm:$0xff]
    %v141 = vld [vmem:[#allocation2 + $0x2e8] sm:$0xff]
    %v142 = vld [vmem:[#allocation2 + $0x2f0] sm:$0xff]
    %v143 = vld [vmem:[#allocation2 + $0x2f8] sm:$0xff]
    %v144 = vld [vmem:[#allocation2 + $0x300] sm:$0xff]
    %v145 = vld [vmem:[#allocation2 + $0x308] sm:$0xff]
    %v146 = vld [vmem:[#allocation2 + $0x310] sm:$0xff]
    %v147 = vld [vmem:[#allocation2 + $0x318] sm:$0xff]
    %v148 = vld [vmem:[%s3] sm:$0x1]
    %v149 = vlaneseq
    %v150 = vshrl.u32 %v149, 7
    %v151 = vsub.s32 0, %v150
    %v152 = vrot.slane %v148, %v151
    %v155 = vcombine.high %v46, %v46
    %v157 = vunpack.c.l.s4 1983009808
    %v158 = vunpack.c.0.s8 %v157
    %v159 = vlaneseq
    %v160 = vshrl.u32 %v159, 7
    %v161 = vsub.s32 %v158, %v160
    %v162 = vrot.slane %v46, %v161
    %v164 = vunpack.c.l.s4 1983009808
    %v165 = vunpack.c.0.s8 %v164
    %v166 = vlaneseq
    %v167 = vshrl.u32 %v166, 7
    %v168 = vsub.s32 %v165, %v167
    %v169 = vrot.slane %v155, %v168
    %v170 = vcombine.high %v162, %v162
    %v171 = vcombine.high %v169, %v169
    %v172 = vcombine.high %v47, %v47
    %v174 = vunpack.c.l.s4 1983009808
    %v175 = vunpack.c.0.s8 %v174
    %v176 = vlaneseq
    %v177 = vshrl.u32 %v176, 7
    %v178 = vsub.s32 %v175, %v177
    %v179 = vrot.slane %v47, %v178
    %v181 = vunpack.c.l.s4 1983009808
    %v182 = vunpack.c.0.s8 %v181
    %v183 = vlaneseq
    %v184 = vshrl.u32 %v183, 7
    %v185 = vsub.s32 %v182, %v184
    %v186 = vrot.slane %v172, %v185
    %v187 = vcombine.high %v179, %v179
    %vm194 = vcmask 261120
    %v195 = vsel %vm194, %v186, 0
    %197 = vmatprep.subr.mxu0 0.0
    %v198 = vand.u32 %v48, 4294901760
    %199 = vmatpush1.msra.mxu0 %v198
    %200 = vmatprep.subr.mxu0 0.0
    %v201 = vand.u32 %v49, 4294901760
    %202 = vmatpush1.msra.mxu0 %v201
    %203 = vmatprep.subr.mxu0 0.0
    %v204 = vand.u32 %v50, 4294901760
    %205 = vmatpush1.msra.mxu0 %v204
    %206 = vmatprep.subr.mxu0 0.0
    %v207 = vand.u32 %v51, 4294901760
    %208 = vmatpush1.msra.mxu0 %v207
    %209 = vmatprep.subr.mxu0 0.0
    %v210 = vand.u32 %v52, 4294901760
    %211 = vmatpush1.msra.mxu0 %v210
    %212 = vmatprep.subr.mxu0 0.0
    %v213 = vand.u32 %v53, 4294901760
    %214 = vmatpush1.msra.mxu0 %v213
    %215 = vmatprep.subr.mxu0 0.0
    %v216 = vand.u32 %v54, 4294901760
    %217 = vmatpush1.msra.mxu0 %v216
    %218 = vmatprep.subr.mxu0 0.0
    %v219 = vand.u32 %v55, 4294901760
    %220 = vmatpush1.msra.mxu0 %v219
    %221 = vmatprep.subr.mxu0 0.0
    %v222 = vand.u32 %v56, 4294901760
    %223 = vmatpush1.msra.mxu0 %v222
    %224 = vmatprep.subr.mxu0 0.0
    %v225 = vand.u32 %v57, 4294901760
    %226 = vmatpush1.msra.mxu0 %v225
    %227 = vmatprep.subr.mxu0 0.0
    %v228 = vand.u32 %v58, 4294901760
    %229 = vmatpush1.msra.mxu0 %v228
    %230 = vmatprep.subr.mxu0 0.0
    %v231 = vand.u32 %v59, 4294901760
    %232 = vmatpush1.msra.mxu0 %v231
    %233 = vmatprep.subr.mxu0 0.0
    %v234 = vand.u32 %v60, 4294901760
    %235 = vmatpush1.msra.mxu0 %v234
    %236 = vmatprep.subr.mxu0 0.0
    %v237 = vand.u32 %v61, 4294901760
    %238 = vmatpush1.msra.mxu0 %v237
    %239 = vmatprep.subr.mxu0 0.0
    %v240 = vand.u32 %v62, 4294901760
    %241 = vmatpush1.msra.mxu0 %v240
    %242 = vmatprep.subr.mxu0 0.0
    %v243 = vand.u32 %v63, 4294901760
    %244 = vmatpush1.msra.mxu0 %v243
    %245 = vmatprep.subr.mxu0 0.0
    %v246 = vand.u32 %v64, 4294901760
    %247 = vmatpush1.msra.mxu0 %v246
    %248 = vmatprep.subr.mxu0 0.0
    %v249 = vand.u32 %v65, 4294901760
    %250 = vmatpush1.msra.mxu0 %v249
    %251 = vmatprep.subr.mxu0 0.0
    %v252 = vand.u32 %v66, 4294901760
    %253 = vmatpush1.msra.mxu0 %v252
    %254 = vmatprep.subr.mxu0 0.0
    %v255 = vand.u32 %v67, 4294901760
    %256 = vmatpush1.msra.mxu0 %v255
    %257 = vmatprep.subr.mxu0 0.0
    %v258 = vand.u32 %v68, 4294901760
    %259 = vmatpush1.msra.mxu0 %v258
    %260 = vmatprep.subr.mxu0 0.0
    %v261 = vand.u32 %v69, 4294901760
    %262 = vmatpush1.msra.mxu0 %v261
    %263 = vmatprep.subr.mxu0 0.0
    %v264 = vand.u32 %v70, 4294901760
    %265 = vmatpush1.msra.mxu0 %v264
    %266 = vmatprep.subr.mxu0 0.0
    %v267 = vand.u32 %v71, 4294901760
    %268 = vmatpush1.msra.mxu0 %v267
    %269 = vmatprep.subr.mxu0 0.0
    %v270 = vand.u32 %v72, 4294901760
    %271 = vmatpush1.msra.mxu0 %v270
    %272 = vmatprep.subr.mxu0 0.0
    %v273 = vand.u32 %v73, 4294901760
    %274 = vmatpush1.msra.mxu0 %v273
    %275 = vmatprep.subr.mxu0 0.0
    %v276 = vand.u32 %v74, 4294901760
    %277 = vmatpush1.msra.mxu0 %v276
    %278 = vmatprep.subr.mxu0 0.0
    %v279 = vand.u32 %v75, 4294901760
    %280 = vmatpush1.msra.mxu0 %v279
    %281 = vmatprep.subr.mxu0 0.0
    %v282 = vand.u32 %v76, 4294901760
    %283 = vmatpush1.msra.mxu0 %v282
    %284 = vmatprep.subr.mxu0 0.0
    %v285 = vand.u32 %v77, 4294901760
    %286 = vmatpush1.msra.mxu0 %v285
    %287 = vmatprep.subr.mxu0 0.0
    %v288 = vand.u32 %v78, 4294901760
    %289 = vmatpush1.msra.mxu0 %v288
    %290 = vmatprep.subr.mxu0 0.0
    %v291 = vand.u32 %v79, 4294901760
    %292 = vmatpush1.msra.mxu0 %v291
    %v293 = vand.u32 %v170, 4294901760
    %v294 = vsub.f32 %v170, %v293
    %v295 = vand.u32 %v294, 4294901760
    %v296 = vsub.f32 %v294, %v295
    %v297 = vand.u32 %v296, 4294901760
    %298 = vmatprep.mubr.f32.mxu0 %v297
    %v299 = vand.u32 %v162, 4294901760
    %v300 = vsub.f32 %v162, %v299
    %v301 = vand.u32 %v300, 4294901760
    %v302 = vsub.f32 %v300, %v301
    %v303 = vand.u32 %v302, 4294901760
    %304 = vmatmul.mubr.f32.gmra.mrb[0].mxu0 %v303
    %v305 = vpop.f32.mrb[0].mxu0
    %v306 = vadd.f32 %v152, %v305
    %v307 = vpop.f32.mrb[0].mxu0
    %308 = vdwg.mxu0
    %309 = vmatprep.subr.mxu0 0.0
    %v310 = vand.u32 %v48, 4294901760
    %v311 = vsub.f32 %v48, %v310
    %v312 = vand.u32 %v311, 4294901760
    %v313 = vsub.f32 %v311, %v312
    %v314 = vand.u32 %v313, 4294901760
    %315 = vmatpush1.msra.mxu0 %v314
    %316 = vmatprep.subr.mxu0 0.0
    %v317 = vand.u32 %v49, 4294901760
    %v318 = vsub.f32 %v49, %v317
    %v319 = vand.u32 %v318, 4294901760
    %v320 = vsub.f32 %v318, %v319
    %v321 = vand.u32 %v320, 4294901760
    %322 = vmatpush1.msra.mxu0 %v321
    %323 = vmatprep.subr.mxu0 0.0
    %v324 = vand.u32 %v50, 4294901760
    %v325 = vsub.f32 %v50, %v324
    %v326 = vand.u32 %v325, 4294901760
    %v327 = vsub.f32 %v325, %v326
    %v328 = vand.u32 %v327, 4294901760
    %329 = vmatpush1.msra.mxu0 %v328
    %330 = vmatprep.subr.mxu0 0.0
    %v331 = vand.u32 %v51, 4294901760
    %v332 = vsub.f32 %v51, %v331
    %v333 = vand.u32 %v332, 4294901760
    %v334 = vsub.f32 %v332, %v333
    %v335 = vand.u32 %v334, 4294901760
    %336 = vmatpush1.msra.mxu0 %v335
    %337 = vmatprep.subr.mxu0 0.0
    %v338 = vand.u32 %v52, 4294901760
    %v339 = vsub.f32 %v52, %v338
    %v340 = vand.u32 %v339, 4294901760
    %v341 = vsub.f32 %v339, %v340
    %v342 = vand.u32 %v341, 4294901760
    %343 = vmatpush1.msra.mxu0 %v342
    %344 = vmatprep.subr.mxu0 0.0
    %v345 = vand.u32 %v53, 4294901760
    %v346 = vsub.f32 %v53, %v345
    %v347 = vand.u32 %v346, 4294901760
    %v348 = vsub.f32 %v346, %v347
    %v349 = vand.u32 %v348, 4294901760
    %350 = vmatpush1.msra.mxu0 %v349
    %351 = vmatprep.subr.mxu0 0.0
    %v352 = vand.u32 %v54, 4294901760
    %v353 = vsub.f32 %v54, %v352
    %v354 = vand.u32 %v353, 4294901760
    %v355 = vsub.f32 %v353, %v354
    %v356 = vand.u32 %v355, 4294901760
    %357 = vmatpush1.msra.mxu0 %v356
    %358 = vmatprep.subr.mxu0 0.0
    %v359 = vand.u32 %v55, 4294901760
    %v360 = vsub.f32 %v55, %v359
    %v361 = vand.u32 %v360, 4294901760
    %v362 = vsub.f32 %v360, %v361
    %v363 = vand.u32 %v362, 4294901760
    %364 = vmatpush1.msra.mxu0 %v363
    %365 = vmatprep.subr.mxu0 0.0
    %v366 = vand.u32 %v56, 4294901760
    %v367 = vsub.f32 %v56, %v366
    %v368 = vand.u32 %v367, 4294901760
    %v369 = vsub.f32 %v367, %v368
    %v370 = vand.u32 %v369, 4294901760
    %371 = vmatpush1.msra.mxu0 %v370
    %372 = vmatprep.subr.mxu0 0.0
    %v373 = vand.u32 %v57, 4294901760
    %v374 = vsub.f32 %v57, %v373
    %v375 = vand.u32 %v374, 4294901760
    %v376 = vsub.f32 %v374, %v375
    %v377 = vand.u32 %v376, 4294901760
    %378 = vmatpush1.msra.mxu0 %v377
    %379 = vmatprep.subr.mxu0 0.0
    %v380 = vand.u32 %v58, 4294901760
    %v381 = vsub.f32 %v58, %v380
    %v382 = vand.u32 %v381, 4294901760
    %v383 = vsub.f32 %v381, %v382
    %v384 = vand.u32 %v383, 4294901760
    %385 = vmatpush1.msra.mxu0 %v384
    %386 = vmatprep.subr.mxu0 0.0
    %v387 = vand.u32 %v59, 4294901760
    %v388 = vsub.f32 %v59, %v387
    %v389 = vand.u32 %v388, 4294901760
    %v390 = vsub.f32 %v388, %v389
    %v391 = vand.u32 %v390, 4294901760
    %392 = vmatpush1.msra.mxu0 %v391
    %393 = vmatprep.subr.mxu0 0.0
    %v394 = vand.u32 %v60, 4294901760
    %v395 = vsub.f32 %v60, %v394
    %v396 = vand.u32 %v395, 4294901760
    %v397 = vsub.f32 %v395, %v396
    %v398 = vand.u32 %v397, 4294901760
    %399 = vmatpush1.msra.mxu0 %v398
    %400 = vmatprep.subr.mxu0 0.0
    %v401 = vand.u32 %v61, 4294901760
    %v402 = vsub.f32 %v61, %v401
    %v403 = vand.u32 %v402, 4294901760
    %v404 = vsub.f32 %v402, %v403
    %v405 = vand.u32 %v404, 4294901760
    %406 = vmatpush1.msra.mxu0 %v405
    %407 = vmatprep.subr.mxu0 0.0
    %v408 = vand.u32 %v62, 4294901760
    %v409 = vsub.f32 %v62, %v408
    %v410 = vand.u32 %v409, 4294901760
    %v411 = vsub.f32 %v409, %v410
    %v412 = vand.u32 %v411, 4294901760
    %413 = vmatpush1.msra.mxu0 %v412
    %414 = vmatprep.subr.mxu0 0.0
    %v415 = vand.u32 %v63, 4294901760
    %v416 = vsub.f32 %v63, %v415
    %v417 = vand.u32 %v416, 4294901760
    %v418 = vsub.f32 %v416, %v417
    %v419 = vand.u32 %v418, 4294901760
    %420 = vmatpush1.msra.mxu0 %v419
    %421 = vmatprep.subr.mxu0 0.0
    %v422 = vand.u32 %v64, 4294901760
    %v423 = vsub.f32 %v64, %v422
    %v424 = vand.u32 %v423, 4294901760
    %v425 = vsub.f32 %v423, %v424
    %v426 = vand.u32 %v425, 4294901760
    %427 = vmatpush1.msra.mxu0 %v426
    %428 = vmatprep.subr.mxu0 0.0
    %v429 = vand.u32 %v65, 4294901760
    %v430 = vsub.f32 %v65, %v429
    %v431 = vand.u32 %v430, 4294901760
    %v432 = vsub.f32 %v430, %v431
    %v433 = vand.u32 %v432, 4294901760
    %434 = vmatpush1.msra.mxu0 %v433
    %435 = vmatprep.subr.mxu0 0.0
    %v436 = vand.u32 %v66, 4294901760
    %v437 = vsub.f32 %v66, %v436
    %v438 = vand.u32 %v437, 4294901760
    %v439 = vsub.f32 %v437, %v438
    %v440 = vand.u32 %v439, 4294901760
    %441 = vmatpush1.msra.mxu0 %v440
    %442 = vmatprep.subr.mxu0 0.0
    %v443 = vand.u32 %v67, 4294901760
    %v444 = vsub.f32 %v67, %v443
    %v445 = vand.u32 %v444, 4294901760
    %v446 = vsub.f32 %v444, %v445
    %v447 = vand.u32 %v446, 4294901760
    %448 = vmatpush1.msra.mxu0 %v447
    %449 = vmatprep.subr.mxu0 0.0
    %v450 = vand.u32 %v68, 4294901760
    %v451 = vsub.f32 %v68, %v450
    %v452 = vand.u32 %v451, 4294901760
    %v453 = vsub.f32 %v451, %v452
    %v454 = vand.u32 %v453, 4294901760
    %455 = vmatpush1.msra.mxu0 %v454
    %456 = vmatprep.subr.mxu0 0.0
    %v457 = vand.u32 %v69, 4294901760
    %v458 = vsub.f32 %v69, %v457
    %v459 = vand.u32 %v458, 4294901760
    %v460 = vsub.f32 %v458, %v459
    %v461 = vand.u32 %v460, 4294901760
    %462 = vmatpush1.msra.mxu0 %v461
    %463 = vmatprep.subr.mxu0 0.0
    %v464 = vand.u32 %v70, 4294901760
    %v465 = vsub.f32 %v70, %v464
    %v466 = vand.u32 %v465, 4294901760
    %v467 = vsub.f32 %v465, %v466
    %v468 = vand.u32 %v467, 4294901760
    %469 = vmatpush1.msra.mxu0 %v468
    %470 = vmatprep.subr.mxu0 0.0
    %v471 = vand.u32 %v71, 4294901760
    %v472 = vsub.f32 %v71, %v471
    %v473 = vand.u32 %v472, 4294901760
    %v474 = vsub.f32 %v472, %v473
    %v475 = vand.u32 %v474, 4294901760
    %476 = vmatpush1.msra.mxu0 %v475
    %477 = vmatprep.subr.mxu0 0.0
    %v478 = vand.u32 %v72, 4294901760
    %v479 = vsub.f32 %v72, %v478
    %v480 = vand.u32 %v479, 4294901760
    %v481 = vsub.f32 %v479, %v480
    %v482 = vand.u32 %v481, 4294901760
    %483 = vmatpush1.msra.mxu0 %v482
    %484 = vmatprep.subr.mxu0 0.0
    %v485 = vand.u32 %v73, 4294901760
    %v486 = vsub.f32 %v73, %v485
    %v487 = vand.u32 %v486, 4294901760
    %v488 = vsub.f32 %v486, %v487
    %v489 = vand.u32 %v488, 4294901760
    %490 = vmatpush1.msra.mxu0 %v489
    %491 = vmatprep.subr.mxu0 0.0
    %v492 = vand.u32 %v74, 4294901760
    %v493 = vsub.f32 %v74, %v492
    %v494 = vand.u32 %v493, 4294901760
    %v495 = vsub.f32 %v493, %v494
    %v496 = vand.u32 %v495, 4294901760
    %497 = vmatpush1.msra.mxu0 %v496
    %498 = vmatprep.subr.mxu0 0.0
    %v499 = vand.u32 %v75, 4294901760
    %v500 = vsub.f32 %v75, %v499
    %v501 = vand.u32 %v500, 4294901760
    %v502 = vsub.f32 %v500, %v501
    %v503 = vand.u32 %v502, 4294901760
    %504 = vmatpush1.msra.mxu0 %v503
    %505 = vmatprep.subr.mxu0 0.0
    %v506 = vand.u32 %v76, 4294901760
    %v507 = vsub.f32 %v76, %v506
    %v508 = vand.u32 %v507, 4294901760
    %v509 = vsub.f32 %v507, %v508
    %v510 = vand.u32 %v509, 4294901760
    %511 = vmatpush1.msra.mxu0 %v510
    %512 = vmatprep.subr.mxu0 0.0
    %v513 = vand.u32 %v77, 4294901760
    %v514 = vsub.f32 %v77, %v513
    %v515 = vand.u32 %v514, 4294901760
    %v516 = vsub.f32 %v514, %v515
    %v517 = vand.u32 %v516, 4294901760
    %518 = vmatpush1.msra.mxu0 %v517
    %519 = vmatprep.subr.mxu0 0.0
    %v520 = vand.u32 %v78, 4294901760
    %v521 = vsub.f32 %v78, %v520
    %v522 = vand.u32 %v521, 4294901760
    %v523 = vsub.f32 %v521, %v522
    %v524 = vand.u32 %v523, 4294901760
    %525 = vmatpush1.msra.mxu0 %v524
    %526 = vmatprep.subr.mxu0 0.0
    %v527 = vand.u32 %v79, 4294901760
    %v528 = vsub.f32 %v79, %v527
    %v529 = vand.u32 %v528, 4294901760
    %v530 = vsub.f32 %v528, %v529
    %v531 = vand.u32 %v530, 4294901760
    %532 = vmatpush1.msra.mxu0 %v531
    %v533 = vand.u32 %v170, 4294901760
    %534 = vmatprep.mubr.f32.mxu0 %v533
    %v535 = vand.u32 %v162, 4294901760
    %536 = vmatmul.mubr.f32.gmra.mrb[0].mxu0 %v535
    %v537 = vpop.f32.mrb[0].mxu0
    %v538 = vadd.f32 %v306, %v537
    %v539 = vpop.f32.mrb[0].mxu0
    %540 = vdwg.mxu0
    %541 = vmatprep.subr.mxu0 0.0
    %v542 = vand.u32 %v48, 4294901760
    %v543 = vsub.f32 %v48, %v542
    %544 = vmatpush1.msra.mxu0 %v543
    %545 = vmatprep.subr.mxu0 0.0
    %v546 = vand.u32 %v49, 4294901760
    %v547 = vsub.f32 %v49, %v546
    %548 = vmatpush1.msra.mxu0 %v547
    %549 = vmatprep.subr.mxu0 0.0
    %v550 = vand.u32 %v50, 4294901760
    %v551 = vsub.f32 %v50, %v550
    %552 = vmatpush1.msra.mxu0 %v551
    %553 = vmatprep.subr.mxu0 0.0
    %v554 = vand.u32 %v51, 4294901760
    %v555 = vsub.f32 %v51, %v554
    %556 = vmatpush1.msra.mxu0 %v555
    %557 = vmatprep.subr.mxu0 0.0
    %v558 = vand.u32 %v52, 4294901760
    %v559 = vsub.f32 %v52, %v558
    %560 = vmatpush1.msra.mxu0 %v559
    %561 = vmatprep.subr.mxu0 0.0
    %v562 = vand.u32 %v53, 4294901760
    %v563 = vsub.f32 %v53, %v562
    %564 = vmatpush1.msra.mxu0 %v563
    %565 = vmatprep.subr.mxu0 0.0
    %v566 = vand.u32 %v54, 4294901760
    %v567 = vsub.f32 %v54, %v566
    %568 = vmatpush1.msra.mxu0 %v567
    %569 = vmatprep.subr.mxu0 0.0
    %v570 = vand.u32 %v55, 4294901760
    %v571 = vsub.f32 %v55, %v570
    %572 = vmatpush1.msra.mxu0 %v571
    %573 = vmatprep.subr.mxu0 0.0
    %v574 = vand.u32 %v56, 4294901760
    %v575 = vsub.f32 %v56, %v574
    %576 = vmatpush1.msra.mxu0 %v575
    %577 = vmatprep.subr.mxu0 0.0
    %v578 = vand.u32 %v57, 4294901760
    %v579 = vsub.f32 %v57, %v578
    %580 = vmatpush1.msra.mxu0 %v579
    %581 = vmatprep.subr.mxu0 0.0
    %v582 = vand.u32 %v58, 4294901760
    %v583 = vsub.f32 %v58, %v582
    %584 = vmatpush1.msra.mxu0 %v583
    %585 = vmatprep.subr.mxu0 0.0
    %v586 = vand.u32 %v59, 4294901760
    %v587 = vsub.f32 %v59, %v586
    %588 = vmatpush1.msra.mxu0 %v587
    %589 = vmatprep.subr.mxu0 0.0
    %v590 = vand.u32 %v60, 4294901760
    %v591 = vsub.f32 %v60, %v590
    %592 = vmatpush1.msra.mxu0 %v591
    %593 = vmatprep.subr.mxu0 0.0
    %v594 = vand.u32 %v61, 4294901760
    %v595 = vsub.f32 %v61, %v594
    %596 = vmatpush1.msra.mxu0 %v595
    %597 = vmatprep.subr.mxu0 0.0
    %v598 = vand.u32 %v62, 4294901760
    %v599 = vsub.f32 %v62, %v598
    %600 = vmatpush1.msra.mxu0 %v599
    %601 = vmatprep.subr.mxu0 0.0
    %v602 = vand.u32 %v63, 4294901760
    %v603 = vsub.f32 %v63, %v602
    %604 = vmatpush1.msra.mxu0 %v603
    %605 = vmatprep.subr.mxu0 0.0
    %v606 = vand.u32 %v64, 4294901760
    %v607 = vsub.f32 %v64, %v606
    %608 = vmatpush1.msra.mxu0 %v607
    %609 = vmatprep.subr.mxu0 0.0
    %v610 = vand.u32 %v65, 4294901760
    %v611 = vsub.f32 %v65, %v610
    %612 = vmatpush1.msra.mxu0 %v611
    %613 = vmatprep.subr.mxu0 0.0
    %v614 = vand.u32 %v66, 4294901760
    %v615 = vsub.f32 %v66, %v614
    %616 = vmatpush1.msra.mxu0 %v615
    %617 = vmatprep.subr.mxu0 0.0
    %v618 = vand.u32 %v67, 4294901760
    %v619 = vsub.f32 %v67, %v618
    %620 = vmatpush1.msra.mxu0 %v619
    %621 = vmatprep.subr.mxu0 0.0
    %v622 = vand.u32 %v68, 4294901760
    %v623 = vsub.f32 %v68, %v622
    %624 = vmatpush1.msra.mxu0 %v623
    %625 = vmatprep.subr.mxu0 0.0
    %v626 = vand.u32 %v69, 4294901760
    %v627 = vsub.f32 %v69, %v626
    %628 = vmatpush1.msra.mxu0 %v627
    %629 = vmatprep.subr.mxu0 0.0
    %v630 = vand.u32 %v70, 4294901760
    %v631 = vsub.f32 %v70, %v630
    %632 = vmatpush1.msra.mxu0 %v631
    %633 = vmatprep.subr.mxu0 0.0
    %v634 = vand.u32 %v71, 4294901760
    %v635 = vsub.f32 %v71, %v634
    %636 = vmatpush1.msra.mxu0 %v635
    %637 = vmatprep.subr.mxu0 0.0
    %v638 = vand.u32 %v72, 4294901760
    %v639 = vsub.f32 %v72, %v638
    %640 = vmatpush1.msra.mxu0 %v639
    %641 = vmatprep.subr.mxu0 0.0
    %v642 = vand.u32 %v73, 4294901760
    %v643 = vsub.f32 %v73, %v642
    %644 = vmatpush1.msra.mxu0 %v643
    %645 = vmatprep.subr.mxu0 0.0
    %v646 = vand.u32 %v74, 4294901760
    %v647 = vsub.f32 %v74, %v646
    %648 = vmatpush1.msra.mxu0 %v647
    %649 = vmatprep.subr.mxu0 0.0
    %v650 = vand.u32 %v75, 4294901760
    %v651 = vsub.f32 %v75, %v650
    %652 = vmatpush1.msra.mxu0 %v651
    %653 = vmatprep.subr.mxu0 0.0
    %v654 = vand.u32 %v76, 4294901760
    %v655 = vsub.f32 %v76, %v654
    %656 = vmatpush1.msra.mxu0 %v655
    %657 = vmatprep.subr.mxu0 0.0
    %v658 = vand.u32 %v77, 4294901760
    %v659 = vsub.f32 %v77, %v658
    %660 = vmatpush1.msra.mxu0 %v659
    %661 = vmatprep.subr.mxu0 0.0
    %v662 = vand.u32 %v78, 4294901760
    %v663 = vsub.f32 %v78, %v662
    %664 = vmatpush1.msra.mxu0 %v663
    %665 = vmatprep.subr.mxu0 0.0
    %v666 = vand.u32 %v79, 4294901760
    %v667 = vsub.f32 %v79, %v666
    %668 = vmatpush1.msra.mxu0 %v667
    %v669 = vand.u32 %v170, 4294901760
    %v670 = vsub.f32 %v170, %v669
    %671 = vmatprep.mubr.f32.mxu0 %v670
    %v672 = vand.u32 %v162, 4294901760
    %v673 = vsub.f32 %v162, %v672
    %674 = vmatmul.mubr.f32.gmra.mrb[0].mxu0 %v673
    %v675 = vpop.f32.mrb[0].mxu0
    %v676 = vadd.f32 %v538, %v675
    %v677 = vpop.f32.mrb[0].mxu0
    %678 = vdwg.mxu0
    %679 = vmatprep.subr.mxu0 0.0
    %v680 = vand.u32 %v48, 4294901760
    %681 = vmatpush1.msra.mxu0 %v680
    %682 = vmatprep.subr.mxu0 0.0
    %v683 = vand.u32 %v49, 4294901760
    %684 = vmatpush1.msra.mxu0 %v683
    %685 = vmatprep.subr.mxu0 0.0
    %v686 = vand.u32 %v50, 4294901760
    %687 = vmatpush1.msra.mxu0 %v686
    %688 = vmatprep.subr.mxu0 0.0
    %v689 = vand.u32 %v51, 4294901760
    %690 = vmatpush1.msra.mxu0 %v689
    %691 = vmatprep.subr.mxu0 0.0
    %v692 = vand.u32 %v52, 4294901760
    %693 = vmatpush1.msra.mxu0 %v692
    %694 = vmatprep.subr.mxu0 0.0
    %v695 = vand.u32 %v53, 4294901760
    %696 = vmatpush1.msra.mxu0 %v695
    %697 = vmatprep.subr.mxu0 0.0
    %v698 = vand.u32 %v54, 4294901760
    %699 = vmatpush1.msra.mxu0 %v698
    %700 = vmatprep.subr.mxu0 0.0
    %v701 = vand.u32 %v55, 4294901760
    %702 = vmatpush1.msra.mxu0 %v701
    %703 = vmatprep.subr.mxu0 0.0
    %v704 = vand.u32 %v56, 4294901760
    %705 = vmatpush1.msra.mxu0 %v704
    %706 = vmatprep.subr.mxu0 0.0
    %v707 = vand.u32 %v57, 4294901760
    %708 = vmatpush1.msra.mxu0 %v707
    %709 = vmatprep.subr.mxu0 0.0
    %v710 = vand.u32 %v58, 4294901760
    %711 = vmatpush1.msra.mxu0 %v710
    %712 = vmatprep.subr.mxu0 0.0
    %v713 = vand.u32 %v59, 4294901760
    %714 = vmatpush1.msra.mxu0 %v713
    %715 = vmatprep.subr.mxu0 0.0
    %v716 = vand.u32 %v60, 4294901760
    %717 = vmatpush1.msra.mxu0 %v716
    %718 = vmatprep.subr.mxu0 0.0
    %v719 = vand.u32 %v61, 4294901760
    %720 = vmatpush1.msra.mxu0 %v719
    %721 = vmatprep.subr.mxu0 0.0
    %v722 = vand.u32 %v62, 4294901760
    %723 = vmatpush1.msra.mxu0 %v722
    %724 = vmatprep.subr.mxu0 0.0
    %v725 = vand.u32 %v63, 4294901760
    %726 = vmatpush1.msra.mxu0 %v725
    %727 = vmatprep.subr.mxu0 0.0
    %v728 = vand.u32 %v64, 4294901760
    %729 = vmatpush1.msra.mxu0 %v728
    %730 = vmatprep.subr.mxu0 0.0
    %v731 = vand.u32 %v65, 4294901760
    %732 = vmatpush1.msra.mxu0 %v731
    %733 = vmatprep.subr.mxu0 0.0
    %v734 = vand.u32 %v66, 4294901760
    %735 = vmatpush1.msra.mxu0 %v734
    %736 = vmatprep.subr.mxu0 0.0
    %v737 = vand.u32 %v67, 4294901760
    %738 = vmatpush1.msra.mxu0 %v737
    %739 = vmatprep.subr.mxu0 0.0
    %v740 = vand.u32 %v68, 4294901760
    %741 = vmatpush1.msra.mxu0 %v740
    %742 = vmatprep.subr.mxu0 0.0
    %v743 = vand.u32 %v69, 4294901760
    %744 = vmatpush1.msra.mxu0 %v743
    %745 = vmatprep.subr.mxu0 0.0
    %v746 = vand.u32 %v70, 4294901760
    %747 = vmatpush1.msra.mxu0 %v746
    %748 = vmatprep.subr.mxu0 0.0
    %v749 = vand.u32 %v71, 4294901760
    %750 = vmatpush1.msra.mxu0 %v749
    %751 = vmatprep.subr.mxu0 0.0
    %v752 = vand.u32 %v72, 4294901760
    %753 = vmatpush1.msra.mxu0 %v752
    %754 = vmatprep.subr.mxu0 0.0
    %v755 = vand.u32 %v73, 4294901760
    %756 = vmatpush1.msra.mxu0 %v755
    %757 = vmatprep.subr.mxu0 0.0
    %v758 = vand.u32 %v74, 4294901760
    %759 = vmatpush1.msra.mxu0 %v758
    %760 = vmatprep.subr.mxu0 0.0
    %v761 = vand.u32 %v75, 4294901760
    %762 = vmatpush1.msra.mxu0 %v761
    %763 = vmatprep.subr.mxu0 0.0
    %v764 = vand.u32 %v76, 4294901760
    %765 = vmatpush1.msra.mxu0 %v764
    %766 = vmatprep.subr.mxu0 0.0
    %v767 = vand.u32 %v77, 4294901760
    %768 = vmatpush1.msra.mxu0 %v767
    %769 = vmatprep.subr.mxu0 0.0
    %v770 = vand.u32 %v78, 4294901760
    %771 = vmatpush1.msra.mxu0 %v770
    %772 = vmatprep.subr.mxu0 0.0
    %v773 = vand.u32 %v79, 4294901760
    %774 = vmatpush1.msra.mxu0 %v773
    %v775 = vand.u32 %v170, 4294901760
    %v776 = vsub.f32 %v170, %v775
    %v777 = vand.u32 %v776, 4294901760
    %778 = vmatprep.mubr.f32.mxu0 %v777
    %v779 = vand.u32 %v162, 4294901760
    %v780 = vsub.f32 %v162, %v779
    %v781 = vand.u32 %v780, 4294901760
    %782 = vmatmul.mubr.f32.gmra.mrb[0].mxu0 %v781
    %v783 = vpop.f32.mrb[0].mxu0
    %v784 = vadd.f32 %v676, %v783
    %v785 = vpop.f32.mrb[0].mxu0
    %786 = vdwg.mxu0
    %787 = vmatprep.subr.mxu0 0.0
    %v788 = vand.u32 %v48, 4294901760
    %v789 = vsub.f32 %v48, %v788
    %v790 = vand.u32 %v789, 4294901760
    %791 = vmatpush1.msra.mxu0 %v790
    %792 = vmatprep.subr.mxu0 0.0
    %v793 = vand.u32 %v49, 4294901760
    %v794 = vsub.f32 %v49, %v793
    %v795 = vand.u32 %v794, 4294901760
    %796 = vmatpush1.msra.mxu0 %v795
    %797 = vmatprep.subr.mxu0 0.0
    %v798 = vand.u32 %v50, 4294901760
    %v799 = vsub.f32 %v50, %v798
    %v800 = vand.u32 %v799, 4294901760
    %801 = vmatpush1.msra.mxu0 %v800
    %802 = vmatprep.subr.mxu0 0.0
    %v803 = vand.u32 %v51, 4294901760
    %v804 = vsub.f32 %v51, %v803
    %v805 = vand.u32 %v804, 4294901760
    %806 = vmatpush1.msra.mxu0 %v805
    %807 = vmatprep.subr.mxu0 0.0
    %v808 = vand.u32 %v52, 4294901760
    %v809 = vsub.f32 %v52, %v808
    %v810 = vand.u32 %v809, 4294901760
    %811 = vmatpush1.msra.mxu0 %v810
    %812 = vmatprep.subr.mxu0 0.0
    %v813 = vand.u32 %v53, 4294901760
    %v814 = vsub.f32 %v53, %v813
    %v815 = vand.u32 %v814, 4294901760
    %816 = vmatpush1.msra.mxu0 %v815
    %817 = vmatprep.subr.mxu0 0.0
    %v818 = vand.u32 %v54, 4294901760
    %v819 = vsub.f32 %v54, %v818
    %v820 = vand.u32 %v819, 4294901760
    %821 = vmatpush1.msra.mxu0 %v820
    %822 = vmatprep.subr.mxu0 0.0
    %v823 = vand.u32 %v55, 4294901760
    %v824 = vsub.f32 %v55, %v823
    %v825 = vand.u32 %v824, 4294901760
    %826 = vmatpush1.msra.mxu0 %v825
    %827 = vmatprep.subr.mxu0 0.0
    %v828 = vand.u32 %v56, 4294901760
    %v829 = vsub.f32 %v56, %v828
    %v830 = vand.u32 %v829, 4294901760
    %831 = vmatpush1.msra.mxu0 %v830
    %832 = vmatprep.subr.mxu0 0.0
    %v833 = vand.u32 %v57, 4294901760
    %v834 = vsub.f32 %v57, %v833
    %v835 = vand.u32 %v834, 4294901760
    %836 = vmatpush1.msra.mxu0 %v835
    %837 = vmatprep.subr.mxu0 0.0
    %v838 = vand.u32 %v58, 4294901760
    %v839 = vsub.f32 %v58, %v838
    %v840 = vand.u32 %v839, 4294901760
    %841 = vmatpush1.msra.mxu0 %v840
    %842 = vmatprep.subr.mxu0 0.0
    %v843 = vand.u32 %v59, 4294901760
    %v844 = vsub.f32 %v59, %v843
    %v845 = vand.u32 %v844, 4294901760
    %846 = vmatpush1.msra.mxu0 %v845
    %847 = vmatprep.subr.mxu0 0.0
    %v848 = vand.u32 %v60, 4294901760
    %v849 = vsub.f32 %v60, %v848
    %v850 = vand.u32 %v849, 4294901760
    %851 = vmatpush1.msra.mxu0 %v850
    %852 = vmatprep.subr.mxu0 0.0
    %v853 = vand.u32 %v61, 4294901760
    %v854 = vsub.f32 %v61, %v853
    %v855 = vand.u32 %v854, 4294901760
    %856 = vmatpush1.msra.mxu0 %v855
    %857 = vmatprep.subr.mxu0 0.0
    %v858 = vand.u32 %v62, 4294901760
    %v859 = vsub.f32 %v62, %v858
    %v860 = vand.u32 %v859, 4294901760
    %861 = vmatpush1.msra.mxu0 %v860
    %862 = vmatprep.subr.mxu0 0.0
    %v863 = vand.u32 %v63, 4294901760
    %v864 = vsub.f32 %v63, %v863
    %v865 = vand.u32 %v864, 4294901760
    %866 = vmatpush1.msra.mxu0 %v865
    %867 = vmatprep.subr.mxu0 0.0
    %v868 = vand.u32 %v64, 4294901760
    %v869 = vsub.f32 %v64, %v868
    %v870 = vand.u32 %v869, 4294901760
    %871 = vmatpush1.msra.mxu0 %v870
    %872 = vmatprep.subr.mxu0 0.0
    %v873 = vand.u32 %v65, 4294901760
    %v874 = vsub.f32 %v65, %v873
    %v875 = vand.u32 %v874, 4294901760
    %876 = vmatpush1.msra.mxu0 %v875
    %877 = vmatprep.subr.mxu0 0.0
    %v878 = vand.u32 %v66, 4294901760
    %v879 = vsub.f32 %v66, %v878
    %v880 = vand.u32 %v879, 4294901760
    %881 = vmatpush1.msra.mxu0 %v880
    %882 = vmatprep.subr.mxu0 0.0
    %v883 = vand.u32 %v67, 4294901760
    %v884 = vsub.f32 %v67, %v883
    %v885 = vand.u32 %v884, 4294901760
    %886 = vmatpush1.msra.mxu0 %v885
    %887 = vmatprep.subr.mxu0 0.0
    %v888 = vand.u32 %v68, 4294901760
    %v889 = vsub.f32 %v68, %v888
    %v890 = vand.u32 %v889, 4294901760
    %891 = vmatpush1.msra.mxu0 %v890
    %892 = vmatprep.subr.mxu0 0.0
    %v893 = vand.u32 %v69, 4294901760
    %v894 = vsub.f32 %v69, %v893
    %v895 = vand.u32 %v894, 4294901760
    %896 = vmatpush1.msra.mxu0 %v895
    %897 = vmatprep.subr.mxu0 0.0
    %v898 = vand.u32 %v70, 4294901760
    %v899 = vsub.f32 %v70, %v898
    %v900 = vand.u32 %v899, 4294901760
    %901 = vmatpush1.msra.mxu0 %v900
    %902 = vmatprep.subr.mxu0 0.0
    %v903 = vand.u32 %v71, 4294901760
    %v904 = vsub.f32 %v71, %v903
    %v905 = vand.u32 %v904, 4294901760
    %906 = vmatpush1.msra.mxu0 %v905
    %907 = vmatprep.subr.mxu0 0.0
    %v908 = vand.u32 %v72, 4294901760
    %v909 = vsub.f32 %v72, %v908
    %v910 = vand.u32 %v909, 4294901760
    %911 = vmatpush1.msra.mxu0 %v910
    %912 = vmatprep.subr.mxu0 0.0
    %v913 = vand.u32 %v73, 4294901760
    %v914 = vsub.f32 %v73, %v913
    %v915 = vand.u32 %v914, 4294901760
    %916 = vmatpush1.msra.mxu0 %v915
    %917 = vmatprep.subr.mxu0 0.0
    %v918 = vand.u32 %v74, 4294901760
    %v919 = vsub.f32 %v74, %v918
    %v920 = vand.u32 %v919, 4294901760
    %921 = vmatpush1.msra.mxu0 %v920
    %922 = vmatprep.subr.mxu0 0.0
    %v923 = vand.u32 %v75, 4294901760
    %v924 = vsub.f32 %v75, %v923
    %v925 = vand.u32 %v924, 4294901760
    %926 = vmatpush1.msra.mxu0 %v925
    %927 = vmatprep.subr.mxu0 0.0
    %v928 = vand.u32 %v76, 4294901760
    %v929 = vsub.f32 %v76, %v928
    %v930 = vand.u32 %v929, 4294901760
    %931 = vmatpush1.msra.mxu0 %v930
    %932 = vmatprep.subr.mxu0 0.0
    %v933 = vand.u32 %v77, 4294901760
    %v934 = vsub.f32 %v77, %v933
    %v935 = vand.u32 %v934, 4294901760
    %936 = vmatpush1.msra.mxu0 %v935
    %937 = vmatprep.subr.mxu0 0.0
    %v938 = vand.u32 %v78, 4294901760
    %v939 = vsub.f32 %v78, %v938
    %v940 = vand.u32 %v939, 4294901760
    %941 = vmatpush1.msra.mxu0 %v940
    %942 = vmatprep.subr.mxu0 0.0
    %v943 = vand.u32 %v79, 4294901760
    %v944 = vsub.f32 %v79, %v943
    %v945 = vand.u32 %v944, 4294901760
    %946 = vmatpush1.msra.mxu0 %v945
    %v947 = vand.u32 %v170, 4294901760
    %948 = vmatprep.mubr.f32.mxu0 %v947
    %v949 = vand.u32 %v162, 4294901760
    %950 = vmatmul.mubr.f32.gmra.mrb[0].mxu0 %v949
    %v951 = vpop.f32.mrb[0].mxu0
    %v952 = vadd.f32 %v784, %v951
    %v953 = vpop.f32.mrb[0].mxu0
    %954 = vdwg.mxu0
    %955 = vmatprep.subr.mxu0 0.0
    %v956 = vand.u32 %v48, 4294901760
    %957 = vmatpush1.msra.mxu0 %v956
    %958 = vmatprep.subr.mxu0 0.0
    %v959 = vand.u32 %v49, 4294901760
    %960 = vmatpush1.msra.mxu0 %v959
    %961 = vmatprep.subr.mxu0 0.0
    %v962 = vand.u32 %v50, 4294901760
    %963 = vmatpush1.msra.mxu0 %v962
    %964 = vmatprep.subr.mxu0 0.0
    %v965 = vand.u32 %v51, 4294901760
    %966 = vmatpush1.msra.mxu0 %v965
    %967 = vmatprep.subr.mxu0 0.0
    %v968 = vand.u32 %v52, 4294901760
    %969 = vmatpush1.msra.mxu0 %v968
    %970 = vmatprep.subr.mxu0 0.0
    %v971 = vand.u32 %v53, 4294901760
    %972 = vmatpush1.msra.mxu0 %v971
    %973 = vmatprep.subr.mxu0 0.0
    %v974 = vand.u32 %v54, 4294901760
    %975 = vmatpush1.msra.mxu0 %v974
    %976 = vmatprep.subr.mxu0 0.0
    %v977 = vand.u32 %v55, 4294901760
    %978 = vmatpush1.msra.mxu0 %v977
    %979 = vmatprep.subr.mxu0 0.0
    %v980 = vand.u32 %v56, 4294901760
    %981 = vmatpush1.msra.mxu0 %v980
    %982 = vmatprep.subr.mxu0 0.0
    %v983 = vand.u32 %v57, 4294901760
    %984 = vmatpush1.msra.mxu0 %v983
    %985 = vmatprep.subr.mxu0 0.0
    %v986 = vand.u32 %v58, 4294901760
    %987 = vmatpush1.msra.mxu0 %v986
    %988 = vmatprep.subr.mxu0 0.0
    %v989 = vand.u32 %v59, 4294901760
    %990 = vmatpush1.msra.mxu0 %v989
    %991 = vmatprep.subr.mxu0 0.0
    %v992 = vand.u32 %v60, 4294901760
    %993 = vmatpush1.msra.mxu0 %v992
    %994 = vmatprep.subr.mxu0 0.0
    %v995 = vand.u32 %v61, 4294901760
    %996 = vmatpush1.msra.mxu0 %v995
    %997 = vmatprep.subr.mxu0 0.0
    %v998 = vand.u32 %v62, 4294901760
    %999 = vmatpush1.msra.mxu0 %v998
    %1000 = vmatprep.subr.mxu0 0.0
    %v1001 = vand.u32 %v63, 4294901760
    %1002 = vmatpush1.msra.mxu0 %v1001
    %1003 = vmatprep.subr.mxu0 0.0
    %v1004 = vand.u32 %v64, 4294901760
    %1005 = vmatpush1.msra.mxu0 %v1004
    %1006 = vmatprep.subr.mxu0 0.0
    %v1007 = vand.u32 %v65, 4294901760
    %1008 = vmatpush1.msra.mxu0 %v1007
    %1009 = vmatprep.subr.mxu0 0.0
    %v1010 = vand.u32 %v66, 4294901760
    %1011 = vmatpush1.msra.mxu0 %v1010
    %1012 = vmatprep.subr.mxu0 0.0
    %v1013 = vand.u32 %v67, 4294901760
    %1014 = vmatpush1.msra.mxu0 %v1013
    %1015 = vmatprep.subr.mxu0 0.0
    %v1016 = vand.u32 %v68, 4294901760
    %1017 = vmatpush1.msra.mxu0 %v1016
    %1018 = vmatprep.subr.mxu0 0.0
    %v1019 = vand.u32 %v69, 4294901760
    %1020 = vmatpush1.msra.mxu0 %v1019
    %1021 = vmatprep.subr.mxu0 0.0
    %v1022 = vand.u32 %v70, 4294901760
    %1023 = vmatpush1.msra.mxu0 %v1022
    %1024 = vmatprep.subr.mxu0 0.0
    %v1025 = vand.u32 %v71, 4294901760
    %1026 = vmatpush1.msra.mxu0 %v1025
    %1027 = vmatprep.subr.mxu0 0.0
    %v1028 = vand.u32 %v72, 4294901760
    %1029 = vmatpush1.msra.mxu0 %v1028
    %1030 = vmatprep.subr.mxu0 0.0
    %v1031 = vand.u32 %v73, 4294901760
    %1032 = vmatpush1.msra.mxu0 %v1031
    %1033 = vmatprep.subr.mxu0 0.0
    %v1034 = vand.u32 %v74, 4294901760
    %1035 = vmatpush1.msra.mxu0 %v1034
    %1036 = vmatprep.subr.mxu0 0.0
    %v1037 = vand.u32 %v75, 4294901760
    %1038 = vmatpush1.msra.mxu0 %v1037
    %1039 = vmatprep.subr.mxu0 0.0
    %v1040 = vand.u32 %v76, 4294901760
    %1041 = vmatpush1.msra.mxu0 %v1040
    %1042 = vmatprep.subr.mxu0 0.0
    %v1043 = vand.u32 %v77, 4294901760
    %1044 = vmatpush1.msra.mxu0 %v1043
    %1045 = vmatprep.subr.mxu0 0.0
    %v1046 = vand.u32 %v78, 4294901760
    %1047 = vmatpush1.msra.mxu0 %v1046
    %1048 = vmatprep.subr.mxu0 0.0
    %v1049 = vand.u32 %v79, 4294901760
    %1050 = vmatpush1.msra.mxu0 %v1049
    %v1051 = vand.u32 %v170, 4294901760
    %1052 = vmatprep.mubr.f32.mxu0 %v1051
    %v1053 = vand.u32 %v162, 4294901760
    %1054 = vmatmul.mubr.f32.gmra.mrb[0].mxu0 %v1053
    %v1055 = vpop.f32.mrb[0].mxu0
    %v1056 = vadd.f32 %v952, %v1055
    %v1057 = vpop.f32.mrb[0].mxu0
    %1058 = vdwg.mxu0
    %1059 = vmatprep.subr.mxu0 0.0
    %v1060 = vand.u32 %v80, 4294901760
    %1061 = vmatpush1.msra.mxu0 %v1060
    %1062 = vmatprep.subr.mxu0 0.0
    %v1063 = vand.u32 %v81, 4294901760
    %1064 = vmatpush1.msra.mxu0 %v1063
    %1065 = vmatprep.subr.mxu0 0.0
    %v1066 = vand.u32 %v82, 4294901760
    %1067 = vmatpush1.msra.mxu0 %v1066
    %1068 = vmatprep.subr.mxu0 0.0
    %v1069 = vand.u32 %v83, 4294901760
    %1070 = vmatpush1.msra.mxu0 %v1069
    %1071 = vmatprep.subr.mxu0 0.0
    %v1072 = vand.u32 %v84, 4294901760
    %1073 = vmatpush1.msra.mxu0 %v1072
    %1074 = vmatprep.subr.mxu0 0.0
    %v1075 = vand.u32 %v85, 4294901760
    %1076 = vmatpush1.msra.mxu0 %v1075
    %1077 = vmatprep.subr.mxu0 0.0
    %v1078 = vand.u32 %v86, 4294901760
    %1079 = vmatpush1.msra.mxu0 %v1078
    %1080 = vmatprep.subr.mxu0 0.0
    %v1081 = vand.u32 %v87, 4294901760
    %1082 = vmatpush1.msra.mxu0 %v1081
    %1083 = vmatprep.subr.mxu0 0.0
    %v1084 = vand.u32 %v88, 4294901760
    %1085 = vmatpush1.msra.mxu0 %v1084
    %1086 = vmatprep.subr.mxu0 0.0
    %v1087 = vand.u32 %v89, 4294901760
    %1088 = vmatpush1.msra.mxu0 %v1087
    %1089 = vmatprep.subr.mxu0 0.0
    %v1090 = vand.u32 %v90, 4294901760
    %1091 = vmatpush1.msra.mxu0 %v1090
    %1092 = vmatprep.subr.mxu0 0.0
    %v1093 = vand.u32 %v91, 4294901760
    %1094 = vmatpush1.msra.mxu0 %v1093
    %1095 = vmatprep.subr.mxu0 0.0
    %v1096 = vand.u32 %v92, 4294901760
    %1097 = vmatpush1.msra.mxu0 %v1096
    %1098 = vmatprep.subr.mxu0 0.0
    %v1099 = vand.u32 %v93, 4294901760
    %1100 = vmatpush1.msra.mxu0 %v1099
    %1101 = vmatprep.subr.mxu0 0.0
    %v1102 = vand.u32 %v94, 4294901760
    %1103 = vmatpush1.msra.mxu0 %v1102
    %1104 = vmatprep.subr.mxu0 0.0
    %v1105 = vand.u32 %v95, 4294901760
    %1106 = vmatpush1.msra.mxu0 %v1105
    %1107 = vmatprep.subr.mxu0 0.0
    %v1108 = vand.u32 %v96, 4294901760
    %1109 = vmatpush1.msra.mxu0 %v1108
    %1110 = vmatprep.subr.mxu0 0.0
    %v1111 = vand.u32 %v97, 4294901760
    %1112 = vmatpush1.msra.mxu0 %v1111
    %1113 = vmatprep.subr.mxu0 0.0
    %v1114 = vand.u32 %v98, 4294901760
    %1115 = vmatpush1.msra.mxu0 %v1114
    %1116 = vmatprep.subr.mxu0 0.0
    %v1117 = vand.u32 %v99, 4294901760
    %1118 = vmatpush1.msra.mxu0 %v1117
    %1119 = vmatprep.subr.mxu0 0.0
    %v1120 = vand.u32 %v100, 4294901760
    %1121 = vmatpush1.msra.mxu0 %v1120
    %1122 = vmatprep.subr.mxu0 0.0
    %v1123 = vand.u32 %v101, 4294901760
    %1124 = vmatpush1.msra.mxu0 %v1123
    %1125 = vmatprep.subr.mxu0 0.0
    %v1126 = vand.u32 %v102, 4294901760
    %1127 = vmatpush1.msra.mxu0 %v1126
    %1128 = vmatprep.subr.mxu0 0.0
    %v1129 = vand.u32 %v103, 4294901760
    %1130 = vmatpush1.msra.mxu0 %v1129
    %1131 = vmatprep.subr.mxu0 0.0
    %v1132 = vand.u32 %v104, 4294901760
    %1133 = vmatpush1.msra.mxu0 %v1132
    %1134 = vmatprep.subr.mxu0 0.0
    %v1135 = vand.u32 %v105, 4294901760
    %1136 = vmatpush1.msra.mxu0 %v1135
    %1137 = vmatprep.subr.mxu0 0.0
    %v1138 = vand.u32 %v106, 4294901760
    %1139 = vmatpush1.msra.mxu0 %v1138
    %1140 = vmatprep.subr.mxu0 0.0
    %v1141 = vand.u32 %v107, 4294901760
    %1142 = vmatpush1.msra.mxu0 %v1141
    %1143 = vmatprep.subr.mxu0 0.0
    %v1144 = vand.u32 %v108, 4294901760
    %1145 = vmatpush1.msra.mxu0 %v1144
    %1146 = vmatprep.subr.mxu0 0.0
    %v1147 = vand.u32 %v109, 4294901760
    %1148 = vmatpush1.msra.mxu0 %v1147
    %1149 = vmatprep.subr.mxu0 0.0
    %v1150 = vand.u32 %v110, 4294901760
    %1151 = vmatpush1.msra.mxu0 %v1150
    %1152 = vmatprep.subr.mxu0 0.0
    %v1153 = vand.u32 %v111, 4294901760
    %1154 = vmatpush1.msra.mxu0 %v1153
    %v1155 = vand.u32 %v171, 4294901760
    %v1156 = vsub.f32 %v171, %v1155
    %v1157 = vand.u32 %v1156, 4294901760
    %v1158 = vsub.f32 %v1156, %v1157
    %v1159 = vand.u32 %v1158, 4294901760
    %1160 = vmatprep.mubr.f32.mxu0 %v1159
    %v1161 = vand.u32 %v169, 4294901760
    %v1162 = vsub.f32 %v169, %v1161
    %v1163 = vand.u32 %v1162, 4294901760
    %v1164 = vsub.f32 %v1162, %v1163
    %v1165 = vand.u32 %v1164, 4294901760
    %1166 = vmatmul.mubr.f32.gmra.mrb[0].mxu0 %v1165
    %v1167 = vpop.f32.mrb[0].mxu0
    %v1168 = vadd.f32 %v1056, %v1167
    %v1169 = vpop.f32.mrb[0].mxu0
    %1170 = vdwg.mxu0
    %1171 = vmatprep.subr.mxu0 0.0
    %v1172 = vand.u32 %v80, 4294901760
    %v1173 = vsub.f32 %v80, %v1172
    %v1174 = vand.u32 %v1173, 4294901760
    %v1175 = vsub.f32 %v1173, %v1174
    %v1176 = vand.u32 %v1175, 4294901760
    %1177 = vmatpush1.msra.mxu0 %v1176
    %1178 = vmatprep.subr.mxu0 0.0
    %v1179 = vand.u32 %v81, 4294901760
    %v1180 = vsub.f32 %v81, %v1179
    %v1181 = vand.u32 %v1180, 4294901760
    %v1182 = vsub.f32 %v1180, %v1181
    %v1183 = vand.u32 %v1182, 4294901760
    %1184 = vmatpush1.msra.mxu0 %v1183
    %1185 = vmatprep.subr.mxu0 0.0
    %v1186 = vand.u32 %v82, 4294901760
    %v1187 = vsub.f32 %v82, %v1186
    %v1188 = vand.u32 %v1187, 4294901760
    %v1189 = vsub.f32 %v1187, %v1188
    %v1190 = vand.u32 %v1189, 4294901760
    %1191 = vmatpush1.msra.mxu0 %v1190
    %1192 = vmatprep.subr.mxu0 0.0
    %v1193 = vand.u32 %v83, 4294901760
    %v1194 = vsub.f32 %v83, %v1193
    %v1195 = vand.u32 %v1194, 4294901760
    %v1196 = vsub.f32 %v1194, %v1195
    %v1197 = vand.u32 %v1196, 4294901760
    %1198 = vmatpush1.msra.mxu0 %v1197
    %1199 = vmatprep.subr.mxu0 0.0
    %v1200 = vand.u32 %v84, 4294901760
    %v1201 = vsub.f32 %v84, %v1200
    %v1202 = vand.u32 %v1201, 4294901760
    %v1203 = vsub.f32 %v1201, %v1202
    %v1204 = vand.u32 %v1203, 4294901760
    %1205 = vmatpush1.msra.mxu0 %v1204
    %1206 = vmatprep.subr.mxu0 0.0
    %v1207 = vand.u32 %v85, 4294901760
    %v1208 = vsub.f32 %v85, %v1207
    %v1209 = vand.u32 %v1208, 4294901760
    %v1210 = vsub.f32 %v1208, %v1209
    %v1211 = vand.u32 %v1210, 4294901760
    %1212 = vmatpush1.msra.mxu0 %v1211
    %1213 = vmatprep.subr.mxu0 0.0
    %v1214 = vand.u32 %v86, 4294901760
    %v1215 = vsub.f32 %v86, %v1214
    %v1216 = vand.u32 %v1215, 4294901760
    %v1217 = vsub.f32 %v1215, %v1216
    %v1218 = vand.u32 %v1217, 4294901760
    %1219 = vmatpush1.msra.mxu0 %v1218
    %1220 = vmatprep.subr.mxu0 0.0
    %v1221 = vand.u32 %v87, 4294901760
    %v1222 = vsub.f32 %v87, %v1221
    %v1223 = vand.u32 %v1222, 4294901760
    %v1224 = vsub.f32 %v1222, %v1223
    %v1225 = vand.u32 %v1224, 4294901760
    %1226 = vmatpush1.msra.mxu0 %v1225
    %1227 = vmatprep.subr.mxu0 0.0
    %v1228 = vand.u32 %v88, 4294901760
    %v1229 = vsub.f32 %v88, %v1228
    %v1230 = vand.u32 %v1229, 4294901760
    %v1231 = vsub.f32 %v1229, %v1230
    %v1232 = vand.u32 %v1231, 4294901760
    %1233 = vmatpush1.msra.mxu0 %v1232
    %1234 = vmatprep.subr.mxu0 0.0
    %v1235 = vand.u32 %v89, 4294901760
    %v1236 = vsub.f32 %v89, %v1235
    %v1237 = vand.u32 %v1236, 4294901760
    %v1238 = vsub.f32 %v1236, %v1237
    %v1239 = vand.u32 %v1238, 4294901760
    %1240 = vmatpush1.msra.mxu0 %v1239
    %1241 = vmatprep.subr.mxu0 0.0
    %v1242 = vand.u32 %v90, 4294901760
    %v1243 = vsub.f32 %v90, %v1242
    %v1244 = vand.u32 %v1243, 4294901760
    %v1245 = vsub.f32 %v1243, %v1244
    %v1246 = vand.u32 %v1245, 4294901760
    %1247 = vmatpush1.msra.mxu0 %v1246
    %1248 = vmatprep.subr.mxu0 0.0
    %v1249 = vand.u32 %v91, 4294901760
    %v1250 = vsub.f32 %v91, %v1249
    %v1251 = vand.u32 %v1250, 4294901760
    %v1252 = vsub.f32 %v1250, %v1251
    %v1253 = vand.u32 %v1252, 4294901760
    %1254 = vmatpush1.msra.mxu0 %v1253
    %1255 = vmatprep.subr.mxu0 0.0
    %v1256 = vand.u32 %v92, 4294901760
    %v1257 = vsub.f32 %v92, %v1256
    %v1258 = vand.u32 %v1257, 4294901760
    %v1259 = vsub.f32 %v1257, %v1258
    %v1260 = vand.u32 %v1259, 4294901760
    %1261 = vmatpush1.msra.mxu0 %v1260
    %1262 = vmatprep.subr.mxu0 0.0
    %v1263 = vand.u32 %v93, 4294901760
    %v1264 = vsub.f32 %v93, %v1263
    %v1265 = vand.u32 %v1264, 4294901760
    %v1266 = vsub.f32 %v1264, %v1265
    %v1267 = vand.u32 %v1266, 4294901760
    %1268 = vmatpush1.msra.mxu0 %v1267
    %1269 = vmatprep.subr.mxu0 0.0
    %v1270 = vand.u32 %v94, 4294901760
    %v1271 = vsub.f32 %v94, %v1270
    %v1272 = vand.u32 %v1271, 4294901760
    %v1273 = vsub.f32 %v1271, %v1272
    %v1274 = vand.u32 %v1273, 4294901760
    %1275 = vmatpush1.msra.mxu0 %v1274
    %1276 = vmatprep.subr.mxu0 0.0
    %v1277 = vand.u32 %v95, 4294901760
    %v1278 = vsub.f32 %v95, %v1277
    %v1279 = vand.u32 %v1278, 4294901760
    %v1280 = vsub.f32 %v1278, %v1279
    %v1281 = vand.u32 %v1280, 4294901760
    %1282 = vmatpush1.msra.mxu0 %v1281
    %1283 = vmatprep.subr.mxu0 0.0
    %v1284 = vand.u32 %v96, 4294901760
    %v1285 = vsub.f32 %v96, %v1284
    %v1286 = vand.u32 %v1285, 4294901760
    %v1287 = vsub.f32 %v1285, %v1286
    %v1288 = vand.u32 %v1287, 4294901760
    %1289 = vmatpush1.msra.mxu0 %v1288
    %1290 = vmatprep.subr.mxu0 0.0
    %v1291 = vand.u32 %v97, 4294901760
    %v1292 = vsub.f32 %v97, %v1291
    %v1293 = vand.u32 %v1292, 4294901760
    %v1294 = vsub.f32 %v1292, %v1293
    %v1295 = vand.u32 %v1294, 4294901760
    %1296 = vmatpush1.msra.mxu0 %v1295
    %1297 = vmatprep.subr.mxu0 0.0
    %v1298 = vand.u32 %v98, 4294901760
    %v1299 = vsub.f32 %v98, %v1298
    %v1300 = vand.u32 %v1299, 4294901760
    %v1301 = vsub.f32 %v1299, %v1300
    %v1302 = vand.u32 %v1301, 4294901760
    %1303 = vmatpush1.msra.mxu0 %v1302
    %1304 = vmatprep.subr.mxu0 0.0
    %v1305 = vand.u32 %v99, 4294901760
    %v1306 = vsub.f32 %v99, %v1305
    %v1307 = vand.u32 %v1306, 4294901760
    %v1308 = vsub.f32 %v1306, %v1307
    %v1309 = vand.u32 %v1308, 4294901760
    %1310 = vmatpush1.msra.mxu0 %v1309
    %1311 = vmatprep.subr.mxu0 0.0
    %v1312 = vand.u32 %v100, 4294901760
    %v1313 = vsub.f32 %v100, %v1312
    %v1314 = vand.u32 %v1313, 4294901760
    %v1315 = vsub.f32 %v1313, %v1314
    %v1316 = vand.u32 %v1315, 4294901760
    %1317 = vmatpush1.msra.mxu0 %v1316
    %1318 = vmatprep.subr.mxu0 0.0
    %v1319 = vand.u32 %v101, 4294901760
    %v1320 = vsub.f32 %v101, %v1319
    %v1321 = vand.u32 %v1320, 4294901760
    %v1322 = vsub.f32 %v1320, %v1321
    %v1323 = vand.u32 %v1322, 4294901760
    %1324 = vmatpush1.msra.mxu0 %v1323
    %1325 = vmatprep.subr.mxu0 0.0
    %v1326 = vand.u32 %v102, 4294901760
    %v1327 = vsub.f32 %v102, %v1326
    %v1328 = vand.u32 %v1327, 4294901760
    %v1329 = vsub.f32 %v1327, %v1328
    %v1330 = vand.u32 %v1329, 4294901760
    %1331 = vmatpush1.msra.mxu0 %v1330
    %1332 = vmatprep.subr.mxu0 0.0
    %v1333 = vand.u32 %v103, 4294901760
    %v1334 = vsub.f32 %v103, %v1333
    %v1335 = vand.u32 %v1334, 4294901760
    %v1336 = vsub.f32 %v1334, %v1335
    %v1337 = vand.u32 %v1336, 4294901760
    %1338 = vmatpush1.msra.mxu0 %v1337
    %1339 = vmatprep.subr.mxu0 0.0
    %v1340 = vand.u32 %v104, 4294901760
    %v1341 = vsub.f32 %v104, %v1340
    %v1342 = vand.u32 %v1341, 4294901760
    %v1343 = vsub.f32 %v1341, %v1342
    %v1344 = vand.u32 %v1343, 4294901760
    %1345 = vmatpush1.msra.mxu0 %v1344
    %1346 = vmatprep.subr.mxu0 0.0
    %v1347 = vand.u32 %v105, 4294901760
    %v1348 = vsub.f32 %v105, %v1347
    %v1349 = vand.u32 %v1348, 4294901760
    %v1350 = vsub.f32 %v1348, %v1349
    %v1351 = vand.u32 %v1350, 4294901760
    %1352 = vmatpush1.msra.mxu0 %v1351
    %1353 = vmatprep.subr.mxu0 0.0
    %v1354 = vand.u32 %v106, 4294901760
    %v1355 = vsub.f32 %v106, %v1354
    %v1356 = vand.u32 %v1355, 4294901760
    %v1357 = vsub.f32 %v1355, %v1356
    %v1358 = vand.u32 %v1357, 4294901760
    %1359 = vmatpush1.msra.mxu0 %v1358
    %1360 = vmatprep.subr.mxu0 0.0
    %v1361 = vand.u32 %v107, 4294901760
    %v1362 = vsub.f32 %v107, %v1361
    %v1363 = vand.u32 %v1362, 4294901760
    %v1364 = vsub.f32 %v1362, %v1363
    %v1365 = vand.u32 %v1364, 4294901760
    %1366 = vmatpush1.msra.mxu0 %v1365
    %1367 = vmatprep.subr.mxu0 0.0
    %v1368 = vand.u32 %v108, 4294901760
    %v1369 = vsub.f32 %v108, %v1368
    %v1370 = vand.u32 %v1369, 4294901760
    %v1371 = vsub.f32 %v1369, %v1370
    %v1372 = vand.u32 %v1371, 4294901760
    %1373 = vmatpush1.msra.mxu0 %v1372
    %1374 = vmatprep.subr.mxu0 0.0
    %v1375 = vand.u32 %v109, 4294901760
    %v1376 = vsub.f32 %v109, %v1375
    %v1377 = vand.u32 %v1376, 4294901760
    %v1378 = vsub.f32 %v1376, %v1377
    %v1379 = vand.u32 %v1378, 4294901760
    %1380 = vmatpush1.msra.mxu0 %v1379
    %1381 = vmatprep.subr.mxu0 0.0
    %v1382 = vand.u32 %v110, 4294901760
    %v1383 = vsub.f32 %v110, %v1382
    %v1384 = vand.u32 %v1383, 4294901760
    %v1385 = vsub.f32 %v1383, %v1384
    %v1386 = vand.u32 %v1385, 4294901760
    %1387 = vmatpush1.msra.mxu0 %v1386
    %1388 = vmatprep.subr.mxu0 0.0
    %v1389 = vand.u32 %v111, 4294901760
    %v1390 = vsub.f32 %v111, %v1389
    %v1391 = vand.u32 %v1390, 4294901760
    %v1392 = vsub.f32 %v1390, %v1391
    %v1393 = vand.u32 %v1392, 4294901760
    %1394 = vmatpush1.msra.mxu0 %v1393
    %v1395 = vand.u32 %v171, 4294901760
    %1396 = vmatprep.mubr.f32.mxu0 %v1395
    %v1397 = vand.u32 %v169, 4294901760
    %1398 = vmatmul.mubr.f32.gmra.mrb[0].mxu0 %v1397
    %v1399 = vpop.f32.mrb[0].mxu0
    %v1400 = vadd.f32 %v1168, %v1399
    %v1401 = vpop.f32.mrb[0].mxu0
    %1402 = vdwg.mxu0
    %1403 = vmatprep.subr.mxu0 0.0
    %v1404 = vand.u32 %v80, 4294901760
    %v1405 = vsub.f32 %v80, %v1404
    %1406 = vmatpush1.msra.mxu0 %v1405
    %1407 = vmatprep.subr.mxu0 0.0
    %v1408 = vand.u32 %v81, 4294901760
    %v1409 = vsub.f32 %v81, %v1408
    %1410 = vmatpush1.msra.mxu0 %v1409
    %1411 = vmatprep.subr.mxu0 0.0
    %v1412 = vand.u32 %v82, 4294901760
    %v1413 = vsub.f32 %v82, %v1412
    %1414 = vmatpush1.msra.mxu0 %v1413
    %1415 = vmatprep.subr.mxu0 0.0
    %v1416 = vand.u32 %v83, 4294901760
    %v1417 = vsub.f32 %v83, %v1416
    %1418 = vmatpush1.msra.mxu0 %v1417
    %1419 = vmatprep.subr.mxu0 0.0
    %v1420 = vand.u32 %v84, 4294901760
    %v1421 = vsub.f32 %v84, %v1420
    %1422 = vmatpush1.msra.mxu0 %v1421
    %1423 = vmatprep.subr.mxu0 0.0
    %v1424 = vand.u32 %v85, 4294901760
    %v1425 = vsub.f32 %v85, %v1424
    %1426 = vmatpush1.msra.mxu0 %v1425
    %1427 = vmatprep.subr.mxu0 0.0
    %v1428 = vand.u32 %v86, 4294901760
    %v1429 = vsub.f32 %v86, %v1428
    %1430 = vmatpush1.msra.mxu0 %v1429
    %1431 = vmatprep.subr.mxu0 0.0
    %v1432 = vand.u32 %v87, 4294901760
    %v1433 = vsub.f32 %v87, %v1432
    %1434 = vmatpush1.msra.mxu0 %v1433
    %1435 = vmatprep.subr.mxu0 0.0
    %v1436 = vand.u32 %v88, 4294901760
    %v1437 = vsub.f32 %v88, %v1436
    %1438 = vmatpush1.msra.mxu0 %v1437
    %1439 = vmatprep.subr.mxu0 0.0
    %v1440 = vand.u32 %v89, 4294901760
    %v1441 = vsub.f32 %v89, %v1440
    %1442 = vmatpush1.msra.mxu0 %v1441
    %1443 = vmatprep.subr.mxu0 0.0
    %v1444 = vand.u32 %v90, 4294901760
    %v1445 = vsub.f32 %v90, %v1444
    %1446 = vmatpush1.msra.mxu0 %v1445
    %1447 = vmatprep.subr.mxu0 0.0
    %v1448 = vand.u32 %v91, 4294901760
    %v1449 = vsub.f32 %v91, %v1448
    %1450 = vmatpush1.msra.mxu0 %v1449
    %1451 = vmatprep.subr.mxu0 0.0
    %v1452 = vand.u32 %v92, 4294901760
    %v1453 = vsub.f32 %v92, %v1452
    %1454 = vmatpush1.msra.mxu0 %v1453
    %1455 = vmatprep.subr.mxu0 0.0
    %v1456 = vand.u32 %v93, 4294901760
    %v1457 = vsub.f32 %v93, %v1456
    %1458 = vmatpush1.msra.mxu0 %v1457
    %1459 = vmatprep.subr.mxu0 0.0
    %v1460 = vand.u32 %v94, 4294901760
    %v1461 = vsub.f32 %v94, %v1460
    %1462 = vmatpush1.msra.mxu0 %v1461
    %1463 = vmatprep.subr.mxu0 0.0
    %v1464 = vand.u32 %v95, 4294901760
    %v1465 = vsub.f32 %v95, %v1464
    %1466 = vmatpush1.msra.mxu0 %v1465
    %1467 = vmatprep.subr.mxu0 0.0
    %v1468 = vand.u32 %v96, 4294901760
    %v1469 = vsub.f32 %v96, %v1468
    %1470 = vmatpush1.msra.mxu0 %v1469
    %1471 = vmatprep.subr.mxu0 0.0
    %v1472 = vand.u32 %v97, 4294901760
    %v1473 = vsub.f32 %v97, %v1472
    %1474 = vmatpush1.msra.mxu0 %v1473
    %1475 = vmatprep.subr.mxu0 0.0
    %v1476 = vand.u32 %v98, 4294901760
    %v1477 = vsub.f32 %v98, %v1476
    %1478 = vmatpush1.msra.mxu0 %v1477
    %1479 = vmatprep.subr.mxu0 0.0
    %v1480 = vand.u32 %v99, 4294901760
    %v1481 = vsub.f32 %v99, %v1480
    %1482 = vmatpush1.msra.mxu0 %v1481
    %1483 = vmatprep.subr.mxu0 0.0
    %v1484 = vand.u32 %v100, 4294901760
    %v1485 = vsub.f32 %v100, %v1484
    %1486 = vmatpush1.msra.mxu0 %v1485
    %1487 = vmatprep.subr.mxu0 0.0
    %v1488 = vand.u32 %v101, 4294901760
    %v1489 = vsub.f32 %v101, %v1488
    %1490 = vmatpush1.msra.mxu0 %v1489
    %1491 = vmatprep.subr.mxu0 0.0
    %v1492 = vand.u32 %v102, 4294901760
    %v1493 = vsub.f32 %v102, %v1492
    %1494 = vmatpush1.msra.mxu0 %v1493
    %1495 = vmatprep.subr.mxu0 0.0
    %v1496 = vand.u32 %v103, 4294901760
    %v1497 = vsub.f32 %v103, %v1496
    %1498 = vmatpush1.msra.mxu0 %v1497
    %1499 = vmatprep.subr.mxu0 0.0
    %v1500 = vand.u32 %v104, 4294901760
    %v1501 = vsub.f32 %v104, %v1500
    %1502 = vmatpush1.msra.mxu0 %v1501
    %1503 = vmatprep.subr.mxu0 0.0
    %v1504 = vand.u32 %v105, 4294901760
    %v1505 = vsub.f32 %v105, %v1504
    %1506 = vmatpush1.msra.mxu0 %v1505
    %1507 = vmatprep.subr.mxu0 0.0
    %v1508 = vand.u32 %v106, 4294901760
    %v1509 = vsub.f32 %v106, %v1508
    %1510 = vmatpush1.msra.mxu0 %v1509
    %1511 = vmatprep.subr.mxu0 0.0
    %v1512 = vand.u32 %v107, 4294901760
    %v1513 = vsub.f32 %v107, %v1512
    %1514 = vmatpush1.msra.mxu0 %v1513
    %1515 = vmatprep.subr.mxu0 0.0
    %v1516 = vand.u32 %v108, 4294901760
    %v1517 = vsub.f32 %v108, %v1516
    %1518 = vmatpush1.msra.mxu0 %v1517
    %1519 = vmatprep.subr.mxu0 0.0
    %v1520 = vand.u32 %v109, 4294901760
    %v1521 = vsub.f32 %v109, %v1520
    %1522 = vmatpush1.msra.mxu0 %v1521
    %1523 = vmatprep.subr.mxu0 0.0
    %v1524 = vand.u32 %v110, 4294901760
    %v1525 = vsub.f32 %v110, %v1524
    %1526 = vmatpush1.msra.mxu0 %v1525
    %1527 = vmatprep.subr.mxu0 0.0
    %v1528 = vand.u32 %v111, 4294901760
    %v1529 = vsub.f32 %v111, %v1528
    %1530 = vmatpush1.msra.mxu0 %v1529
    %v1531 = vand.u32 %v171, 4294901760
    %v1532 = vsub.f32 %v171, %v1531
    %1533 = vmatprep.mubr.f32.mxu0 %v1532
    %v1534 = vand.u32 %v169, 4294901760
    %v1535 = vsub.f32 %v169, %v1534
    %1536 = vmatmul.mubr.f32.gmra.mrb[0].mxu0 %v1535
    %v1537 = vpop.f32.mrb[0].mxu0
    %v1538 = vadd.f32 %v1400, %v1537
    %v1539 = vpop.f32.mrb[0].mxu0
    %1540 = vdwg.mxu0
    %1541 = vmatprep.subr.mxu0 0.0
    %v1542 = vand.u32 %v80, 4294901760
    %1543 = vmatpush1.msra.mxu0 %v1542
    %1544 = vmatprep.subr.mxu0 0.0
    %v1545 = vand.u32 %v81, 4294901760
    %1546 = vmatpush1.msra.mxu0 %v1545
    %1547 = vmatprep.subr.mxu0 0.0
    %v1548 = vand.u32 %v82, 4294901760
    %1549 = vmatpush1.msra.mxu0 %v1548
    %1550 = vmatprep.subr.mxu0 0.0
    %v1551 = vand.u32 %v83, 4294901760
    %1552 = vmatpush1.msra.mxu0 %v1551
    %1553 = vmatprep.subr.mxu0 0.0
    %v1554 = vand.u32 %v84, 4294901760
    %1555 = vmatpush1.msra.mxu0 %v1554
    %1556 = vmatprep.subr.mxu0 0.0
    %v1557 = vand.u32 %v85, 4294901760
    %1558 = vmatpush1.msra.mxu0 %v1557
    %1559 = vmatprep.subr.mxu0 0.0
    %v1560 = vand.u32 %v86, 4294901760
    %1561 = vmatpush1.msra.mxu0 %v1560
    %1562 = vmatprep.subr.mxu0 0.0
    %v1563 = vand.u32 %v87, 4294901760
    %1564 = vmatpush1.msra.mxu0 %v1563
    %1565 = vmatprep.subr.mxu0 0.0
    %v1566 = vand.u32 %v88, 4294901760
    %1567 = vmatpush1.msra.mxu0 %v1566
    %1568 = vmatprep.subr.mxu0 0.0
    %v1569 = vand.u32 %v89, 4294901760
    %1570 = vmatpush1.msra.mxu0 %v1569
    %1571 = vmatprep.subr.mxu0 0.0
    %v1572 = vand.u32 %v90, 4294901760
    %1573 = vmatpush1.msra.mxu0 %v1572
    %1574 = vmatprep.subr.mxu0 0.0
    %v1575 = vand.u32 %v91, 4294901760
    %1576 = vmatpush1.msra.mxu0 %v1575
    %1577 = vmatprep.subr.mxu0 0.0
    %v1578 = vand.u32 %v92, 4294901760
    %1579 = vmatpush1.msra.mxu0 %v1578
    %1580 = vmatprep.subr.mxu0 0.0
    %v1581 = vand.u32 %v93, 4294901760
    %1582 = vmatpush1.msra.mxu0 %v1581
    %1583 = vmatprep.subr.mxu0 0.0
    %v1584 = vand.u32 %v94, 4294901760
    %1585 = vmatpush1.msra.mxu0 %v1584
    %1586 = vmatprep.subr.mxu0 0.0
    %v1587 = vand.u32 %v95, 4294901760
    %1588 = vmatpush1.msra.mxu0 %v1587
    %1589 = vmatprep.subr.mxu0 0.0
    %v1590 = vand.u32 %v96, 4294901760
    %1591 = vmatpush1.msra.mxu0 %v1590
    %1592 = vmatprep.subr.mxu0 0.0
    %v1593 = vand.u32 %v97, 4294901760
    %1594 = vmatpush1.msra.mxu0 %v1593
    %1595 = vmatprep.subr.mxu0 0.0
    %v1596 = vand.u32 %v98, 4294901760
    %1597 = vmatpush1.msra.mxu0 %v1596
    %1598 = vmatprep.subr.mxu0 0.0
    %v1599 = vand.u32 %v99, 4294901760
    %1600 = vmatpush1.msra.mxu0 %v1599
    %1601 = vmatprep.subr.mxu0 0.0
    %v1602 = vand.u32 %v100, 4294901760
    %1603 = vmatpush1.msra.mxu0 %v1602
    %1604 = vmatprep.subr.mxu0 0.0
    %v1605 = vand.u32 %v101, 4294901760
    %1606 = vmatpush1.msra.mxu0 %v1605
    %1607 = vmatprep.subr.mxu0 0.0
    %v1608 = vand.u32 %v102, 4294901760
    %1609 = vmatpush1.msra.mxu0 %v1608
    %1610 = vmatprep.subr.mxu0 0.0
    %v1611 = vand.u32 %v103, 4294901760
    %1612 = vmatpush1.msra.mxu0 %v1611
    %1613 = vmatprep.subr.mxu0 0.0
    %v1614 = vand.u32 %v104, 4294901760
    %1615 = vmatpush1.msra.mxu0 %v1614
    %1616 = vmatprep.subr.mxu0 0.0
    %v1617 = vand.u32 %v105, 4294901760
    %1618 = vmatpush1.msra.mxu0 %v1617
    %1619 = vmatprep.subr.mxu0 0.0
    %v1620 = vand.u32 %v106, 4294901760
    %1621 = vmatpush1.msra.mxu0 %v1620
    %1622 = vmatprep.subr.mxu0 0.0
    %v1623 = vand.u32 %v107, 4294901760
    %1624 = vmatpush1.msra.mxu0 %v1623
    %1625 = vmatprep.subr.mxu0 0.0
    %v1626 = vand.u32 %v108, 4294901760
    %1627 = vmatpush1.msra.mxu0 %v1626
    %1628 = vmatprep.subr.mxu0 0.0
    %v1629 = vand.u32 %v109, 4294901760
    %1630 = vmatpush1.msra.mxu0 %v1629
    %1631 = vmatprep.subr.mxu0 0.0
    %v1632 = vand.u32 %v110, 4294901760
    %1633 = vmatpush1.msra.mxu0 %v1632
    %1634 = vmatprep.subr.mxu0 0.0
    %v1635 = vand.u32 %v111, 4294901760
    %1636 = vmatpush1.msra.mxu0 %v1635
    %v1637 = vand.u32 %v171, 4294901760
    %v1638 = vsub.f32 %v171, %v1637
    %v1639 = vand.u32 %v1638, 4294901760
    %1640 = vmatprep.mubr.f32.mxu0 %v1639
    %v1641 = vand.u32 %v169, 4294901760
    %v1642 = vsub.f32 %v169, %v1641
    %v1643 = vand.u32 %v1642, 4294901760
    %1644 = vmatmul.mubr.f32.gmra.mrb[0].mxu0 %v1643
    %v1645 = vpop.f32.mrb[0].mxu0
    %v1646 = vadd.f32 %v1538, %v1645
    %v1647 = vpop.f32.mrb[0].mxu0
    %1648 = vdwg.mxu0
    %1649 = vmatprep.subr.mxu0 0.0
    %v1650 = vand.u32 %v80, 4294901760
    %v1651 = vsub.f32 %v80, %v1650
    %v1652 = vand.u32 %v1651, 4294901760
    %1653 = vmatpush1.msra.mxu0 %v1652
    %1654 = vmatprep.subr.mxu0 0.0
    %v1655 = vand.u32 %v81, 4294901760
    %v1656 = vsub.f32 %v81, %v1655
    %v1657 = vand.u32 %v1656, 4294901760
    %1658 = vmatpush1.msra.mxu0 %v1657
    %1659 = vmatprep.subr.mxu0 0.0
    %v1660 = vand.u32 %v82, 4294901760
    %v1661 = vsub.f32 %v82, %v1660
    %v1662 = vand.u32 %v1661, 4294901760
    %1663 = vmatpush1.msra.mxu0 %v1662
    %1664 = vmatprep.subr.mxu0 0.0
    %v1665 = vand.u32 %v83, 4294901760
    %v1666 = vsub.f32 %v83, %v1665
    %v1667 = vand.u32 %v1666, 4294901760
    %1668 = vmatpush1.msra.mxu0 %v1667
    %1669 = vmatprep.subr.mxu0 0.0
    %v1670 = vand.u32 %v84, 4294901760
    %v1671 = vsub.f32 %v84, %v1670
    %v1672 = vand.u32 %v1671, 4294901760
    %1673 = vmatpush1.msra.mxu0 %v1672
    %1674 = vmatprep.subr.mxu0 0.0
    %v1675 = vand.u32 %v85, 4294901760
    %v1676 = vsub.f32 %v85, %v1675
    %v1677 = vand.u32 %v1676, 4294901760
    %1678 = vmatpush1.msra.mxu0 %v1677
    %1679 = vmatprep.subr.mxu0 0.0
    %v1680 = vand.u32 %v86, 4294901760
    %v1681 = vsub.f32 %v86, %v1680
    %v1682 = vand.u32 %v1681, 4294901760
    %1683 = vmatpush1.msra.mxu0 %v1682
    %1684 = vmatprep.subr.mxu0 0.0
    %v1685 = vand.u32 %v87, 4294901760
    %v1686 = vsub.f32 %v87, %v1685
    %v1687 = vand.u32 %v1686, 4294901760
    %1688 = vmatpush1.msra.mxu0 %v1687
    %1689 = vmatprep.subr.mxu0 0.0
    %v1690 = vand.u32 %v88, 4294901760
    %v1691 = vsub.f32 %v88, %v1690
    %v1692 = vand.u32 %v1691, 4294901760
    %1693 = vmatpush1.msra.mxu0 %v1692
    %1694 = vmatprep.subr.mxu0 0.0
    %v1695 = vand.u32 %v89, 4294901760
    %v1696 = vsub.f32 %v89, %v1695
    %v1697 = vand.u32 %v1696, 4294901760
    %1698 = vmatpush1.msra.mxu0 %v1697
    %1699 = vmatprep.subr.mxu0 0.0
    %v1700 = vand.u32 %v90, 4294901760
    %v1701 = vsub.f32 %v90, %v1700
    %v1702 = vand.u32 %v1701, 4294901760
    %1703 = vmatpush1.msra.mxu0 %v1702
    %1704 = vmatprep.subr.mxu0 0.0
    %v1705 = vand.u32 %v91, 4294901760
    %v1706 = vsub.f32 %v91, %v1705
    %v1707 = vand.u32 %v1706, 4294901760
    %1708 = vmatpush1.msra.mxu0 %v1707
    %1709 = vmatprep.subr.mxu0 0.0
    %v1710 = vand.u32 %v92, 4294901760
    %v1711 = vsub.f32 %v92, %v1710
    %v1712 = vand.u32 %v1711, 4294901760
    %1713 = vmatpush1.msra.mxu0 %v1712
    %1714 = vmatprep.subr.mxu0 0.0
    %v1715 = vand.u32 %v93, 4294901760
    %v1716 = vsub.f32 %v93, %v1715
    %v1717 = vand.u32 %v1716, 4294901760
    %1718 = vmatpush1.msra.mxu0 %v1717
    %1719 = vmatprep.subr.mxu0 0.0
    %v1720 = vand.u32 %v94, 4294901760
    %v1721 = vsub.f32 %v94, %v1720
    %v1722 = vand.u32 %v1721, 4294901760
    %1723 = vmatpush1.msra.mxu0 %v1722
    %1724 = vmatprep.subr.mxu0 0.0
    %v1725 = vand.u32 %v95, 4294901760
    %v1726 = vsub.f32 %v95, %v1725
    %v1727 = vand.u32 %v1726, 4294901760
    %1728 = vmatpush1.msra.mxu0 %v1727
    %1729 = vmatprep.subr.mxu0 0.0
    %v1730 = vand.u32 %v96, 4294901760
    %v1731 = vsub.f32 %v96, %v1730
    %v1732 = vand.u32 %v1731, 4294901760
    %1733 = vmatpush1.msra.mxu0 %v1732
    %1734 = vmatprep.subr.mxu0 0.0
    %v1735 = vand.u32 %v97, 4294901760
    %v1736 = vsub.f32 %v97, %v1735
    %v1737 = vand.u32 %v1736, 4294901760
    %1738 = vmatpush1.msra.mxu0 %v1737
    %1739 = vmatprep.subr.mxu0 0.0
    %v1740 = vand.u32 %v98, 4294901760
    %v1741 = vsub.f32 %v98, %v1740
    %v1742 = vand.u32 %v1741, 4294901760
    %1743 = vmatpush1.msra.mxu0 %v1742
    %1744 = vmatprep.subr.mxu0 0.0
    %v1745 = vand.u32 %v99, 4294901760
    %v1746 = vsub.f32 %v99, %v1745
    %v1747 = vand.u32 %v1746, 4294901760
    %1748 = vmatpush1.msra.mxu0 %v1747
    %1749 = vmatprep.subr.mxu0 0.0
    %v1750 = vand.u32 %v100, 4294901760
    %v1751 = vsub.f32 %v100, %v1750
    %v1752 = vand.u32 %v1751, 4294901760
    %1753 = vmatpush1.msra.mxu0 %v1752
    %1754 = vmatprep.subr.mxu0 0.0
    %v1755 = vand.u32 %v101, 4294901760
    %v1756 = vsub.f32 %v101, %v1755
    %v1757 = vand.u32 %v1756, 4294901760
    %1758 = vmatpush1.msra.mxu0 %v1757
    %1759 = vmatprep.subr.mxu0 0.0
    %v1760 = vand.u32 %v102, 4294901760
    %v1761 = vsub.f32 %v102, %v1760
    %v1762 = vand.u32 %v1761, 4294901760
    %1763 = vmatpush1.msra.mxu0 %v1762
    %1764 = vmatprep.subr.mxu0 0.0
    %v1765 = vand.u32 %v103, 4294901760
    %v1766 = vsub.f32 %v103, %v1765
    %v1767 = vand.u32 %v1766, 4294901760
    %1768 = vmatpush1.msra.mxu0 %v1767
    %1769 = vmatprep.subr.mxu0 0.0
    %v1770 = vand.u32 %v104, 4294901760
    %v1771 = vsub.f32 %v104, %v1770
    %v1772 = vand.u32 %v1771, 4294901760
    %1773 = vmatpush1.msra.mxu0 %v1772
    %1774 = vmatprep.subr.mxu0 0.0
    %v1775 = vand.u32 %v105, 4294901760
    %v1776 = vsub.f32 %v105, %v1775
    %v1777 = vand.u32 %v1776, 4294901760
    %1778 = vmatpush1.msra.mxu0 %v1777
    %1779 = vmatprep.subr.mxu0 0.0
    %v1780 = vand.u32 %v106, 4294901760
    %v1781 = vsub.f32 %v106, %v1780
    %v1782 = vand.u32 %v1781, 4294901760
    %1783 = vmatpush1.msra.mxu0 %v1782
    %1784 = vmatprep.subr.mxu0 0.0
    %v1785 = vand.u32 %v107, 4294901760
    %v1786 = vsub.f32 %v107, %v1785
    %v1787 = vand.u32 %v1786, 4294901760
    %1788 = vmatpush1.msra.mxu0 %v1787
    %1789 = vmatprep.subr.mxu0 0.0
    %v1790 = vand.u32 %v108, 4294901760
    %v1791 = vsub.f32 %v108, %v1790
    %v1792 = vand.u32 %v1791, 4294901760
    %1793 = vmatpush1.msra.mxu0 %v1792
    %1794 = vmatprep.subr.mxu0 0.0
    %v1795 = vand.u32 %v109, 4294901760
    %v1796 = vsub.f32 %v109, %v1795
    %v1797 = vand.u32 %v1796, 4294901760
    %1798 = vmatpush1.msra.mxu0 %v1797
    %1799 = vmatprep.subr.mxu0 0.0
    %v1800 = vand.u32 %v110, 4294901760
    %v1801 = vsub.f32 %v110, %v1800
    %v1802 = vand.u32 %v1801, 4294901760
    %1803 = vmatpush1.msra.mxu0 %v1802
    %1804 = vmatprep.subr.mxu0 0.0
    %v1805 = vand.u32 %v111, 4294901760
    %v1806 = vsub.f32 %v111, %v1805
    %v1807 = vand.u32 %v1806, 4294901760
    %1808 = vmatpush1.msra.mxu0 %v1807
    %v1809 = vand.u32 %v171, 4294901760
    %1810 = vmatprep.mubr.f32.mxu0 %v1809
    %v1811 = vand.u32 %v169, 4294901760
    %1812 = vmatmul.mubr.f32.gmra.mrb[0].mxu0 %v1811
    %v1813 = vpop.f32.mrb[0].mxu0
    %v1814 = vadd.f32 %v1646, %v1813
    %v1815 = vpop.f32.mrb[0].mxu0
    %1816 = vdwg.mxu0
    %1817 = vmatprep.subr.mxu0 0.0
    %v1818 = vand.u32 %v80, 4294901760
    %1819 = vmatpush1.msra.mxu0 %v1818
    %1820 = vmatprep.subr.mxu0 0.0
    %v1821 = vand.u32 %v81, 4294901760
    %1822 = vmatpush1.msra.mxu0 %v1821
    %1823 = vmatprep.subr.mxu0 0.0
    %v1824 = vand.u32 %v82, 4294901760
    %1825 = vmatpush1.msra.mxu0 %v1824
    %1826 = vmatprep.subr.mxu0 0.0
    %v1827 = vand.u32 %v83, 4294901760
    %1828 = vmatpush1.msra.mxu0 %v1827
    %1829 = vmatprep.subr.mxu0 0.0
    %v1830 = vand.u32 %v84, 4294901760
    %1831 = vmatpush1.msra.mxu0 %v1830
    %1832 = vmatprep.subr.mxu0 0.0
    %v1833 = vand.u32 %v85, 4294901760
    %1834 = vmatpush1.msra.mxu0 %v1833
    %1835 = vmatprep.subr.mxu0 0.0
    %v1836 = vand.u32 %v86, 4294901760
    %1837 = vmatpush1.msra.mxu0 %v1836
    %1838 = vmatprep.subr.mxu0 0.0
    %v1839 = vand.u32 %v87, 4294901760
    %1840 = vmatpush1.msra.mxu0 %v1839
    %1841 = vmatprep.subr.mxu0 0.0
    %v1842 = vand.u32 %v88, 4294901760
    %1843 = vmatpush1.msra.mxu0 %v1842
    %1844 = vmatprep.subr.mxu0 0.0
    %v1845 = vand.u32 %v89, 4294901760
    %1846 = vmatpush1.msra.mxu0 %v1845
    %1847 = vmatprep.subr.mxu0 0.0
    %v1848 = vand.u32 %v90, 4294901760
    %1849 = vmatpush1.msra.mxu0 %v1848
    %1850 = vmatprep.subr.mxu0 0.0
    %v1851 = vand.u32 %v91, 4294901760
    %1852 = vmatpush1.msra.mxu0 %v1851
    %1853 = vmatprep.subr.mxu0 0.0
    %v1854 = vand.u32 %v92, 4294901760
    %1855 = vmatpush1.msra.mxu0 %v1854
    %1856 = vmatprep.subr.mxu0 0.0
    %v1857 = vand.u32 %v93, 4294901760
    %1858 = vmatpush1.msra.mxu0 %v1857
    %1859 = vmatprep.subr.mxu0 0.0
    %v1860 = vand.u32 %v94, 4294901760
    %1861 = vmatpush1.msra.mxu0 %v1860
    %1862 = vmatprep.subr.mxu0 0.0
    %v1863 = vand.u32 %v95, 4294901760
    %1864 = vmatpush1.msra.mxu0 %v1863
    %1865 = vmatprep.subr.mxu0 0.0
    %v1866 = vand.u32 %v96, 4294901760
    %1867 = vmatpush1.msra.mxu0 %v1866
    %1868 = vmatprep.subr.mxu0 0.0
    %v1869 = vand.u32 %v97, 4294901760
    %1870 = vmatpush1.msra.mxu0 %v1869
    %1871 = vmatprep.subr.mxu0 0.0
    %v1872 = vand.u32 %v98, 4294901760
    %1873 = vmatpush1.msra.mxu0 %v1872
    %1874 = vmatprep.subr.mxu0 0.0
    %v1875 = vand.u32 %v99, 4294901760
    %1876 = vmatpush1.msra.mxu0 %v1875
    %1877 = vmatprep.subr.mxu0 0.0
    %v1878 = vand.u32 %v100, 4294901760
    %1879 = vmatpush1.msra.mxu0 %v1878
    %1880 = vmatprep.subr.mxu0 0.0
    %v1881 = vand.u32 %v101, 4294901760
    %1882 = vmatpush1.msra.mxu0 %v1881
    %1883 = vmatprep.subr.mxu0 0.0
    %v1884 = vand.u32 %v102, 4294901760
    %1885 = vmatpush1.msra.mxu0 %v1884
    %1886 = vmatprep.subr.mxu0 0.0
    %v1887 = vand.u32 %v103, 4294901760
    %1888 = vmatpush1.msra.mxu0 %v1887
    %1889 = vmatprep.subr.mxu0 0.0
    %v1890 = vand.u32 %v104, 4294901760
    %1891 = vmatpush1.msra.mxu0 %v1890
    %1892 = vmatprep.subr.mxu0 0.0
    %v1893 = vand.u32 %v105, 4294901760
    %1894 = vmatpush1.msra.mxu0 %v1893
    %1895 = vmatprep.subr.mxu0 0.0
    %v1896 = vand.u32 %v106, 4294901760
    %1897 = vmatpush1.msra.mxu0 %v1896
    %1898 = vmatprep.subr.mxu0 0.0
    %v1899 = vand.u32 %v107, 4294901760
    %1900 = vmatpush1.msra.mxu0 %v1899
    %1901 = vmatprep.subr.mxu0 0.0
    %v1902 = vand.u32 %v108, 4294901760
    %1903 = vmatpush1.msra.mxu0 %v1902
    %1904 = vmatprep.subr.mxu0 0.0
    %v1905 = vand.u32 %v109, 4294901760
    %1906 = vmatpush1.msra.mxu0 %v1905
    %1907 = vmatprep.subr.mxu0 0.0
    %v1908 = vand.u32 %v110, 4294901760
    %1909 = vmatpush1.msra.mxu0 %v1908
    %1910 = vmatprep.subr.mxu0 0.0
    %v1911 = vand.u32 %v111, 4294901760
    %1912 = vmatpush1.msra.mxu0 %v1911
    %v1913 = vand.u32 %v171, 4294901760
    %1914 = vmatprep.mubr.f32.mxu0 %v1913
    %v1915 = vand.u32 %v169, 4294901760
    %1916 = vmatmul.mubr.f32.gmra.mrb[0].mxu0 %v1915
    %v1917 = vpop.f32.mrb[0].mxu0
    %v1918 = vadd.f32 %v1814, %v1917
    %v1919 = vpop.f32.mrb[0].mxu0
    %1920 = vdwg.mxu0
    %1921 = vmatprep.subr.mxu0 0.0
    %v1922 = vand.u32 %v112, 4294901760
    %1923 = vmatpush1.msra.mxu0 %v1922
    %1924 = vmatprep.subr.mxu0 0.0
    %v1925 = vand.u32 %v113, 4294901760
    %1926 = vmatpush1.msra.mxu0 %v1925
    %1927 = vmatprep.subr.mxu0 0.0
    %v1928 = vand.u32 %v114, 4294901760
    %1929 = vmatpush1.msra.mxu0 %v1928
    %1930 = vmatprep.subr.mxu0 0.0
    %v1931 = vand.u32 %v115, 4294901760
    %1932 = vmatpush1.msra.mxu0 %v1931
    %1933 = vmatprep.subr.mxu0 0.0
    %v1934 = vand.u32 %v116, 4294901760
    %1935 = vmatpush1.msra.mxu0 %v1934
    %1936 = vmatprep.subr.mxu0 0.0
    %v1937 = vand.u32 %v117, 4294901760
    %1938 = vmatpush1.msra.mxu0 %v1937
    %1939 = vmatprep.subr.mxu0 0.0
    %v1940 = vand.u32 %v118, 4294901760
    %1941 = vmatpush1.msra.mxu0 %v1940
    %1942 = vmatprep.subr.mxu0 0.0
    %v1943 = vand.u32 %v119, 4294901760
    %1944 = vmatpush1.msra.mxu0 %v1943
    %1945 = vmatprep.subr.mxu0 0.0
    %v1946 = vand.u32 %v120, 4294901760
    %1947 = vmatpush1.msra.mxu0 %v1946
    %1948 = vmatprep.subr.mxu0 0.0
    %v1949 = vand.u32 %v121, 4294901760
    %1950 = vmatpush1.msra.mxu0 %v1949
    %1951 = vmatprep.subr.mxu0 0.0
    %v1952 = vand.u32 %v122, 4294901760
    %1953 = vmatpush1.msra.mxu0 %v1952
    %1954 = vmatprep.subr.mxu0 0.0
    %v1955 = vand.u32 %v123, 4294901760
    %1956 = vmatpush1.msra.mxu0 %v1955
    %1957 = vmatprep.subr.mxu0 0.0
    %v1958 = vand.u32 %v124, 4294901760
    %1959 = vmatpush1.msra.mxu0 %v1958
    %1960 = vmatprep.subr.mxu0 0.0
    %v1961 = vand.u32 %v125, 4294901760
    %1962 = vmatpush1.msra.mxu0 %v1961
    %1963 = vmatprep.subr.mxu0 0.0
    %v1964 = vand.u32 %v126, 4294901760
    %1965 = vmatpush1.msra.mxu0 %v1964
    %1966 = vmatprep.subr.mxu0 0.0
    %v1967 = vand.u32 %v127, 4294901760
    %1968 = vmatpush1.msra.mxu0 %v1967
    %1969 = vmatprep.subr.mxu0 0.0
    %v1970 = vand.u32 %v128, 4294901760
    %1971 = vmatpush1.msra.mxu0 %v1970
    %1972 = vmatprep.subr.mxu0 0.0
    %v1973 = vand.u32 %v129, 4294901760
    %1974 = vmatpush1.msra.mxu0 %v1973
    %1975 = vmatprep.subr.mxu0 0.0
    %v1976 = vand.u32 %v130, 4294901760
    %1977 = vmatpush1.msra.mxu0 %v1976
    %1978 = vmatprep.subr.mxu0 0.0
    %v1979 = vand.u32 %v131, 4294901760
    %1980 = vmatpush1.msra.mxu0 %v1979
    %1981 = vmatprep.subr.mxu0 0.0
    %v1982 = vand.u32 %v132, 4294901760
    %1983 = vmatpush1.msra.mxu0 %v1982
    %1984 = vmatprep.subr.mxu0 0.0
    %v1985 = vand.u32 %v133, 4294901760
    %1986 = vmatpush1.msra.mxu0 %v1985
    %1987 = vmatprep.subr.mxu0 0.0
    %v1988 = vand.u32 %v134, 4294901760
    %1989 = vmatpush1.msra.mxu0 %v1988
    %1990 = vmatprep.subr.mxu0 0.0
    %v1991 = vand.u32 %v135, 4294901760
    %1992 = vmatpush1.msra.mxu0 %v1991
    %1993 = vmatprep.subr.mxu0 0.0
    %v1994 = vand.u32 %v136, 4294901760
    %1995 = vmatpush1.msra.mxu0 %v1994
    %1996 = vmatprep.subr.mxu0 0.0
    %v1997 = vand.u32 %v137, 4294901760
    %1998 = vmatpush1.msra.mxu0 %v1997
    %1999 = vmatprep.subr.mxu0 0.0
    %v2000 = vand.u32 %v138, 4294901760
    %2001 = vmatpush1.msra.mxu0 %v2000
    %2002 = vmatprep.subr.mxu0 0.0
    %v2003 = vand.u32 %v139, 4294901760
    %2004 = vmatpush1.msra.mxu0 %v2003
    %2005 = vmatprep.subr.mxu0 0.0
    %v2006 = vand.u32 %v140, 4294901760
    %2007 = vmatpush1.msra.mxu0 %v2006
    %2008 = vmatprep.subr.mxu0 0.0
    %v2009 = vand.u32 %v141, 4294901760
    %2010 = vmatpush1.msra.mxu0 %v2009
    %2011 = vmatprep.subr.mxu0 0.0
    %v2012 = vand.u32 %v142, 4294901760
    %2013 = vmatpush1.msra.mxu0 %v2012
    %2014 = vmatprep.subr.mxu0 0.0
    %v2015 = vand.u32 %v143, 4294901760
    %2016 = vmatpush1.msra.mxu0 %v2015
    %v2017 = vand.u32 %v187, 4294901760
    %v2018 = vsub.f32 %v187, %v2017
    %v2019 = vand.u32 %v2018, 4294901760
    %v2020 = vsub.f32 %v2018, %v2019
    %v2021 = vand.u32 %v2020, 4294901760
    %2022 = vmatprep.mubr.f32.mxu0 %v2021
    %v2023 = vand.u32 %v179, 4294901760
    %v2024 = vsub.f32 %v179, %v2023
    %v2025 = vand.u32 %v2024, 4294901760
    %v2026 = vsub.f32 %v2024, %v2025
    %v2027 = vand.u32 %v2026, 4294901760
    %2028 = vmatmul.mubr.f32.gmra.mrb[0].mxu0 %v2027
    %v2029 = vpop.f32.mrb[0].mxu0
    %v2030 = vadd.f32 %v1918, %v2029
    %v2031 = vpop.f32.mrb[0].mxu0
    %2032 = vdwg.mxu0
    %2033 = vmatprep.subr.mxu0 0.0
    %v2034 = vand.u32 %v112, 4294901760
    %v2035 = vsub.f32 %v112, %v2034
    %v2036 = vand.u32 %v2035, 4294901760
    %v2037 = vsub.f32 %v2035, %v2036
    %v2038 = vand.u32 %v2037, 4294901760
    %2039 = vmatpush1.msra.mxu0 %v2038
    %2040 = vmatprep.subr.mxu0 0.0
    %v2041 = vand.u32 %v113, 4294901760
    %v2042 = vsub.f32 %v113, %v2041
    %v2043 = vand.u32 %v2042, 4294901760
    %v2044 = vsub.f32 %v2042, %v2043
    %v2045 = vand.u32 %v2044, 4294901760
    %2046 = vmatpush1.msra.mxu0 %v2045
    %2047 = vmatprep.subr.mxu0 0.0
    %v2048 = vand.u32 %v114, 4294901760
    %v2049 = vsub.f32 %v114, %v2048
    %v2050 = vand.u32 %v2049, 4294901760
    %v2051 = vsub.f32 %v2049, %v2050
    %v2052 = vand.u32 %v2051, 4294901760
    %2053 = vmatpush1.msra.mxu0 %v2052
    %2054 = vmatprep.subr.mxu0 0.0
    %v2055 = vand.u32 %v115, 4294901760
    %v2056 = vsub.f32 %v115, %v2055
    %v2057 = vand.u32 %v2056, 4294901760
    %v2058 = vsub.f32 %v2056, %v2057
    %v2059 = vand.u32 %v2058, 4294901760
    %2060 = vmatpush1.msra.mxu0 %v2059
    %2061 = vmatprep.subr.mxu0 0.0
    %v2062 = vand.u32 %v116, 4294901760
    %v2063 = vsub.f32 %v116, %v2062
    %v2064 = vand.u32 %v2063, 4294901760
    %v2065 = vsub.f32 %v2063, %v2064
    %v2066 = vand.u32 %v2065, 4294901760
    %2067 = vmatpush1.msra.mxu0 %v2066
    %2068 = vmatprep.subr.mxu0 0.0
    %v2069 = vand.u32 %v117, 4294901760
    %v2070 = vsub.f32 %v117, %v2069
    %v2071 = vand.u32 %v2070, 4294901760
    %v2072 = vsub.f32 %v2070, %v2071
    %v2073 = vand.u32 %v2072, 4294901760
    %2074 = vmatpush1.msra.mxu0 %v2073
    %2075 = vmatprep.subr.mxu0 0.0
    %v2076 = vand.u32 %v118, 4294901760
    %v2077 = vsub.f32 %v118, %v2076
    %v2078 = vand.u32 %v2077, 4294901760
    %v2079 = vsub.f32 %v2077, %v2078
    %v2080 = vand.u32 %v2079, 4294901760
    %2081 = vmatpush1.msra.mxu0 %v2080
    %2082 = vmatprep.subr.mxu0 0.0
    %v2083 = vand.u32 %v119, 4294901760
    %v2084 = vsub.f32 %v119, %v2083
    %v2085 = vand.u32 %v2084, 4294901760
    %v2086 = vsub.f32 %v2084, %v2085
    %v2087 = vand.u32 %v2086, 4294901760
    %2088 = vmatpush1.msra.mxu0 %v2087
    %2089 = vmatprep.subr.mxu0 0.0
    %v2090 = vand.u32 %v120, 4294901760
    %v2091 = vsub.f32 %v120, %v2090
    %v2092 = vand.u32 %v2091, 4294901760
    %v2093 = vsub.f32 %v2091, %v2092
    %v2094 = vand.u32 %v2093, 4294901760
    %2095 = vmatpush1.msra.mxu0 %v2094
    %2096 = vmatprep.subr.mxu0 0.0
    %v2097 = vand.u32 %v121, 4294901760
    %v2098 = vsub.f32 %v121, %v2097
    %v2099 = vand.u32 %v2098, 4294901760
    %v2100 = vsub.f32 %v2098, %v2099
    %v2101 = vand.u32 %v2100, 4294901760
    %2102 = vmatpush1.msra.mxu0 %v2101
    %2103 = vmatprep.subr.mxu0 0.0
    %v2104 = vand.u32 %v122, 4294901760
    %v2105 = vsub.f32 %v122, %v2104
    %v2106 = vand.u32 %v2105, 4294901760
    %v2107 = vsub.f32 %v2105, %v2106
    %v2108 = vand.u32 %v2107, 4294901760
    %2109 = vmatpush1.msra.mxu0 %v2108
    %2110 = vmatprep.subr.mxu0 0.0
    %v2111 = vand.u32 %v123, 4294901760
    %v2112 = vsub.f32 %v123, %v2111
    %v2113 = vand.u32 %v2112, 4294901760
    %v2114 = vsub.f32 %v2112, %v2113
    %v2115 = vand.u32 %v2114, 4294901760
    %2116 = vmatpush1.msra.mxu0 %v2115
    %2117 = vmatprep.subr.mxu0 0.0
    %v2118 = vand.u32 %v124, 4294901760
    %v2119 = vsub.f32 %v124, %v2118
    %v2120 = vand.u32 %v2119, 4294901760
    %v2121 = vsub.f32 %v2119, %v2120
    %v2122 = vand.u32 %v2121, 4294901760
    %2123 = vmatpush1.msra.mxu0 %v2122
    %2124 = vmatprep.subr.mxu0 0.0
    %v2125 = vand.u32 %v125, 4294901760
    %v2126 = vsub.f32 %v125, %v2125
    %v2127 = vand.u32 %v2126, 4294901760
    %v2128 = vsub.f32 %v2126, %v2127
    %v2129 = vand.u32 %v2128, 4294901760
    %2130 = vmatpush1.msra.mxu0 %v2129
    %2131 = vmatprep.subr.mxu0 0.0
    %v2132 = vand.u32 %v126, 4294901760
    %v2133 = vsub.f32 %v126, %v2132
    %v2134 = vand.u32 %v2133, 4294901760
    %v2135 = vsub.f32 %v2133, %v2134
    %v2136 = vand.u32 %v2135, 4294901760
    %2137 = vmatpush1.msra.mxu0 %v2136
    %2138 = vmatprep.subr.mxu0 0.0
    %v2139 = vand.u32 %v127, 4294901760
    %v2140 = vsub.f32 %v127, %v2139
    %v2141 = vand.u32 %v2140, 4294901760
    %v2142 = vsub.f32 %v2140, %v2141
    %v2143 = vand.u32 %v2142, 4294901760
    %2144 = vmatpush1.msra.mxu0 %v2143
    %2145 = vmatprep.subr.mxu0 0.0
    %v2146 = vand.u32 %v128, 4294901760
    %v2147 = vsub.f32 %v128, %v2146
    %v2148 = vand.u32 %v2147, 4294901760
    %v2149 = vsub.f32 %v2147, %v2148
    %v2150 = vand.u32 %v2149, 4294901760
    %2151 = vmatpush1.msra.mxu0 %v2150
    %2152 = vmatprep.subr.mxu0 0.0
    %v2153 = vand.u32 %v129, 4294901760
    %v2154 = vsub.f32 %v129, %v2153
    %v2155 = vand.u32 %v2154, 4294901760
    %v2156 = vsub.f32 %v2154, %v2155
    %v2157 = vand.u32 %v2156, 4294901760
    %2158 = vmatpush1.msra.mxu0 %v2157
    %2159 = vmatprep.subr.mxu0 0.0
    %v2160 = vand.u32 %v130, 4294901760
    %v2161 = vsub.f32 %v130, %v2160
    %v2162 = vand.u32 %v2161, 4294901760
    %v2163 = vsub.f32 %v2161, %v2162
    %v2164 = vand.u32 %v2163, 4294901760
    %2165 = vmatpush1.msra.mxu0 %v2164
    %2166 = vmatprep.subr.mxu0 0.0
    %v2167 = vand.u32 %v131, 4294901760
    %v2168 = vsub.f32 %v131, %v2167
    %v2169 = vand.u32 %v2168, 4294901760
    %v2170 = vsub.f32 %v2168, %v2169
    %v2171 = vand.u32 %v2170, 4294901760
    %2172 = vmatpush1.msra.mxu0 %v2171
    %2173 = vmatprep.subr.mxu0 0.0
    %v2174 = vand.u32 %v132, 4294901760
    %v2175 = vsub.f32 %v132, %v2174
    %v2176 = vand.u32 %v2175, 4294901760
    %v2177 = vsub.f32 %v2175, %v2176
    %v2178 = vand.u32 %v2177, 4294901760
    %2179 = vmatpush1.msra.mxu0 %v2178
    %2180 = vmatprep.subr.mxu0 0.0
    %v2181 = vand.u32 %v133, 4294901760
    %v2182 = vsub.f32 %v133, %v2181
    %v2183 = vand.u32 %v2182, 4294901760
    %v2184 = vsub.f32 %v2182, %v2183
    %v2185 = vand.u32 %v2184, 4294901760
    %2186 = vmatpush1.msra.mxu0 %v2185
    %2187 = vmatprep.subr.mxu0 0.0
    %v2188 = vand.u32 %v134, 4294901760
    %v2189 = vsub.f32 %v134, %v2188
    %v2190 = vand.u32 %v2189, 4294901760
    %v2191 = vsub.f32 %v2189, %v2190
    %v2192 = vand.u32 %v2191, 4294901760
    %2193 = vmatpush1.msra.mxu0 %v2192
    %2194 = vmatprep.subr.mxu0 0.0
    %v2195 = vand.u32 %v135, 4294901760
    %v2196 = vsub.f32 %v135, %v2195
    %v2197 = vand.u32 %v2196, 4294901760
    %v2198 = vsub.f32 %v2196, %v2197
    %v2199 = vand.u32 %v2198, 4294901760
    %2200 = vmatpush1.msra.mxu0 %v2199
    %2201 = vmatprep.subr.mxu0 0.0
    %v2202 = vand.u32 %v136, 4294901760
    %v2203 = vsub.f32 %v136, %v2202
    %v2204 = vand.u32 %v2203, 4294901760
    %v2205 = vsub.f32 %v2203, %v2204
    %v2206 = vand.u32 %v2205, 4294901760
    %2207 = vmatpush1.msra.mxu0 %v2206
    %2208 = vmatprep.subr.mxu0 0.0
    %v2209 = vand.u32 %v137, 4294901760
    %v2210 = vsub.f32 %v137, %v2209
    %v2211 = vand.u32 %v2210, 4294901760
    %v2212 = vsub.f32 %v2210, %v2211
    %v2213 = vand.u32 %v2212, 4294901760
    %2214 = vmatpush1.msra.mxu0 %v2213
    %2215 = vmatprep.subr.mxu0 0.0
    %v2216 = vand.u32 %v138, 4294901760
    %v2217 = vsub.f32 %v138, %v2216
    %v2218 = vand.u32 %v2217, 4294901760
    %v2219 = vsub.f32 %v2217, %v2218
    %v2220 = vand.u32 %v2219, 4294901760
    %2221 = vmatpush1.msra.mxu0 %v2220
    %2222 = vmatprep.subr.mxu0 0.0
    %v2223 = vand.u32 %v139, 4294901760
    %v2224 = vsub.f32 %v139, %v2223
    %v2225 = vand.u32 %v2224, 4294901760
    %v2226 = vsub.f32 %v2224, %v2225
    %v2227 = vand.u32 %v2226, 4294901760
    %2228 = vmatpush1.msra.mxu0 %v2227
    %2229 = vmatprep.subr.mxu0 0.0
    %v2230 = vand.u32 %v140, 4294901760
    %v2231 = vsub.f32 %v140, %v2230
    %v2232 = vand.u32 %v2231, 4294901760
    %v2233 = vsub.f32 %v2231, %v2232
    %v2234 = vand.u32 %v2233, 4294901760
    %2235 = vmatpush1.msra.mxu0 %v2234
    %2236 = vmatprep.subr.mxu0 0.0
    %v2237 = vand.u32 %v141, 4294901760
    %v2238 = vsub.f32 %v141, %v2237
    %v2239 = vand.u32 %v2238, 4294901760
    %v2240 = vsub.f32 %v2238, %v2239
    %v2241 = vand.u32 %v2240, 4294901760
    %2242 = vmatpush1.msra.mxu0 %v2241
    %2243 = vmatprep.subr.mxu0 0.0
    %v2244 = vand.u32 %v142, 4294901760
    %v2245 = vsub.f32 %v142, %v2244
    %v2246 = vand.u32 %v2245, 4294901760
    %v2247 = vsub.f32 %v2245, %v2246
    %v2248 = vand.u32 %v2247, 4294901760
    %2249 = vmatpush1.msra.mxu0 %v2248
    %2250 = vmatprep.subr.mxu0 0.0
    %v2251 = vand.u32 %v143, 4294901760
    %v2252 = vsub.f32 %v143, %v2251
    %v2253 = vand.u32 %v2252, 4294901760
    %v2254 = vsub.f32 %v2252, %v2253
    %v2255 = vand.u32 %v2254, 4294901760
    %2256 = vmatpush1.msra.mxu0 %v2255
    %v2257 = vand.u32 %v187, 4294901760
    %2258 = vmatprep.mubr.f32.mxu0 %v2257
    %v2259 = vand.u32 %v179, 4294901760
    %2260 = vmatmul.mubr.f32.gmra.mrb[0].mxu0 %v2259
    %v2261 = vpop.f32.mrb[0].mxu0
    %v2262 = vadd.f32 %v2030, %v2261
    %v2263 = vpop.f32.mrb[0].mxu0
    %2264 = vdwg.mxu0
    %2265 = vmatprep.subr.mxu0 0.0
    %v2266 = vand.u32 %v112, 4294901760
    %v2267 = vsub.f32 %v112, %v2266
    %2268 = vmatpush1.msra.mxu0 %v2267
    %2269 = vmatprep.subr.mxu0 0.0
    %v2270 = vand.u32 %v113, 4294901760
    %v2271 = vsub.f32 %v113, %v2270
    %2272 = vmatpush1.msra.mxu0 %v2271
    %2273 = vmatprep.subr.mxu0 0.0
    %v2274 = vand.u32 %v114, 4294901760
    %v2275 = vsub.f32 %v114, %v2274
    %2276 = vmatpush1.msra.mxu0 %v2275
    %2277 = vmatprep.subr.mxu0 0.0
    %v2278 = vand.u32 %v115, 4294901760
    %v2279 = vsub.f32 %v115, %v2278
    %2280 = vmatpush1.msra.mxu0 %v2279
    %2281 = vmatprep.subr.mxu0 0.0
    %v2282 = vand.u32 %v116, 4294901760
    %v2283 = vsub.f32 %v116, %v2282
    %2284 = vmatpush1.msra.mxu0 %v2283
    %2285 = vmatprep.subr.mxu0 0.0
    %v2286 = vand.u32 %v117, 4294901760
    %v2287 = vsub.f32 %v117, %v2286
    %2288 = vmatpush1.msra.mxu0 %v2287
    %2289 = vmatprep.subr.mxu0 0.0
    %v2290 = vand.u32 %v118, 4294901760
    %v2291 = vsub.f32 %v118, %v2290
    %2292 = vmatpush1.msra.mxu0 %v2291
    %2293 = vmatprep.subr.mxu0 0.0
    %v2294 = vand.u32 %v119, 4294901760
    %v2295 = vsub.f32 %v119, %v2294
    %2296 = vmatpush1.msra.mxu0 %v2295
    %2297 = vmatprep.subr.mxu0 0.0
    %v2298 = vand.u32 %v120, 4294901760
    %v2299 = vsub.f32 %v120, %v2298
    %2300 = vmatpush1.msra.mxu0 %v2299
    %2301 = vmatprep.subr.mxu0 0.0
    %v2302 = vand.u32 %v121, 4294901760
    %v2303 = vsub.f32 %v121, %v2302
    %2304 = vmatpush1.msra.mxu0 %v2303
    %2305 = vmatprep.subr.mxu0 0.0
    %v2306 = vand.u32 %v122, 4294901760
    %v2307 = vsub.f32 %v122, %v2306
    %2308 = vmatpush1.msra.mxu0 %v2307
    %2309 = vmatprep.subr.mxu0 0.0
    %v2310 = vand.u32 %v123, 4294901760
    %v2311 = vsub.f32 %v123, %v2310
    %2312 = vmatpush1.msra.mxu0 %v2311
    %2313 = vmatprep.subr.mxu0 0.0
    %v2314 = vand.u32 %v124, 4294901760
    %v2315 = vsub.f32 %v124, %v2314
    %2316 = vmatpush1.msra.mxu0 %v2315
    %2317 = vmatprep.subr.mxu0 0.0
    %v2318 = vand.u32 %v125, 4294901760
    %v2319 = vsub.f32 %v125, %v2318
    %2320 = vmatpush1.msra.mxu0 %v2319
    %2321 = vmatprep.subr.mxu0 0.0
    %v2322 = vand.u32 %v126, 4294901760
    %v2323 = vsub.f32 %v126, %v2322
    %2324 = vmatpush1.msra.mxu0 %v2323
    %2325 = vmatprep.subr.mxu0 0.0
    %v2326 = vand.u32 %v127, 4294901760
    %v2327 = vsub.f32 %v127, %v2326
    %2328 = vmatpush1.msra.mxu0 %v2327
    %2329 = vmatprep.subr.mxu0 0.0
    %v2330 = vand.u32 %v128, 4294901760
    %v2331 = vsub.f32 %v128, %v2330
    %2332 = vmatpush1.msra.mxu0 %v2331
    %2333 = vmatprep.subr.mxu0 0.0
    %v2334 = vand.u32 %v129, 4294901760
    %v2335 = vsub.f32 %v129, %v2334
    %2336 = vmatpush1.msra.mxu0 %v2335
    %2337 = vmatprep.subr.mxu0 0.0
    %v2338 = vand.u32 %v130, 4294901760
    %v2339 = vsub.f32 %v130, %v2338
    %2340 = vmatpush1.msra.mxu0 %v2339
    %2341 = vmatprep.subr.mxu0 0.0
    %v2342 = vand.u32 %v131, 4294901760
    %v2343 = vsub.f32 %v131, %v2342
    %2344 = vmatpush1.msra.mxu0 %v2343
    %2345 = vmatprep.subr.mxu0 0.0
    %v2346 = vand.u32 %v132, 4294901760
    %v2347 = vsub.f32 %v132, %v2346
    %2348 = vmatpush1.msra.mxu0 %v2347
    %2349 = vmatprep.subr.mxu0 0.0
    %v2350 = vand.u32 %v133, 4294901760
    %v2351 = vsub.f32 %v133, %v2350
    %2352 = vmatpush1.msra.mxu0 %v2351
    %2353 = vmatprep.subr.mxu0 0.0
    %v2354 = vand.u32 %v134, 4294901760
    %v2355 = vsub.f32 %v134, %v2354
    %2356 = vmatpush1.msra.mxu0 %v2355
    %2357 = vmatprep.subr.mxu0 0.0
    %v2358 = vand.u32 %v135, 4294901760
    %v2359 = vsub.f32 %v135, %v2358
    %2360 = vmatpush1.msra.mxu0 %v2359
    %2361 = vmatprep.subr.mxu0 0.0
    %v2362 = vand.u32 %v136, 4294901760
    %v2363 = vsub.f32 %v136, %v2362
    %2364 = vmatpush1.msra.mxu0 %v2363
    %2365 = vmatprep.subr.mxu0 0.0
    %v2366 = vand.u32 %v137, 4294901760
    %v2367 = vsub.f32 %v137, %v2366
    %2368 = vmatpush1.msra.mxu0 %v2367
    %2369 = vmatprep.subr.mxu0 0.0
    %v2370 = vand.u32 %v138, 4294901760
    %v2371 = vsub.f32 %v138, %v2370
    %2372 = vmatpush1.msra.mxu0 %v2371
    %2373 = vmatprep.subr.mxu0 0.0
    %v2374 = vand.u32 %v139, 4294901760
    %v2375 = vsub.f32 %v139, %v2374
    %2376 = vmatpush1.msra.mxu0 %v2375
    %2377 = vmatprep.subr.mxu0 0.0
    %v2378 = vand.u32 %v140, 4294901760
    %v2379 = vsub.f32 %v140, %v2378
    %2380 = vmatpush1.msra.mxu0 %v2379
    %2381 = vmatprep.subr.mxu0 0.0
    %v2382 = vand.u32 %v141, 4294901760
    %v2383 = vsub.f32 %v141, %v2382
    %2384 = vmatpush1.msra.mxu0 %v2383
    %2385 = vmatprep.subr.mxu0 0.0
    %v2386 = vand.u32 %v142, 4294901760
    %v2387 = vsub.f32 %v142, %v2386
    %2388 = vmatpush1.msra.mxu0 %v2387
    %2389 = vmatprep.subr.mxu0 0.0
    %v2390 = vand.u32 %v143, 4294901760
    %v2391 = vsub.f32 %v143, %v2390
    %2392 = vmatpush1.msra.mxu0 %v2391
    %v2393 = vand.u32 %v187, 4294901760
    %v2394 = vsub.f32 %v187, %v2393
    %2395 = vmatprep.mubr.f32.mxu0 %v2394
    %v2396 = vand.u32 %v179, 4294901760
    %v2397 = vsub.f32 %v179, %v2396
    %2398 = vmatmul.mubr.f32.gmra.mrb[0].mxu0 %v2397
    %v2399 = vpop.f32.mrb[0].mxu0
    %v2400 = vadd.f32 %v2262, %v2399
    %v2401 = vpop.f32.mrb[0].mxu0
    %2402 = vdwg.mxu0
    %2403 = vmatprep.subr.mxu0 0.0
    %v2404 = vand.u32 %v112, 4294901760
    %2405 = vmatpush1.msra.mxu0 %v2404
    %2406 = vmatprep.subr.mxu0 0.0
    %v2407 = vand.u32 %v113, 4294901760
    %2408 = vmatpush1.msra.mxu0 %v2407
    %2409 = vmatprep.subr.mxu0 0.0
    %v2410 = vand.u32 %v114, 4294901760
    %2411 = vmatpush1.msra.mxu0 %v2410
    %2412 = vmatprep.subr.mxu0 0.0
    %v2413 = vand.u32 %v115, 4294901760
    %2414 = vmatpush1.msra.mxu0 %v2413
    %2415 = vmatprep.subr.mxu0 0.0
    %v2416 = vand.u32 %v116, 4294901760
    %2417 = vmatpush1.msra.mxu0 %v2416
    %2418 = vmatprep.subr.mxu0 0.0
    %v2419 = vand.u32 %v117, 4294901760
    %2420 = vmatpush1.msra.mxu0 %v2419
    %2421 = vmatprep.subr.mxu0 0.0
    %v2422 = vand.u32 %v118, 4294901760
    %2423 = vmatpush1.msra.mxu0 %v2422
    %2424 = vmatprep.subr.mxu0 0.0
    %v2425 = vand.u32 %v119, 4294901760
    %2426 = vmatpush1.msra.mxu0 %v2425
    %2427 = vmatprep.subr.mxu0 0.0
    %v2428 = vand.u32 %v120, 4294901760
    %2429 = vmatpush1.msra.mxu0 %v2428
    %2430 = vmatprep.subr.mxu0 0.0
    %v2431 = vand.u32 %v121, 4294901760
    %2432 = vmatpush1.msra.mxu0 %v2431
    %2433 = vmatprep.subr.mxu0 0.0
    %v2434 = vand.u32 %v122, 4294901760
    %2435 = vmatpush1.msra.mxu0 %v2434
    %2436 = vmatprep.subr.mxu0 0.0
    %v2437 = vand.u32 %v123, 4294901760
    %2438 = vmatpush1.msra.mxu0 %v2437
    %2439 = vmatprep.subr.mxu0 0.0
    %v2440 = vand.u32 %v124, 4294901760
    %2441 = vmatpush1.msra.mxu0 %v2440
    %2442 = vmatprep.subr.mxu0 0.0
    %v2443 = vand.u32 %v125, 4294901760
    %2444 = vmatpush1.msra.mxu0 %v2443
    %2445 = vmatprep.subr.mxu0 0.0
    %v2446 = vand.u32 %v126, 4294901760
    %2447 = vmatpush1.msra.mxu0 %v2446
    %2448 = vmatprep.subr.mxu0 0.0
    %v2449 = vand.u32 %v127, 4294901760
    %2450 = vmatpush1.msra.mxu0 %v2449
    %2451 = vmatprep.subr.mxu0 0.0
    %v2452 = vand.u32 %v128, 4294901760
    %2453 = vmatpush1.msra.mxu0 %v2452
    %2454 = vmatprep.subr.mxu0 0.0
    %v2455 = vand.u32 %v129, 4294901760
    %2456 = vmatpush1.msra.mxu0 %v2455
    %2457 = vmatprep.subr.mxu0 0.0
    %v2458 = vand.u32 %v130, 4294901760
    %2459 = vmatpush1.msra.mxu0 %v2458
    %2460 = vmatprep.subr.mxu0 0.0
    %v2461 = vand.u32 %v131, 4294901760
    %2462 = vmatpush1.msra.mxu0 %v2461
    %2463 = vmatprep.subr.mxu0 0.0
    %v2464 = vand.u32 %v132, 4294901760
    %2465 = vmatpush1.msra.mxu0 %v2464
    %2466 = vmatprep.subr.mxu0 0.0
    %v2467 = vand.u32 %v133, 4294901760
    %2468 = vmatpush1.msra.mxu0 %v2467
    %2469 = vmatprep.subr.mxu0 0.0
    %v2470 = vand.u32 %v134, 4294901760
    %2471 = vmatpush1.msra.mxu0 %v2470
    %2472 = vmatprep.subr.mxu0 0.0
    %v2473 = vand.u32 %v135, 4294901760
    %2474 = vmatpush1.msra.mxu0 %v2473
    %2475 = vmatprep.subr.mxu0 0.0
    %v2476 = vand.u32 %v136, 4294901760
    %2477 = vmatpush1.msra.mxu0 %v2476
    %2478 = vmatprep.subr.mxu0 0.0
    %v2479 = vand.u32 %v137, 4294901760
    %2480 = vmatpush1.msra.mxu0 %v2479
    %2481 = vmatprep.subr.mxu0 0.0
    %v2482 = vand.u32 %v138, 4294901760
    %2483 = vmatpush1.msra.mxu0 %v2482
    %2484 = vmatprep.subr.mxu0 0.0
    %v2485 = vand.u32 %v139, 4294901760
    %2486 = vmatpush1.msra.mxu0 %v2485
    %2487 = vmatprep.subr.mxu0 0.0
    %v2488 = vand.u32 %v140, 4294901760
    %2489 = vmatpush1.msra.mxu0 %v2488
    %2490 = vmatprep.subr.mxu0 0.0
    %v2491 = vand.u32 %v141, 4294901760
    %2492 = vmatpush1.msra.mxu0 %v2491
    %2493 = vmatprep.subr.mxu0 0.0
    %v2494 = vand.u32 %v142, 4294901760
    %2495 = vmatpush1.msra.mxu0 %v2494
    %2496 = vmatprep.subr.mxu0 0.0
    %v2497 = vand.u32 %v143, 4294901760
    %2498 = vmatpush1.msra.mxu0 %v2497
    %v2499 = vand.u32 %v187, 4294901760
    %v2500 = vsub.f32 %v187, %v2499
    %v2501 = vand.u32 %v2500, 4294901760
    %2502 = vmatprep.mubr.f32.mxu0 %v2501
    %v2503 = vand.u32 %v179, 4294901760
    %v2504 = vsub.f32 %v179, %v2503
    %v2505 = vand.u32 %v2504, 4294901760
    %2506 = vmatmul.mubr.f32.gmra.mrb[0].mxu0 %v2505
    %v2507 = vpop.f32.mrb[0].mxu0
    %v2508 = vadd.f32 %v2400, %v2507
    %v2509 = vpop.f32.mrb[0].mxu0
    %2510 = vdwg.mxu0
    %2511 = vmatprep.subr.mxu0 0.0
    %v2512 = vand.u32 %v112, 4294901760
    %v2513 = vsub.f32 %v112, %v2512
    %v2514 = vand.u32 %v2513, 4294901760
    %2515 = vmatpush1.msra.mxu0 %v2514
    %2516 = vmatprep.subr.mxu0 0.0
    %v2517 = vand.u32 %v113, 4294901760
    %v2518 = vsub.f32 %v113, %v2517
    %v2519 = vand.u32 %v2518, 4294901760
    %2520 = vmatpush1.msra.mxu0 %v2519
    %2521 = vmatprep.subr.mxu0 0.0
    %v2522 = vand.u32 %v114, 4294901760
    %v2523 = vsub.f32 %v114, %v2522
    %v2524 = vand.u32 %v2523, 4294901760
    %2525 = vmatpush1.msra.mxu0 %v2524
    %2526 = vmatprep.subr.mxu0 0.0
    %v2527 = vand.u32 %v115, 4294901760
    %v2528 = vsub.f32 %v115, %v2527
    %v2529 = vand.u32 %v2528, 4294901760
    %2530 = vmatpush1.msra.mxu0 %v2529
    %2531 = vmatprep.subr.mxu0 0.0
    %v2532 = vand.u32 %v116, 4294901760
    %v2533 = vsub.f32 %v116, %v2532
    %v2534 = vand.u32 %v2533, 4294901760
    %2535 = vmatpush1.msra.mxu0 %v2534
    %2536 = vmatprep.subr.mxu0 0.0
    %v2537 = vand.u32 %v117, 4294901760
    %v2538 = vsub.f32 %v117, %v2537
    %v2539 = vand.u32 %v2538, 4294901760
    %2540 = vmatpush1.msra.mxu0 %v2539
    %2541 = vmatprep.subr.mxu0 0.0
    %v2542 = vand.u32 %v118, 4294901760
    %v2543 = vsub.f32 %v118, %v2542
    %v2544 = vand.u32 %v2543, 4294901760
    %2545 = vmatpush1.msra.mxu0 %v2544
    %2546 = vmatprep.subr.mxu0 0.0
    %v2547 = vand.u32 %v119, 4294901760
    %v2548 = vsub.f32 %v119, %v2547
    %v2549 = vand.u32 %v2548, 4294901760
    %2550 = vmatpush1.msra.mxu0 %v2549
    %2551 = vmatprep.subr.mxu0 0.0
    %v2552 = vand.u32 %v120, 4294901760
    %v2553 = vsub.f32 %v120, %v2552
    %v2554 = vand.u32 %v2553, 4294901760
    %2555 = vmatpush1.msra.mxu0 %v2554
    %2556 = vmatprep.subr.mxu0 0.0
    %v2557 = vand.u32 %v121, 4294901760
    %v2558 = vsub.f32 %v121, %v2557
    %v2559 = vand.u32 %v2558, 4294901760
    %2560 = vmatpush1.msra.mxu0 %v2559
    %2561 = vmatprep.subr.mxu0 0.0
    %v2562 = vand.u32 %v122, 4294901760
    %v2563 = vsub.f32 %v122, %v2562
    %v2564 = vand.u32 %v2563, 4294901760
    %2565 = vmatpush1.msra.mxu0 %v2564
    %2566 = vmatprep.subr.mxu0 0.0
    %v2567 = vand.u32 %v123, 4294901760
    %v2568 = vsub.f32 %v123, %v2567
    %v2569 = vand.u32 %v2568, 4294901760
    %2570 = vmatpush1.msra.mxu0 %v2569
    %2571 = vmatprep.subr.mxu0 0.0
    %v2572 = vand.u32 %v124, 4294901760
    %v2573 = vsub.f32 %v124, %v2572
    %v2574 = vand.u32 %v2573, 4294901760
    %2575 = vmatpush1.msra.mxu0 %v2574
    %2576 = vmatprep.subr.mxu0 0.0
    %v2577 = vand.u32 %v125, 4294901760
    %v2578 = vsub.f32 %v125, %v2577
    %v2579 = vand.u32 %v2578, 4294901760
    %2580 = vmatpush1.msra.mxu0 %v2579
    %2581 = vmatprep.subr.mxu0 0.0
    %v2582 = vand.u32 %v126, 4294901760
    %v2583 = vsub.f32 %v126, %v2582
    %v2584 = vand.u32 %v2583, 4294901760
    %2585 = vmatpush1.msra.mxu0 %v2584
    %2586 = vmatprep.subr.mxu0 0.0
    %v2587 = vand.u32 %v127, 4294901760
    %v2588 = vsub.f32 %v127, %v2587
    %v2589 = vand.u32 %v2588, 4294901760
    %2590 = vmatpush1.msra.mxu0 %v2589
    %2591 = vmatprep.subr.mxu0 0.0
    %v2592 = vand.u32 %v128, 4294901760
    %v2593 = vsub.f32 %v128, %v2592
    %v2594 = vand.u32 %v2593, 4294901760
    %2595 = vmatpush1.msra.mxu0 %v2594
    %2596 = vmatprep.subr.mxu0 0.0
    %v2597 = vand.u32 %v129, 4294901760
    %v2598 = vsub.f32 %v129, %v2597
    %v2599 = vand.u32 %v2598, 4294901760
    %2600 = vmatpush1.msra.mxu0 %v2599
    %2601 = vmatprep.subr.mxu0 0.0
    %v2602 = vand.u32 %v130, 4294901760
    %v2603 = vsub.f32 %v130, %v2602
    %v2604 = vand.u32 %v2603, 4294901760
    %2605 = vmatpush1.msra.mxu0 %v2604
    %2606 = vmatprep.subr.mxu0 0.0
    %v2607 = vand.u32 %v131, 4294901760
    %v2608 = vsub.f32 %v131, %v2607
    %v2609 = vand.u32 %v2608, 4294901760
    %2610 = vmatpush1.msra.mxu0 %v2609
    %2611 = vmatprep.subr.mxu0 0.0
    %v2612 = vand.u32 %v132, 4294901760
    %v2613 = vsub.f32 %v132, %v2612
    %v2614 = vand.u32 %v2613, 4294901760
    %2615 = vmatpush1.msra.mxu0 %v2614
    %2616 = vmatprep.subr.mxu0 0.0
    %v2617 = vand.u32 %v133, 4294901760
    %v2618 = vsub.f32 %v133, %v2617
    %v2619 = vand.u32 %v2618, 4294901760
    %2620 = vmatpush1.msra.mxu0 %v2619
    %2621 = vmatprep.subr.mxu0 0.0
    %v2622 = vand.u32 %v134, 4294901760
    %v2623 = vsub.f32 %v134, %v2622
    %v2624 = vand.u32 %v2623, 4294901760
    %2625 = vmatpush1.msra.mxu0 %v2624
    %2626 = vmatprep.subr.mxu0 0.0
    %v2627 = vand.u32 %v135, 4294901760
    %v2628 = vsub.f32 %v135, %v2627
    %v2629 = vand.u32 %v2628, 4294901760
    %2630 = vmatpush1.msra.mxu0 %v2629
    %2631 = vmatprep.subr.mxu0 0.0
    %v2632 = vand.u32 %v136, 4294901760
    %v2633 = vsub.f32 %v136, %v2632
    %v2634 = vand.u32 %v2633, 4294901760
    %2635 = vmatpush1.msra.mxu0 %v2634
    %2636 = vmatprep.subr.mxu0 0.0
    %v2637 = vand.u32 %v137, 4294901760
    %v2638 = vsub.f32 %v137, %v2637
    %v2639 = vand.u32 %v2638, 4294901760
    %2640 = vmatpush1.msra.mxu0 %v2639
    %2641 = vmatprep.subr.mxu0 0.0
    %v2642 = vand.u32 %v138, 4294901760
    %v2643 = vsub.f32 %v138, %v2642
    %v2644 = vand.u32 %v2643, 4294901760
    %2645 = vmatpush1.msra.mxu0 %v2644
    %2646 = vmatprep.subr.mxu0 0.0
    %v2647 = vand.u32 %v139, 4294901760
    %v2648 = vsub.f32 %v139, %v2647
    %v2649 = vand.u32 %v2648, 4294901760
    %2650 = vmatpush1.msra.mxu0 %v2649
    %2651 = vmatprep.subr.mxu0 0.0
    %v2652 = vand.u32 %v140, 4294901760
    %v2653 = vsub.f32 %v140, %v2652
    %v2654 = vand.u32 %v2653, 4294901760
    %2655 = vmatpush1.msra.mxu0 %v2654
    %2656 = vmatprep.subr.mxu0 0.0
    %v2657 = vand.u32 %v141, 4294901760
    %v2658 = vsub.f32 %v141, %v2657
    %v2659 = vand.u32 %v2658, 4294901760
    %2660 = vmatpush1.msra.mxu0 %v2659
    %2661 = vmatprep.subr.mxu0 0.0
    %v2662 = vand.u32 %v142, 4294901760
    %v2663 = vsub.f32 %v142, %v2662
    %v2664 = vand.u32 %v2663, 4294901760
    %2665 = vmatpush1.msra.mxu0 %v2664
    %2666 = vmatprep.subr.mxu0 0.0
    %v2667 = vand.u32 %v143, 4294901760
    %v2668 = vsub.f32 %v143, %v2667
    %v2669 = vand.u32 %v2668, 4294901760
    %2670 = vmatpush1.msra.mxu0 %v2669
    %v2671 = vand.u32 %v187, 4294901760
    %2672 = vmatprep.mubr.f32.mxu0 %v2671
    %v2673 = vand.u32 %v179, 4294901760
    %2674 = vmatmul.mubr.f32.gmra.mrb[0].mxu0 %v2673
    %v2675 = vpop.f32.mrb[0].mxu0
    %v2676 = vadd.f32 %v2508, %v2675
    %v2677 = vpop.f32.mrb[0].mxu0
    %2678 = vdwg.mxu0
    %2679 = vmatprep.subr.mxu0 0.0
    %v2680 = vand.u32 %v112, 4294901760
    %2681 = vmatpush1.msra.mxu0 %v2680
    %2682 = vmatprep.subr.mxu0 0.0
    %v2683 = vand.u32 %v113, 4294901760
    %2684 = vmatpush1.msra.mxu0 %v2683
    %2685 = vmatprep.subr.mxu0 0.0
    %v2686 = vand.u32 %v114, 4294901760
    %2687 = vmatpush1.msra.mxu0 %v2686
    %2688 = vmatprep.subr.mxu0 0.0
    %v2689 = vand.u32 %v115, 4294901760
    %2690 = vmatpush1.msra.mxu0 %v2689
    %2691 = vmatprep.subr.mxu0 0.0
    %v2692 = vand.u32 %v116, 4294901760
    %2693 = vmatpush1.msra.mxu0 %v2692
    %2694 = vmatprep.subr.mxu0 0.0
    %v2695 = vand.u32 %v117, 4294901760
    %2696 = vmatpush1.msra.mxu0 %v2695
    %2697 = vmatprep.subr.mxu0 0.0
    %v2698 = vand.u32 %v118, 4294901760
    %2699 = vmatpush1.msra.mxu0 %v2698
    %2700 = vmatprep.subr.mxu0 0.0
    %v2701 = vand.u32 %v119, 4294901760
    %2702 = vmatpush1.msra.mxu0 %v2701
    %2703 = vmatprep.subr.mxu0 0.0
    %v2704 = vand.u32 %v120, 4294901760
    %2705 = vmatpush1.msra.mxu0 %v2704
    %2706 = vmatprep.subr.mxu0 0.0
    %v2707 = vand.u32 %v121, 4294901760
    %2708 = vmatpush1.msra.mxu0 %v2707
    %2709 = vmatprep.subr.mxu0 0.0
    %v2710 = vand.u32 %v122, 4294901760
    %2711 = vmatpush1.msra.mxu0 %v2710
    %2712 = vmatprep.subr.mxu0 0.0
    %v2713 = vand.u32 %v123, 4294901760
    %2714 = vmatpush1.msra.mxu0 %v2713
    %2715 = vmatprep.subr.mxu0 0.0
    %v2716 = vand.u32 %v124, 4294901760
    %2717 = vmatpush1.msra.mxu0 %v2716
    %2718 = vmatprep.subr.mxu0 0.0
    %v2719 = vand.u32 %v125, 4294901760
    %2720 = vmatpush1.msra.mxu0 %v2719
    %2721 = vmatprep.subr.mxu0 0.0
    %v2722 = vand.u32 %v126, 4294901760
    %2723 = vmatpush1.msra.mxu0 %v2722
    %2724 = vmatprep.subr.mxu0 0.0
    %v2725 = vand.u32 %v127, 4294901760
    %2726 = vmatpush1.msra.mxu0 %v2725
    %2727 = vmatprep.subr.mxu0 0.0
    %v2728 = vand.u32 %v128, 4294901760
    %2729 = vmatpush1.msra.mxu0 %v2728
    %2730 = vmatprep.subr.mxu0 0.0
    %v2731 = vand.u32 %v129, 4294901760
    %2732 = vmatpush1.msra.mxu0 %v2731
    %2733 = vmatprep.subr.mxu0 0.0
    %v2734 = vand.u32 %v130, 4294901760
    %2735 = vmatpush1.msra.mxu0 %v2734
    %2736 = vmatprep.subr.mxu0 0.0
    %v2737 = vand.u32 %v131, 4294901760
    %2738 = vmatpush1.msra.mxu0 %v2737
    %2739 = vmatprep.subr.mxu0 0.0
    %v2740 = vand.u32 %v132, 4294901760
    %2741 = vmatpush1.msra.mxu0 %v2740
    %2742 = vmatprep.subr.mxu0 0.0
    %v2743 = vand.u32 %v133, 4294901760
    %2744 = vmatpush1.msra.mxu0 %v2743
    %2745 = vmatprep.subr.mxu0 0.0
    %v2746 = vand.u32 %v134, 4294901760
    %2747 = vmatpush1.msra.mxu0 %v2746
    %2748 = vmatprep.subr.mxu0 0.0
    %v2749 = vand.u32 %v135, 4294901760
    %2750 = vmatpush1.msra.mxu0 %v2749
    %2751 = vmatprep.subr.mxu0 0.0
    %v2752 = vand.u32 %v136, 4294901760
    %2753 = vmatpush1.msra.mxu0 %v2752
    %2754 = vmatprep.subr.mxu0 0.0
    %v2755 = vand.u32 %v137, 4294901760
    %2756 = vmatpush1.msra.mxu0 %v2755
    %2757 = vmatprep.subr.mxu0 0.0
    %v2758 = vand.u32 %v138, 4294901760
    %2759 = vmatpush1.msra.mxu0 %v2758
    %2760 = vmatprep.subr.mxu0 0.0
    %v2761 = vand.u32 %v139, 4294901760
    %2762 = vmatpush1.msra.mxu0 %v2761
    %2763 = vmatprep.subr.mxu0 0.0
    %v2764 = vand.u32 %v140, 4294901760
    %2765 = vmatpush1.msra.mxu0 %v2764
    %2766 = vmatprep.subr.mxu0 0.0
    %v2767 = vand.u32 %v141, 4294901760
    %2768 = vmatpush1.msra.mxu0 %v2767
    %2769 = vmatprep.subr.mxu0 0.0
    %v2770 = vand.u32 %v142, 4294901760
    %2771 = vmatpush1.msra.mxu0 %v2770
    %2772 = vmatprep.subr.mxu0 0.0
    %v2773 = vand.u32 %v143, 4294901760
    %2774 = vmatpush1.msra.mxu0 %v2773
    %v2775 = vand.u32 %v187, 4294901760
    %2776 = vmatprep.mubr.f32.mxu0 %v2775
    %v2777 = vand.u32 %v179, 4294901760
    %2778 = vmatmul.mubr.f32.gmra.mrb[0].mxu0 %v2777
    %v2779 = vpop.f32.mrb[0].mxu0
    %v2780 = vadd.f32 %v2676, %v2779
    %v2781 = vpop.f32.mrb[0].mxu0
    %2782 = vdwg.mxu0
    %2783 = vmatprep.subr.mxu0 0.0
    %v2784 = vand.u32 %v144, 4294901760
    %2785 = vmatpush1.msra.mxu0 %v2784
    %2786 = vmatprep.subr.mxu0 0.0
    %v2787 = vand.u32 %v145, 4294901760
    %2788 = vmatpush1.msra.mxu0 %v2787
    %2789 = vmatprep.subr.mxu0 0.0
    %v2790 = vand.u32 %v146, 4294901760
    %2791 = vmatpush1.msra.mxu0 %v2790
    %2792 = vmatprep.subr.mxu0 0.0
    %v2793 = vand.u32 %v147, 4294901760
    %2794 = vmatpush1.msra.mxu0 %v2793
    %2795 = vmatprep.subr.mxu0 0.0
    %2796 = vmatpush1.msra.mxu0 0.0
    %2797 = vmatprep.subr.mxu0 0.0
    %2798 = vmatpush1.msra.mxu0 0.0
    %2799 = vmatprep.subr.mxu0 0.0
    %2800 = vmatpush1.msra.mxu0 0.0
    %2801 = vmatprep.subr.mxu0 0.0
    %2802 = vmatpush1.msra.mxu0 0.0
    %2803 = vmatprep.subr.mxu0 0.0
    %2804 = vmatpush1.msra.mxu0 0.0
    %2805 = vmatprep.subr.mxu0 0.0
    %2806 = vmatpush1.msra.mxu0 0.0
    %2807 = vmatprep.subr.mxu0 0.0
    %2808 = vmatpush1.msra.mxu0 0.0
    %2809 = vmatprep.subr.mxu0 0.0
    %2810 = vmatpush1.msra.mxu0 0.0
    %2811 = vmatprep.subr.mxu0 0.0
    %2812 = vmatpush1.msra.mxu0 0.0
    %2813 = vmatprep.subr.mxu0 0.0
    %2814 = vmatpush1.msra.mxu0 0.0
    %2815 = vmatprep.subr.mxu0 0.0
    %2816 = vmatpush1.msra.mxu0 0.0
    %2817 = vmatprep.subr.mxu0 0.0
    %2818 = vmatpush1.msra.mxu0 0.0
    %2819 = vmatprep.subr.mxu0 0.0
    %2820 = vmatpush1.msra.mxu0 0.0
    %2821 = vmatprep.subr.mxu0 0.0
    %2822 = vmatpush1.msra.mxu0 0.0
    %2823 = vmatprep.subr.mxu0 0.0
    %2824 = vmatpush1.msra.mxu0 0.0
    %2825 = vmatprep.subr.mxu0 0.0
    %2826 = vmatpush1.msra.mxu0 0.0
    %2827 = vmatprep.subr.mxu0 0.0
    %2828 = vmatpush1.msra.mxu0 0.0
    %2829 = vmatprep.subr.mxu0 0.0
    %2830 = vmatpush1.msra.mxu0 0.0
    %2831 = vmatprep.subr.mxu0 0.0
    %2832 = vmatpush1.msra.mxu0 0.0
    %2833 = vmatprep.subr.mxu0 0.0
    %2834 = vmatpush1.msra.mxu0 0.0
    %2835 = vmatprep.subr.mxu0 0.0
    %2836 = vmatpush1.msra.mxu0 0.0
    %2837 = vmatprep.subr.mxu0 0.0
    %2838 = vmatpush1.msra.mxu0 0.0
    %2839 = vmatprep.subr.mxu0 0.0
    %2840 = vmatpush1.msra.mxu0 0.0
    %2841 = vmatprep.subr.mxu0 0.0
    %2842 = vmatpush1.msra.mxu0 0.0
    %2843 = vmatprep.subr.mxu0 0.0
    %2844 = vmatpush1.msra.mxu0 0.0
    %2845 = vmatprep.subr.mxu0 0.0
    %2846 = vmatpush1.msra.mxu0 0.0
    %2847 = vmatprep.subr.mxu0 0.0
    %2848 = vmatpush1.msra.mxu0 0.0
    %2849 = vmatprep.subr.mxu0 0.0
    %2850 = vmatpush1.msra.mxu0 0.0
    %2851 = vmatprep.mubr.f32.mxu0 0.0
    %v2852 = vand.u32 %v195, 4294901760
    %v2853 = vsub.f32 %v195, %v2852
    %v2854 = vand.u32 %v2853, 4294901760
    %v2855 = vsub.f32 %v2853, %v2854
    %v2856 = vand.u32 %v2855, 4294901760
    %2857 = vmatmul.mubr.f32.gmra.mrb[0].mxu0 %v2856
    %v2858 = vpop.f32.mrb[0].mxu0
    %v2859 = vadd.f32 %v2780, %v2858
    %v2860 = vpop.f32.mrb[0].mxu0
    %2861 = vdwg.mxu0
    %2862 = vmatprep.subr.mxu0 0.0
    %v2863 = vand.u32 %v144, 4294901760
    %v2864 = vsub.f32 %v144, %v2863
    %v2865 = vand.u32 %v2864, 4294901760
    %v2866 = vsub.f32 %v2864, %v2865
    %v2867 = vand.u32 %v2866, 4294901760
    %2868 = vmatpush1.msra.mxu0 %v2867
    %2869 = vmatprep.subr.mxu0 0.0
    %v2870 = vand.u32 %v145, 4294901760
    %v2871 = vsub.f32 %v145, %v2870
    %v2872 = vand.u32 %v2871, 4294901760
    %v2873 = vsub.f32 %v2871, %v2872
    %v2874 = vand.u32 %v2873, 4294901760
    %2875 = vmatpush1.msra.mxu0 %v2874
    %2876 = vmatprep.subr.mxu0 0.0
    %v2877 = vand.u32 %v146, 4294901760
    %v2878 = vsub.f32 %v146, %v2877
    %v2879 = vand.u32 %v2878, 4294901760
    %v2880 = vsub.f32 %v2878, %v2879
    %v2881 = vand.u32 %v2880, 4294901760
    %2882 = vmatpush1.msra.mxu0 %v2881
    %2883 = vmatprep.subr.mxu0 0.0
    %v2884 = vand.u32 %v147, 4294901760
    %v2885 = vsub.f32 %v147, %v2884
    %v2886 = vand.u32 %v2885, 4294901760
    %v2887 = vsub.f32 %v2885, %v2886
    %v2888 = vand.u32 %v2887, 4294901760
    %2889 = vmatpush1.msra.mxu0 %v2888
    %2890 = vmatprep.subr.mxu0 0.0
    %2891 = vmatpush1.msra.mxu0 0.0
    %2892 = vmatprep.subr.mxu0 0.0
    %2893 = vmatpush1.msra.mxu0 0.0
    %2894 = vmatprep.subr.mxu0 0.0
    %2895 = vmatpush1.msra.mxu0 0.0
    %2896 = vmatprep.subr.mxu0 0.0
    %2897 = vmatpush1.msra.mxu0 0.0
    %2898 = vmatprep.subr.mxu0 0.0
    %2899 = vmatpush1.msra.mxu0 0.0
    %2900 = vmatprep.subr.mxu0 0.0
    %2901 = vmatpush1.msra.mxu0 0.0
    %2902 = vmatprep.subr.mxu0 0.0
    %2903 = vmatpush1.msra.mxu0 0.0
    %2904 = vmatprep.subr.mxu0 0.0
    %2905 = vmatpush1.msra.mxu0 0.0
    %2906 = vmatprep.subr.mxu0 0.0
    %2907 = vmatpush1.msra.mxu0 0.0
    %2908 = vmatprep.subr.mxu0 0.0
    %2909 = vmatpush1.msra.mxu0 0.0
    %2910 = vmatprep.subr.mxu0 0.0
    %2911 = vmatpush1.msra.mxu0 0.0
    %2912 = vmatprep.subr.mxu0 0.0
    %2913 = vmatpush1.msra.mxu0 0.0
    %2914 = vmatprep.subr.mxu0 0.0
    %2915 = vmatpush1.msra.mxu0 0.0
    %2916 = vmatprep.subr.mxu0 0.0
    %2917 = vmatpush1.msra.mxu0 0.0
    %2918 = vmatprep.subr.mxu0 0.0
    %2919 = vmatpush1.msra.mxu0 0.0
    %2920 = vmatprep.subr.mxu0 0.0
    %2921 = vmatpush1.msra.mxu0 0.0
    %2922 = vmatprep.subr.mxu0 0.0
    %2923 = vmatpush1.msra.mxu0 0.0
    %2924 = vmatprep.subr.mxu0 0.0
    %2925 = vmatpush1.msra.mxu0 0.0
    %2926 = vmatprep.subr.mxu0 0.0
    %2927 = vmatpush1.msra.mxu0 0.0
    %2928 = vmatprep.subr.mxu0 0.0
    %2929 = vmatpush1.msra.mxu0 0.0
    %2930 = vmatprep.subr.mxu0 0.0
    %2931 = vmatpush1.msra.mxu0 0.0
    %2932 = vmatprep.subr.mxu0 0.0
    %2933 = vmatpush1.msra.mxu0 0.0
    %2934 = vmatprep.subr.mxu0 0.0
    %2935 = vmatpush1.msra.mxu0 0.0
    %2936 = vmatprep.subr.mxu0 0.0
    %2937 = vmatpush1.msra.mxu0 0.0
    %2938 = vmatprep.subr.mxu0 0.0
    %2939 = vmatpush1.msra.mxu0 0.0
    %2940 = vmatprep.subr.mxu0 0.0
    %2941 = vmatpush1.msra.mxu0 0.0
    %2942 = vmatprep.subr.mxu0 0.0
    %2943 = vmatpush1.msra.mxu0 0.0
    %2944 = vmatprep.subr.mxu0 0.0
    %2945 = vmatpush1.msra.mxu0 0.0
    %2946 = vmatprep.mubr.f32.mxu0 0.0
    %v2947 = vand.u32 %v195, 4294901760
    %2948 = vmatmul.mubr.f32.gmra.mrb[0].mxu0 %v2947
    %v2949 = vpop.f32.mrb[0].mxu0
    %v2950 = vadd.f32 %v2859, %v2949
    %v2951 = vpop.f32.mrb[0].mxu0
    %2952 = vdwg.mxu0
    %2953 = vmatprep.subr.mxu0 0.0
    %v2954 = vand.u32 %v144, 4294901760
    %v2955 = vsub.f32 %v144, %v2954
    %2956 = vmatpush1.msra.mxu0 %v2955
    %2957 = vmatprep.subr.mxu0 0.0
    %v2958 = vand.u32 %v145, 4294901760
    %v2959 = vsub.f32 %v145, %v2958
    %2960 = vmatpush1.msra.mxu0 %v2959
    %2961 = vmatprep.subr.mxu0 0.0
    %v2962 = vand.u32 %v146, 4294901760
    %v2963 = vsub.f32 %v146, %v2962
    %2964 = vmatpush1.msra.mxu0 %v2963
    %2965 = vmatprep.subr.mxu0 0.0
    %v2966 = vand.u32 %v147, 4294901760
    %v2967 = vsub.f32 %v147, %v2966
    %2968 = vmatpush1.msra.mxu0 %v2967
    %2969 = vmatprep.subr.mxu0 0.0
    %2970 = vmatpush1.msra.mxu0 0.0
    %2971 = vmatprep.subr.mxu0 0.0
    %2972 = vmatpush1.msra.mxu0 0.0
    %2973 = vmatprep.subr.mxu0 0.0
    %2974 = vmatpush1.msra.mxu0 0.0
    %2975 = vmatprep.subr.mxu0 0.0
    %2976 = vmatpush1.msra.mxu0 0.0
    %2977 = vmatprep.subr.mxu0 0.0
    %2978 = vmatpush1.msra.mxu0 0.0
    %2979 = vmatprep.subr.mxu0 0.0
    %2980 = vmatpush1.msra.mxu0 0.0
    %2981 = vmatprep.subr.mxu0 0.0
    %2982 = vmatpush1.msra.mxu0 0.0
    %2983 = vmatprep.subr.mxu0 0.0
    %2984 = vmatpush1.msra.mxu0 0.0
    %2985 = vmatprep.subr.mxu0 0.0
    %2986 = vmatpush1.msra.mxu0 0.0
    %2987 = vmatprep.subr.mxu0 0.0
    %2988 = vmatpush1.msra.mxu0 0.0
    %2989 = vmatprep.subr.mxu0 0.0
    %2990 = vmatpush1.msra.mxu0 0.0
    %2991 = vmatprep.subr.mxu0 0.0
    %2992 = vmatpush1.msra.mxu0 0.0
    %2993 = vmatprep.subr.mxu0 0.0
    %2994 = vmatpush1.msra.mxu0 0.0
    %2995 = vmatprep.subr.mxu0 0.0
    %2996 = vmatpush1.msra.mxu0 0.0
    %2997 = vmatprep.subr.mxu0 0.0
    %2998 = vmatpush1.msra.mxu0 0.0
    %2999 = vmatprep.subr.mxu0 0.0
    %3000 = vmatpush1.msra.mxu0 0.0
    %3001 = vmatprep.subr.mxu0 0.0
    %3002 = vmatpush1.msra.mxu0 0.0
    %3003 = vmatprep.subr.mxu0 0.0
    %3004 = vmatpush1.msra.mxu0 0.0
    %3005 = vmatprep.subr.mxu0 0.0
    %3006 = vmatpush1.msra.mxu0 0.0
    %3007 = vmatprep.subr.mxu0 0.0
    %3008 = vmatpush1.msra.mxu0 0.0
    %3009 = vmatprep.subr.mxu0 0.0
    %3010 = vmatpush1.msra.mxu0 0.0
    %3011 = vmatprep.subr.mxu0 0.0
    %3012 = vmatpush1.msra.mxu0 0.0
    %3013 = vmatprep.subr.mxu0 0.0
    %3014 = vmatpush1.msra.mxu0 0.0
    %3015 = vmatprep.subr.mxu0 0.0
    %3016 = vmatpush1.msra.mxu0 0.0
    %3017 = vmatprep.subr.mxu0 0.0
    %3018 = vmatpush1.msra.mxu0 0.0
    %3019 = vmatprep.subr.mxu0 0.0
    %3020 = vmatpush1.msra.mxu0 0.0
    %3021 = vmatprep.subr.mxu0 0.0
    %3022 = vmatpush1.msra.mxu0 0.0
    %3023 = vmatprep.subr.mxu0 0.0
    %3024 = vmatpush1.msra.mxu0 0.0
    %3025 = vmatprep.mubr.f32.mxu0 0.0
    %v3026 = vand.u32 %v195, 4294901760
    %v3027 = vsub.f32 %v195, %v3026
    %3028 = vmatmul.mubr.f32.gmra.mrb[0].mxu0 %v3027
    %v3029 = vpop.f32.mrb[0].mxu0
    %v3030 = vadd.f32 %v2950, %v3029
    %v3031 = vpop.f32.mrb[0].mxu0
    %3032 = vdwg.mxu0
    %3033 = vmatprep.subr.mxu0 0.0
    %v3034 = vand.u32 %v144, 4294901760
    %3035 = vmatpush1.msra.mxu0 %v3034
    %3036 = vmatprep.subr.mxu0 0.0
    %v3037 = vand.u32 %v145, 4294901760
    %3038 = vmatpush1.msra.mxu0 %v3037
    %3039 = vmatprep.subr.mxu0 0.0
    %v3040 = vand.u32 %v146, 4294901760
    %3041 = vmatpush1.msra.mxu0 %v3040
    %3042 = vmatprep.subr.mxu0 0.0
    %v3043 = vand.u32 %v147, 4294901760
    %3044 = vmatpush1.msra.mxu0 %v3043
    %3045 = vmatprep.subr.mxu0 0.0
    %3046 = vmatpush1.msra.mxu0 0.0
    %3047 = vmatprep.subr.mxu0 0.0
    %3048 = vmatpush1.msra.mxu0 0.0
    %3049 = vmatprep.subr.mxu0 0.0
    %3050 = vmatpush1.msra.mxu0 0.0
    %3051 = vmatprep.subr.mxu0 0.0
    %3052 = vmatpush1.msra.mxu0 0.0
    %3053 = vmatprep.subr.mxu0 0.0
    %3054 = vmatpush1.msra.mxu0 0.0
    %3055 = vmatprep.subr.mxu0 0.0
    %3056 = vmatpush1.msra.mxu0 0.0
    %3057 = vmatprep.subr.mxu0 0.0
    %3058 = vmatpush1.msra.mxu0 0.0
    %3059 = vmatprep.subr.mxu0 0.0
    %3060 = vmatpush1.msra.mxu0 0.0
    %3061 = vmatprep.subr.mxu0 0.0
    %3062 = vmatpush1.msra.mxu0 0.0
    %3063 = vmatprep.subr.mxu0 0.0
    %3064 = vmatpush1.msra.mxu0 0.0
    %3065 = vmatprep.subr.mxu0 0.0
    %3066 = vmatpush1.msra.mxu0 0.0
    %3067 = vmatprep.subr.mxu0 0.0
    %3068 = vmatpush1.msra.mxu0 0.0
    %3069 = vmatprep.subr.mxu0 0.0
    %3070 = vmatpush1.msra.mxu0 0.0
    %3071 = vmatprep.subr.mxu0 0.0
    %3072 = vmatpush1.msra.mxu0 0.0
    %3073 = vmatprep.subr.mxu0 0.0
    %3074 = vmatpush1.msra.mxu0 0.0
    %3075 = vmatprep.subr.mxu0 0.0
    %3076 = vmatpush1.msra.mxu0 0.0
    %3077 = vmatprep.subr.mxu0 0.0
    %3078 = vmatpush1.msra.mxu0 0.0
    %3079 = vmatprep.subr.mxu0 0.0
    %3080 = vmatpush1.msra.mxu0 0.0
    %3081 = vmatprep.subr.mxu0 0.0
    %3082 = vmatpush1.msra.mxu0 0.0
    %3083 = vmatprep.subr.mxu0 0.0
    %3084 = vmatpush1.msra.mxu0 0.0
    %3085 = vmatprep.subr.mxu0 0.0
    %3086 = vmatpush1.msra.mxu0 0.0
    %3087 = vmatprep.subr.mxu0 0.0
    %3088 = vmatpush1.msra.mxu0 0.0
    %3089 = vmatprep.subr.mxu0 0.0
    %3090 = vmatpush1.msra.mxu0 0.0
    %3091 = vmatprep.subr.mxu0 0.0
    %3092 = vmatpush1.msra.mxu0 0.0
    %3093 = vmatprep.subr.mxu0 0.0
    %3094 = vmatpush1.msra.mxu0 0.0
    %3095 = vmatprep.subr.mxu0 0.0
    %3096 = vmatpush1.msra.mxu0 0.0
    %3097 = vmatprep.subr.mxu0 0.0
    %3098 = vmatpush1.msra.mxu0 0.0
    %3099 = vmatprep.subr.mxu0 0.0
    %3100 = vmatpush1.msra.mxu0 0.0
    %3101 = vmatprep.mubr.f32.mxu0 0.0
    %v3102 = vand.u32 %v195, 4294901760
    %v3103 = vsub.f32 %v195, %v3102
    %v3104 = vand.u32 %v3103, 4294901760
    %3105 = vmatmul.mubr.f32.gmra.mrb[0].mxu0 %v3104
    %v3106 = vpop.f32.mrb[0].mxu0
    %v3107 = vadd.f32 %v3030, %v3106
    %v3108 = vpop.f32.mrb[0].mxu0
    %3109 = vdwg.mxu0
    %3110 = vmatprep.subr.mxu0 0.0
    %v3111 = vand.u32 %v144, 4294901760
    %v3112 = vsub.f32 %v144, %v3111
    %v3113 = vand.u32 %v3112, 4294901760
    %3114 = vmatpush1.msra.mxu0 %v3113
    %3115 = vmatprep.subr.mxu0 0.0
    %v3116 = vand.u32 %v145, 4294901760
    %v3117 = vsub.f32 %v145, %v3116
    %v3118 = vand.u32 %v3117, 4294901760
    %3119 = vmatpush1.msra.mxu0 %v3118
    %3120 = vmatprep.subr.mxu0 0.0
    %v3121 = vand.u32 %v146, 4294901760
    %v3122 = vsub.f32 %v146, %v3121
    %v3123 = vand.u32 %v3122, 4294901760
    %3124 = vmatpush1.msra.mxu0 %v3123
    %3125 = vmatprep.subr.mxu0 0.0
    %v3126 = vand.u32 %v147, 4294901760
    %v3127 = vsub.f32 %v147, %v3126
    %v3128 = vand.u32 %v3127, 4294901760
    %3129 = vmatpush1.msra.mxu0 %v3128
    %3130 = vmatprep.subr.mxu0 0.0
    %3131 = vmatpush1.msra.mxu0 0.0
    %3132 = vmatprep.subr.mxu0 0.0
    %3133 = vmatpush1.msra.mxu0 0.0
    %3134 = vmatprep.subr.mxu0 0.0
    %3135 = vmatpush1.msra.mxu0 0.0
    %3136 = vmatprep.subr.mxu0 0.0
    %3137 = vmatpush1.msra.mxu0 0.0
    %3138 = vmatprep.subr.mxu0 0.0
    %3139 = vmatpush1.msra.mxu0 0.0
    %3140 = vmatprep.subr.mxu0 0.0
    %3141 = vmatpush1.msra.mxu0 0.0
    %3142 = vmatprep.subr.mxu0 0.0
    %3143 = vmatpush1.msra.mxu0 0.0
    %3144 = vmatprep.subr.mxu0 0.0
    %3145 = vmatpush1.msra.mxu0 0.0
    %3146 = vmatprep.subr.mxu0 0.0
    %3147 = vmatpush1.msra.mxu0 0.0
    %3148 = vmatprep.subr.mxu0 0.0
    %3149 = vmatpush1.msra.mxu0 0.0
    %3150 = vmatprep.subr.mxu0 0.0
    %3151 = vmatpush1.msra.mxu0 0.0
    %3152 = vmatprep.subr.mxu0 0.0
    %3153 = vmatpush1.msra.mxu0 0.0
    %3154 = vmatprep.subr.mxu0 0.0
    %3155 = vmatpush1.msra.mxu0 0.0
    %3156 = vmatprep.subr.mxu0 0.0
    %3157 = vmatpush1.msra.mxu0 0.0
    %3158 = vmatprep.subr.mxu0 0.0
    %3159 = vmatpush1.msra.mxu0 0.0
    %3160 = vmatprep.subr.mxu0 0.0
    %3161 = vmatpush1.msra.mxu0 0.0
    %3162 = vmatprep.subr.mxu0 0.0
    %3163 = vmatpush1.msra.mxu0 0.0
    %3164 = vmatprep.subr.mxu0 0.0
    %3165 = vmatpush1.msra.mxu0 0.0
    %3166 = vmatprep.subr.mxu0 0.0
    %3167 = vmatpush1.msra.mxu0 0.0
    %3168 = vmatprep.subr.mxu0 0.0
    %3169 = vmatpush1.msra.mxu0 0.0
    %3170 = vmatprep.subr.mxu0 0.0
    %3171 = vmatpush1.msra.mxu0 0.0
    %3172 = vmatprep.subr.mxu0 0.0
    %3173 = vmatpush1.msra.mxu0 0.0
    %3174 = vmatprep.subr.mxu0 0.0
    %3175 = vmatpush1.msra.mxu0 0.0
    %3176 = vmatprep.subr.mxu0 0.0
    %3177 = vmatpush1.msra.mxu0 0.0
    %3178 = vmatprep.subr.mxu0 0.0
    %3179 = vmatpush1.msra.mxu0 0.0
    %3180 = vmatprep.subr.mxu0 0.0
    %3181 = vmatpush1.msra.mxu0 0.0
    %3182 = vmatprep.subr.mxu0 0.0
    %3183 = vmatpush1.msra.mxu0 0.0
    %3184 = vmatprep.subr.mxu0 0.0
    %3185 = vmatpush1.msra.mxu0 0.0
    %3186 = vmatprep.mubr.f32.mxu0 0.0
    %v3187 = vand.u32 %v195, 4294901760
    %3188 = vmatmul.mubr.f32.gmra.mrb[0].mxu0 %v3187
    %v3189 = vpop.f32.mrb[0].mxu0
    %v3190 = vadd.f32 %v3107, %v3189
    %v3191 = vpop.f32.mrb[0].mxu0
    %3192 = vdwg.mxu0
    %3193 = vmatprep.subr.mxu0 0.0
    %v3194 = vand.u32 %v144, 4294901760
    %3195 = vmatpush1.msra.mxu0 %v3194
    %3196 = vmatprep.subr.mxu0 0.0
    %v3197 = vand.u32 %v145, 4294901760
    %3198 = vmatpush1.msra.mxu0 %v3197
    %3199 = vmatprep.subr.mxu0 0.0
    %v3200 = vand.u32 %v146, 4294901760
    %3201 = vmatpush1.msra.mxu0 %v3200
    %3202 = vmatprep.subr.mxu0 0.0
    %v3203 = vand.u32 %v147, 4294901760
    %3204 = vmatpush1.msra.mxu0 %v3203
    %3205 = vmatprep.subr.mxu0 0.0
    %3206 = vmatpush1.msra.mxu0 0.0
    %3207 = vmatprep.subr.mxu0 0.0
    %3208 = vmatpush1.msra.mxu0 0.0
    %3209 = vmatprep.subr.mxu0 0.0
    %3210 = vmatpush1.msra.mxu0 0.0
    %3211 = vmatprep.subr.mxu0 0.0
    %3212 = vmatpush1.msra.mxu0 0.0
    %3213 = vmatprep.subr.mxu0 0.0
    %3214 = vmatpush1.msra.mxu0 0.0
    %3215 = vmatprep.subr.mxu0 0.0
    %3216 = vmatpush1.msra.mxu0 0.0
    %3217 = vmatprep.subr.mxu0 0.0
    %3218 = vmatpush1.msra.mxu0 0.0
    %3219 = vmatprep.subr.mxu0 0.0
    %3220 = vmatpush1.msra.mxu0 0.0
    %3221 = vmatprep.subr.mxu0 0.0
    %3222 = vmatpush1.msra.mxu0 0.0
    %3223 = vmatprep.subr.mxu0 0.0
    %3224 = vmatpush1.msra.mxu0 0.0
    %3225 = vmatprep.subr.mxu0 0.0
    %3226 = vmatpush1.msra.mxu0 0.0
    %3227 = vmatprep.subr.mxu0 0.0
    %3228 = vmatpush1.msra.mxu0 0.0
    %3229 = vmatprep.subr.mxu0 0.0
    %3230 = vmatpush1.msra.mxu0 0.0
    %3231 = vmatprep.subr.mxu0 0.0
    %3232 = vmatpush1.msra.mxu0 0.0
    %3233 = vmatprep.subr.mxu0 0.0
    %3234 = vmatpush1.msra.mxu0 0.0
    %3235 = vmatprep.subr.mxu0 0.0
    %3236 = vmatpush1.msra.mxu0 0.0
    %3237 = vmatprep.subr.mxu0 0.0
    %3238 = vmatpush1.msra.mxu0 0.0
    %3239 = vmatprep.subr.mxu0 0.0
    %3240 = vmatpush1.msra.mxu0 0.0
    %3241 = vmatprep.subr.mxu0 0.0
    %3242 = vmatpush1.msra.mxu0 0.0
    %3243 = vmatprep.subr.mxu0 0.0
    %3244 = vmatpush1.msra.mxu0 0.0
    %3245 = vmatprep.subr.mxu0 0.0
    %3246 = vmatpush1.msra.mxu0 0.0
    %3247 = vmatprep.subr.mxu0 0.0
    %3248 = vmatpush1.msra.mxu0 0.0
    %3249 = vmatprep.subr.mxu0 0.0
    %3250 = vmatpush1.msra.mxu0 0.0
    %3251 = vmatprep.subr.mxu0 0.0
    %3252 = vmatpush1.msra.mxu0 0.0
    %3253 = vmatprep.subr.mxu0 0.0
    %3254 = vmatpush1.msra.mxu0 0.0
    %3255 = vmatprep.subr.mxu0 0.0
    %3256 = vmatpush1.msra.mxu0 0.0
    %3257 = vmatprep.subr.mxu0 0.0
    %3258 = vmatpush1.msra.mxu0 0.0
    %3259 = vmatprep.subr.mxu0 0.0
    %3260 = vmatpush1.msra.mxu0 0.0
    %3261 = vmatprep.mubr.f32.mxu0 0.0
    %v3262 = vand.u32 %v195, 4294901760
    %3263 = vmatmul.mubr.f32.gmra.mrb[0].mxu0 %v3262
    %v3264 = vpop.f32.mrb[0].mxu0
    %v3265 = vadd.f32 %v3190, %v3264
    %v3266 = vpop.f32.mrb[0].mxu0
    %3267 = vdwg.mxu0
    %v3268 = vtanh.pop %v3265
    %v3269 = vld [vmem:[#allocation5] sm:$0xff]
    %v3270 = vld [vmem:[#allocation5 + $0x8] sm:$0xff]
    %v3271 = vld [vmem:[#allocation5 + $0x10] sm:$0xff]
    %v3272 = vld [vmem:[#allocation5 + $0x18] sm:$0xff]
    %v3273 = vld [vmem:[#allocation5 + $0x20] sm:$0xff]
    %v3274 = vld [vmem:[#allocation5 + $0x28] sm:$0xff]
    %v3275 = vld [vmem:[#allocation5 + $0x30] sm:$0xff]
    %v3276 = vld [vmem:[#allocation5 + $0x38] sm:$0xff]
    %v3277 = vld [vmem:[#allocation5 + $0x40] sm:$0xff]
    %v3278 = vld [vmem:[#allocation5 + $0x48] sm:$0xff]
    %v3279 = vld [vmem:[#allocation5 + $0x50] sm:$0xff]
    %v3280 = vld [vmem:[#allocation5 + $0x58] sm:$0xff]
    %v3281 = vld [vmem:[#allocation5 + $0x60] sm:$0xff]
    %v3282 = vld [vmem:[#allocation5 + $0x68] sm:$0xff]
    %v3283 = vld [vmem:[#allocation5 + $0x70] sm:$0xff]
    %v3284 = vld [vmem:[#allocation5 + $0x78] sm:$0xff]
    %v3285 = vld [vmem:[%s3 + $0x1] sm:$0x1]
    %v3286 = vlaneseq
    %v3287 = vshrl.u32 %v3286, 7
    %v3288 = vsub.s32 0, %v3287
    %v3289 = vrot.slane %v3285, %v3288
    %3290 = vmatprep.subr.mxu0 0.0
    %v3291 = vand.u32 %v3269, 4294901760
    %3292 = vmatpush1.msra.mxu0 %v3291
    %3293 = vmatprep.subr.mxu0 0.0
    %v3294 = vand.u32 %v3270, 4294901760
    %3295 = vmatpush1.msra.mxu0 %v3294
    %3296 = vmatprep.subr.mxu0 0.0
    %v3297 = vand.u32 %v3271, 4294901760
    %3298 = vmatpush1.msra.mxu0 %v3297
    %3299 = vmatprep.subr.mxu0 0.0
    %v3300 = vand.u32 %v3272, 4294901760
    %3301 = vmatpush1.msra.mxu0 %v3300
    %3302 = vmatprep.subr.mxu0 0.0
    %v3303 = vand.u32 %v3273, 4294901760
    %3304 = vmatpush1.msra.mxu0 %v3303
    %3305 = vmatprep.subr.mxu0 0.0
    %v3306 = vand.u32 %v3274, 4294901760
    %3307 = vmatpush1.msra.mxu0 %v3306
    %3308 = vmatprep.subr.mxu0 0.0
    %v3309 = vand.u32 %v3275, 4294901760
    %3310 = vmatpush1.msra.mxu0 %v3309
    %3311 = vmatprep.subr.mxu0 0.0
    %v3312 = vand.u32 %v3276, 4294901760
    %3313 = vmatpush1.msra.mxu0 %v3312
    %3314 = vmatprep.subr.mxu0 0.0
    %v3315 = vand.u32 %v3277, 4294901760
    %3316 = vmatpush1.msra.mxu0 %v3315
    %3317 = vmatprep.subr.mxu0 0.0
    %v3318 = vand.u32 %v3278, 4294901760
    %3319 = vmatpush1.msra.mxu0 %v3318
    %3320 = vmatprep.subr.mxu0 0.0
    %v3321 = vand.u32 %v3279, 4294901760
    %3322 = vmatpush1.msra.mxu0 %v3321
    %3323 = vmatprep.subr.mxu0 0.0
    %v3324 = vand.u32 %v3280, 4294901760
    %3325 = vmatpush1.msra.mxu0 %v3324
    %3326 = vmatprep.subr.mxu0 0.0
    %v3327 = vand.u32 %v3281, 4294901760
    %3328 = vmatpush1.msra.mxu0 %v3327
    %3329 = vmatprep.subr.mxu0 0.0
    %v3330 = vand.u32 %v3282, 4294901760
    %3331 = vmatpush1.msra.mxu0 %v3330
    %3332 = vmatprep.subr.mxu0 0.0
    %v3333 = vand.u32 %v3283, 4294901760
    %3334 = vmatpush1.msra.mxu0 %v3333
    %3335 = vmatprep.subr.mxu0 0.0
    %v3336 = vand.u32 %v3284, 4294901760
    %3337 = vmatpush1.msra.mxu0 %v3336
    %3338 = vmatprep.subr.mxu0 0.0
    %3339 = vmatpush1.msra.mxu0 0.0
    %3340 = vmatprep.subr.mxu0 0.0
    %3341 = vmatpush1.msra.mxu0 0.0
    %3342 = vmatprep.subr.mxu0 0.0
    %3343 = vmatpush1.msra.mxu0 0.0
    %3344 = vmatprep.subr.mxu0 0.0
    %3345 = vmatpush1.msra.mxu0 0.0
    %3346 = vmatprep.subr.mxu0 0.0
    %3347 = vmatpush1.msra.mxu0 0.0
    %3348 = vmatprep.subr.mxu0 0.0
    %3349 = vmatpush1.msra.mxu0 0.0
    %3350 = vmatprep.subr.mxu0 0.0
    %3351 = vmatpush1.msra.mxu0 0.0
    %3352 = vmatprep.subr.mxu0 0.0
    %3353 = vmatpush1.msra.mxu0 0.0
    %3354 = vmatprep.subr.mxu0 0.0
    %3355 = vmatpush1.msra.mxu0 0.0
    %3356 = vmatprep.subr.mxu0 0.0
    %3357 = vmatpush1.msra.mxu0 0.0
    %3358 = vmatprep.subr.mxu0 0.0
    %3359 = vmatpush1.msra.mxu0 0.0
    %3360 = vmatprep.subr.mxu0 0.0
    %3361 = vmatpush1.msra.mxu0 0.0
    %3362 = vmatprep.subr.mxu0 0.0
    %3363 = vmatpush1.msra.mxu0 0.0
    %3364 = vmatprep.subr.mxu0 0.0
    %3365 = vmatpush1.msra.mxu0 0.0
    %3366 = vmatprep.subr.mxu0 0.0
    %3367 = vmatpush1.msra.mxu0 0.0
    %3368 = vmatprep.subr.mxu0 0.0
    %3369 = vmatpush1.msra.mxu0 0.0
    %3370 = vmatprep.mubr.f32.mxu0 0.0
    %v3371 = vand.u32 %v3268, 4294901760
    %v3372 = vsub.f32 %v3268, %v3371
    %v3373 = vand.u32 %v3372, 4294901760
    %v3374 = vsub.f32 %v3372, %v3373
    %v3375 = vand.u32 %v3374, 4294901760
    %3376 = vmatmul.mubr.f32.gmra.mrb[0].mxu0 %v3375
    %v3377 = vpop.f32.mrb[0].mxu0
    %v3378 = vadd.f32 %v3289, %v3377
    %v3379 = vpop.f32.mrb[0].mxu0
    %3380 = vdwg.mxu0
    %3381 = vmatprep.subr.mxu0 0.0
    %v3382 = vand.u32 %v3269, 4294901760
    %v3383 = vsub.f32 %v3269, %v3382
    %v3384 = vand.u32 %v3383, 4294901760
    %v3385 = vsub.f32 %v3383, %v3384
    %v3386 = vand.u32 %v3385, 4294901760
    %3387 = vmatpush1.msra.mxu0 %v3386
    %3388 = vmatprep.subr.mxu0 0.0
    %v3389 = vand.u32 %v3270, 4294901760
    %v3390 = vsub.f32 %v3270, %v3389
    %v3391 = vand.u32 %v3390, 4294901760
    %v3392 = vsub.f32 %v3390, %v3391
    %v3393 = vand.u32 %v3392, 4294901760
    %3394 = vmatpush1.msra.mxu0 %v3393
    %3395 = vmatprep.subr.mxu0 0.0
    %v3396 = vand.u32 %v3271, 4294901760
    %v3397 = vsub.f32 %v3271, %v3396
    %v3398 = vand.u32 %v3397, 4294901760
    %v3399 = vsub.f32 %v3397, %v3398
    %v3400 = vand.u32 %v3399, 4294901760
    %3401 = vmatpush1.msra.mxu0 %v3400
    %3402 = vmatprep.subr.mxu0 0.0
    %v3403 = vand.u32 %v3272, 4294901760
    %v3404 = vsub.f32 %v3272, %v3403
    %v3405 = vand.u32 %v3404, 4294901760
    %v3406 = vsub.f32 %v3404, %v3405
    %v3407 = vand.u32 %v3406, 4294901760
    %3408 = vmatpush1.msra.mxu0 %v3407
    %3409 = vmatprep.subr.mxu0 0.0
    %v3410 = vand.u32 %v3273, 4294901760
    %v3411 = vsub.f32 %v3273, %v3410
    %v3412 = vand.u32 %v3411, 4294901760
    %v3413 = vsub.f32 %v3411, %v3412
    %v3414 = vand.u32 %v3413, 4294901760
    %3415 = vmatpush1.msra.mxu0 %v3414
    %3416 = vmatprep.subr.mxu0 0.0
    %v3417 = vand.u32 %v3274, 4294901760
    %v3418 = vsub.f32 %v3274, %v3417
    %v3419 = vand.u32 %v3418, 4294901760
    %v3420 = vsub.f32 %v3418, %v3419
    %v3421 = vand.u32 %v3420, 4294901760
    %3422 = vmatpush1.msra.mxu0 %v3421
    %3423 = vmatprep.subr.mxu0 0.0
    %v3424 = vand.u32 %v3275, 4294901760
    %v3425 = vsub.f32 %v3275, %v3424
    %v3426 = vand.u32 %v3425, 4294901760
    %v3427 = vsub.f32 %v3425, %v3426
    %v3428 = vand.u32 %v3427, 4294901760
    %3429 = vmatpush1.msra.mxu0 %v3428
    %3430 = vmatprep.subr.mxu0 0.0
    %v3431 = vand.u32 %v3276, 4294901760
    %v3432 = vsub.f32 %v3276, %v3431
    %v3433 = vand.u32 %v3432, 4294901760
    %v3434 = vsub.f32 %v3432, %v3433
    %v3435 = vand.u32 %v3434, 4294901760
    %3436 = vmatpush1.msra.mxu0 %v3435
    %3437 = vmatprep.subr.mxu0 0.0
    %v3438 = vand.u32 %v3277, 4294901760
    %v3439 = vsub.f32 %v3277, %v3438
    %v3440 = vand.u32 %v3439, 4294901760
    %v3441 = vsub.f32 %v3439, %v3440
    %v3442 = vand.u32 %v3441, 4294901760
    %3443 = vmatpush1.msra.mxu0 %v3442
    %3444 = vmatprep.subr.mxu0 0.0
    %v3445 = vand.u32 %v3278, 4294901760
    %v3446 = vsub.f32 %v3278, %v3445
    %v3447 = vand.u32 %v3446, 4294901760
    %v3448 = vsub.f32 %v3446, %v3447
    %v3449 = vand.u32 %v3448, 4294901760
    %3450 = vmatpush1.msra.mxu0 %v3449
    %3451 = vmatprep.subr.mxu0 0.0
    %v3452 = vand.u32 %v3279, 4294901760
    %v3453 = vsub.f32 %v3279, %v3452
    %v3454 = vand.u32 %v3453, 4294901760
    %v3455 = vsub.f32 %v3453, %v3454
    %v3456 = vand.u32 %v3455, 4294901760
    %3457 = vmatpush1.msra.mxu0 %v3456
    %3458 = vmatprep.subr.mxu0 0.0
    %v3459 = vand.u32 %v3280, 4294901760
    %v3460 = vsub.f32 %v3280, %v3459
    %v3461 = vand.u32 %v3460, 4294901760
    %v3462 = vsub.f32 %v3460, %v3461
    %v3463 = vand.u32 %v3462, 4294901760
    %3464 = vmatpush1.msra.mxu0 %v3463
    %3465 = vmatprep.subr.mxu0 0.0
    %v3466 = vand.u32 %v3281, 4294901760
    %v3467 = vsub.f32 %v3281, %v3466
    %v3468 = vand.u32 %v3467, 4294901760
    %v3469 = vsub.f32 %v3467, %v3468
    %v3470 = vand.u32 %v3469, 4294901760
    %3471 = vmatpush1.msra.mxu0 %v3470
    %3472 = vmatprep.subr.mxu0 0.0
    %v3473 = vand.u32 %v3282, 4294901760
    %v3474 = vsub.f32 %v3282, %v3473
    %v3475 = vand.u32 %v3474, 4294901760
    %v3476 = vsub.f32 %v3474, %v3475
    %v3477 = vand.u32 %v3476, 4294901760
    %3478 = vmatpush1.msra.mxu0 %v3477
    %3479 = vmatprep.subr.mxu0 0.0
    %v3480 = vand.u32 %v3283, 4294901760
    %v3481 = vsub.f32 %v3283, %v3480
    %v3482 = vand.u32 %v3481, 4294901760
    %v3483 = vsub.f32 %v3481, %v3482
    %v3484 = vand.u32 %v3483, 4294901760
    %3485 = vmatpush1.msra.mxu0 %v3484
    %3486 = vmatprep.subr.mxu0 0.0
    %v3487 = vand.u32 %v3284, 4294901760
    %v3488 = vsub.f32 %v3284, %v3487
    %v3489 = vand.u32 %v3488, 4294901760
    %v3490 = vsub.f32 %v3488, %v3489
    %v3491 = vand.u32 %v3490, 4294901760
    %3492 = vmatpush1.msra.mxu0 %v3491
    %3493 = vmatprep.subr.mxu0 0.0
    %3494 = vmatpush1.msra.mxu0 0.0
    %3495 = vmatprep.subr.mxu0 0.0
    %3496 = vmatpush1.msra.mxu0 0.0
    %3497 = vmatprep.subr.mxu0 0.0
    %3498 = vmatpush1.msra.mxu0 0.0
    %3499 = vmatprep.subr.mxu0 0.0
    %3500 = vmatpush1.msra.mxu0 0.0
    %3501 = vmatprep.subr.mxu0 0.0
    %3502 = vmatpush1.msra.mxu0 0.0
    %3503 = vmatprep.subr.mxu0 0.0
    %3504 = vmatpush1.msra.mxu0 0.0
    %3505 = vmatprep.subr.mxu0 0.0
    %3506 = vmatpush1.msra.mxu0 0.0
    %3507 = vmatprep.subr.mxu0 0.0
    %3508 = vmatpush1.msra.mxu0 0.0
    %3509 = vmatprep.subr.mxu0 0.0
    %3510 = vmatpush1.msra.mxu0 0.0
    %3511 = vmatprep.subr.mxu0 0.0
    %3512 = vmatpush1.msra.mxu0 0.0
    %3513 = vmatprep.subr.mxu0 0.0
    %3514 = vmatpush1.msra.mxu0 0.0
    %3515 = vmatprep.subr.mxu0 0.0
    %3516 = vmatpush1.msra.mxu0 0.0
    %3517 = vmatprep.subr.mxu0 0.0
    %3518 = vmatpush1.msra.mxu0 0.0
    %3519 = vmatprep.subr.mxu0 0.0
    %3520 = vmatpush1.msra.mxu0 0.0
    %3521 = vmatprep.subr.mxu0 0.0
    %3522 = vmatpush1.msra.mxu0 0.0
    %3523 = vmatprep.subr.mxu0 0.0
    %3524 = vmatpush1.msra.mxu0 0.0
    %3525 = vmatprep.mubr.f32.mxu0 0.0
    %v3526 = vand.u32 %v3268, 4294901760
    %3527 = vmatmul.mubr.f32.gmra.mrb[0].mxu0 %v3526
    %v3528 = vpop.f32.mrb[0].mxu0
    %v3529 = vadd.f32 %v3378, %v3528
    %v3530 = vpop.f32.mrb[0].mxu0
    %3531 = vdwg.mxu0
    %3532 = vmatprep.subr.mxu0 0.0
    %v3533 = vand.u32 %v3269, 4294901760
    %v3534 = vsub.f32 %v3269, %v3533
    %3535 = vmatpush1.msra.mxu0 %v3534
    %3536 = vmatprep.subr.mxu0 0.0
    %v3537 = vand.u32 %v3270, 4294901760
    %v3538 = vsub.f32 %v3270, %v3537
    %3539 = vmatpush1.msra.mxu0 %v3538
    %3540 = vmatprep.subr.mxu0 0.0
    %v3541 = vand.u32 %v3271, 4294901760
    %v3542 = vsub.f32 %v3271, %v3541
    %3543 = vmatpush1.msra.mxu0 %v3542
    %3544 = vmatprep.subr.mxu0 0.0
    %v3545 = vand.u32 %v3272, 4294901760
    %v3546 = vsub.f32 %v3272, %v3545
    %3547 = vmatpush1.msra.mxu0 %v3546
    %3548 = vmatprep.subr.mxu0 0.0
    %v3549 = vand.u32 %v3273, 4294901760
    %v3550 = vsub.f32 %v3273, %v3549
    %3551 = vmatpush1.msra.mxu0 %v3550
    %3552 = vmatprep.subr.mxu0 0.0
    %v3553 = vand.u32 %v3274, 4294901760
    %v3554 = vsub.f32 %v3274, %v3553
    %3555 = vmatpush1.msra.mxu0 %v3554
    %3556 = vmatprep.subr.mxu0 0.0
    %v3557 = vand.u32 %v3275, 4294901760
    %v3558 = vsub.f32 %v3275, %v3557
    %3559 = vmatpush1.msra.mxu0 %v3558
    %3560 = vmatprep.subr.mxu0 0.0
    %v3561 = vand.u32 %v3276, 4294901760
    %v3562 = vsub.f32 %v3276, %v3561
    %3563 = vmatpush1.msra.mxu0 %v3562
    %3564 = vmatprep.subr.mxu0 0.0
    %v3565 = vand.u32 %v3277, 4294901760
    %v3566 = vsub.f32 %v3277, %v3565
    %3567 = vmatpush1.msra.mxu0 %v3566
    %3568 = vmatprep.subr.mxu0 0.0
    %v3569 = vand.u32 %v3278, 4294901760
    %v3570 = vsub.f32 %v3278, %v3569
    %3571 = vmatpush1.msra.mxu0 %v3570
    %3572 = vmatprep.subr.mxu0 0.0
    %v3573 = vand.u32 %v3279, 4294901760
    %v3574 = vsub.f32 %v3279, %v3573
    %3575 = vmatpush1.msra.mxu0 %v3574
    %3576 = vmatprep.subr.mxu0 0.0
    %v3577 = vand.u32 %v3280, 4294901760
    %v3578 = vsub.f32 %v3280, %v3577
    %3579 = vmatpush1.msra.mxu0 %v3578
    %3580 = vmatprep.subr.mxu0 0.0
    %v3581 = vand.u32 %v3281, 4294901760
    %v3582 = vsub.f32 %v3281, %v3581
    %3583 = vmatpush1.msra.mxu0 %v3582
    %3584 = vmatprep.subr.mxu0 0.0
    %v3585 = vand.u32 %v3282, 4294901760
    %v3586 = vsub.f32 %v3282, %v3585
    %3587 = vmatpush1.msra.mxu0 %v3586
    %3588 = vmatprep.subr.mxu0 0.0
    %v3589 = vand.u32 %v3283, 4294901760
    %v3590 = vsub.f32 %v3283, %v3589
    %3591 = vmatpush1.msra.mxu0 %v3590
    %3592 = vmatprep.subr.mxu0 0.0
    %v3593 = vand.u32 %v3284, 4294901760
    %v3594 = vsub.f32 %v3284, %v3593
    %3595 = vmatpush1.msra.mxu0 %v3594
    %3596 = vmatprep.subr.mxu0 0.0
    %3597 = vmatpush1.msra.mxu0 0.0
    %3598 = vmatprep.subr.mxu0 0.0
    %3599 = vmatpush1.msra.mxu0 0.0
    %3600 = vmatprep.subr.mxu0 0.0
    %3601 = vmatpush1.msra.mxu0 0.0
    %3602 = vmatprep.subr.mxu0 0.0
    %3603 = vmatpush1.msra.mxu0 0.0
    %3604 = vmatprep.subr.mxu0 0.0
    %3605 = vmatpush1.msra.mxu0 0.0
    %3606 = vmatprep.subr.mxu0 0.0
    %3607 = vmatpush1.msra.mxu0 0.0
    %3608 = vmatprep.subr.mxu0 0.0
    %3609 = vmatpush1.msra.mxu0 0.0
    %3610 = vmatprep.subr.mxu0 0.0
    %3611 = vmatpush1.msra.mxu0 0.0
    %3612 = vmatprep.subr.mxu0 0.0
    %3613 = vmatpush1.msra.mxu0 0.0
    %3614 = vmatprep.subr.mxu0 0.0
    %3615 = vmatpush1.msra.mxu0 0.0
    %3616 = vmatprep.subr.mxu0 0.0
    %3617 = vmatpush1.msra.mxu0 0.0
    %3618 = vmatprep.subr.mxu0 0.0
    %3619 = vmatpush1.msra.mxu0 0.0
    %3620 = vmatprep.subr.mxu0 0.0
    %3621 = vmatpush1.msra.mxu0 0.0
    %3622 = vmatprep.subr.mxu0 0.0
    %3623 = vmatpush1.msra.mxu0 0.0
    %3624 = vmatprep.subr.mxu0 0.0
    %3625 = vmatpush1.msra.mxu0 0.0
    %3626 = vmatprep.subr.mxu0 0.0
    %3627 = vmatpush1.msra.mxu0 0.0
    %3628 = vmatprep.mubr.f32.mxu0 0.0
    %v3629 = vand.u32 %v3268, 4294901760
    %v3630 = vsub.f32 %v3268, %v3629
    %3631 = vmatmul.mubr.f32.gmra.mrb[0].mxu0 %v3630
    %v3632 = vpop.f32.mrb[0].mxu0
    %v3633 = vadd.f32 %v3529, %v3632
    %v3634 = vpop.f32.mrb[0].mxu0
    %3635 = vdwg.mxu0
    %3636 = vmatprep.subr.mxu0 0.0
    %v3637 = vand.u32 %v3269, 4294901760
    %3638 = vmatpush1.msra.mxu0 %v3637
    %3639 = vmatprep.subr.mxu0 0.0
    %v3640 = vand.u32 %v3270, 4294901760
    %3641 = vmatpush1.msra.mxu0 %v3640
    %3642 = vmatprep.subr.mxu0 0.0
    %v3643 = vand.u32 %v3271, 4294901760
    %3644 = vmatpush1.msra.mxu0 %v3643
    %3645 = vmatprep.subr.mxu0 0.0
    %v3646 = vand.u32 %v3272, 4294901760
    %3647 = vmatpush1.msra.mxu0 %v3646
    %3648 = vmatprep.subr.mxu0 0.0
    %v3649 = vand.u32 %v3273, 4294901760
    %3650 = vmatpush1.msra.mxu0 %v3649
    %3651 = vmatprep.subr.mxu0 0.0
    %v3652 = vand.u32 %v3274, 4294901760
    %3653 = vmatpush1.msra.mxu0 %v3652
    %3654 = vmatprep.subr.mxu0 0.0
    %v3655 = vand.u32 %v3275, 4294901760
    %3656 = vmatpush1.msra.mxu0 %v3655
    %3657 = vmatprep.subr.mxu0 0.0
    %v3658 = vand.u32 %v3276, 4294901760
    %3659 = vmatpush1.msra.mxu0 %v3658
    %3660 = vmatprep.subr.mxu0 0.0
    %v3661 = vand.u32 %v3277, 4294901760
    %3662 = vmatpush1.msra.mxu0 %v3661
    %3663 = vmatprep.subr.mxu0 0.0
    %v3664 = vand.u32 %v3278, 4294901760
    %3665 = vmatpush1.msra.mxu0 %v3664
    %3666 = vmatprep.subr.mxu0 0.0
    %v3667 = vand.u32 %v3279, 4294901760
    %3668 = vmatpush1.msra.mxu0 %v3667
    %3669 = vmatprep.subr.mxu0 0.0
    %v3670 = vand.u32 %v3280, 4294901760
    %3671 = vmatpush1.msra.mxu0 %v3670
    %3672 = vmatprep.subr.mxu0 0.0
    %v3673 = vand.u32 %v3281, 4294901760
    %3674 = vmatpush1.msra.mxu0 %v3673
    %3675 = vmatprep.subr.mxu0 0.0
    %v3676 = vand.u32 %v3282, 4294901760
    %3677 = vmatpush1.msra.mxu0 %v3676
    %3678 = vmatprep.subr.mxu0 0.0
    %v3679 = vand.u32 %v3283, 4294901760
    %3680 = vmatpush1.msra.mxu0 %v3679
    %3681 = vmatprep.subr.mxu0 0.0
    %v3682 = vand.u32 %v3284, 4294901760
    %3683 = vmatpush1.msra.mxu0 %v3682
    %3684 = vmatprep.subr.mxu0 0.0
    %3685 = vmatpush1.msra.mxu0 0.0
    %3686 = vmatprep.subr.mxu0 0.0
    %3687 = vmatpush1.msra.mxu0 0.0
    %3688 = vmatprep.subr.mxu0 0.0
    %3689 = vmatpush1.msra.mxu0 0.0
    %3690 = vmatprep.subr.mxu0 0.0
    %3691 = vmatpush1.msra.mxu0 0.0
    %3692 = vmatprep.subr.mxu0 0.0
    %3693 = vmatpush1.msra.mxu0 0.0
    %3694 = vmatprep.subr.mxu0 0.0
    %3695 = vmatpush1.msra.mxu0 0.0
    %3696 = vmatprep.subr.mxu0 0.0
    %3697 = vmatpush1.msra.mxu0 0.0
    %3698 = vmatprep.subr.mxu0 0.0
    %3699 = vmatpush1.msra.mxu0 0.0
    %3700 = vmatprep.subr.mxu0 0.0
    %3701 = vmatpush1.msra.mxu0 0.0
    %3702 = vmatprep.subr.mxu0 0.0
    %3703 = vmatpush1.msra.mxu0 0.0
    %3704 = vmatprep.subr.mxu0 0.0
    %3705 = vmatpush1.msra.mxu0 0.0
    %3706 = vmatprep.subr.mxu0 0.0
    %3707 = vmatpush1.msra.mxu0 0.0
    %3708 = vmatprep.subr.mxu0 0.0
    %3709 = vmatpush1.msra.mxu0 0.0
    %3710 = vmatprep.subr.mxu0 0.0
    %3711 = vmatpush1.msra.mxu0 0.0
    %3712 = vmatprep.subr.mxu0 0.0
    %3713 = vmatpush1.msra.mxu0 0.0
    %3714 = vmatprep.subr.mxu0 0.0
    %3715 = vmatpush1.msra.mxu0 0.0
    %3716 = vmatprep.mubr.f32.mxu0 0.0
    %v3717 = vand.u32 %v3268, 4294901760
    %v3718 = vsub.f32 %v3268, %v3717
    %v3719 = vand.u32 %v3718, 4294901760
    %3720 = vmatmul.mubr.f32.gmra.mrb[0].mxu0 %v3719
    %v3721 = vpop.f32.mrb[0].mxu0
    %v3722 = vadd.f32 %v3633, %v3721
    %v3723 = vpop.f32.mrb[0].mxu0
    %3724 = vdwg.mxu0
    %3725 = vmatprep.subr.mxu0 0.0
    %v3726 = vand.u32 %v3269, 4294901760
    %v3727 = vsub.f32 %v3269, %v3726
    %v3728 = vand.u32 %v3727, 4294901760
    %3729 = vmatpush1.msra.mxu0 %v3728
    %3730 = vmatprep.subr.mxu0 0.0
    %v3731 = vand.u32 %v3270, 4294901760
    %v3732 = vsub.f32 %v3270, %v3731
    %v3733 = vand.u32 %v3732, 4294901760
    %3734 = vmatpush1.msra.mxu0 %v3733
    %3735 = vmatprep.subr.mxu0 0.0
    %v3736 = vand.u32 %v3271, 4294901760
    %v3737 = vsub.f32 %v3271, %v3736
    %v3738 = vand.u32 %v3737, 4294901760
    %3739 = vmatpush1.msra.mxu0 %v3738
    %3740 = vmatprep.subr.mxu0 0.0
    %v3741 = vand.u32 %v3272, 4294901760
    %v3742 = vsub.f32 %v3272, %v3741
    %v3743 = vand.u32 %v3742, 4294901760
    %3744 = vmatpush1.msra.mxu0 %v3743
    %3745 = vmatprep.subr.mxu0 0.0
    %v3746 = vand.u32 %v3273, 4294901760
    %v3747 = vsub.f32 %v3273, %v3746
    %v3748 = vand.u32 %v3747, 4294901760
    %3749 = vmatpush1.msra.mxu0 %v3748
    %3750 = vmatprep.subr.mxu0 0.0
    %v3751 = vand.u32 %v3274, 4294901760
    %v3752 = vsub.f32 %v3274, %v3751
    %v3753 = vand.u32 %v3752, 4294901760
    %3754 = vmatpush1.msra.mxu0 %v3753
    %3755 = vmatprep.subr.mxu0 0.0
    %v3756 = vand.u32 %v3275, 4294901760
    %v3757 = vsub.f32 %v3275, %v3756
    %v3758 = vand.u32 %v3757, 4294901760
    %3759 = vmatpush1.msra.mxu0 %v3758
    %3760 = vmatprep.subr.mxu0 0.0
    %v3761 = vand.u32 %v3276, 4294901760
    %v3762 = vsub.f32 %v3276, %v3761
    %v3763 = vand.u32 %v3762, 4294901760
    %3764 = vmatpush1.msra.mxu0 %v3763
    %3765 = vmatprep.subr.mxu0 0.0
    %v3766 = vand.u32 %v3277, 4294901760
    %v3767 = vsub.f32 %v3277, %v3766
    %v3768 = vand.u32 %v3767, 4294901760
    %3769 = vmatpush1.msra.mxu0 %v3768
    %3770 = vmatprep.subr.mxu0 0.0
    %v3771 = vand.u32 %v3278, 4294901760
    %v3772 = vsub.f32 %v3278, %v3771
    %v3773 = vand.u32 %v3772, 4294901760
    %3774 = vmatpush1.msra.mxu0 %v3773
    %3775 = vmatprep.subr.mxu0 0.0
    %v3776 = vand.u32 %v3279, 4294901760
    %v3777 = vsub.f32 %v3279, %v3776
    %v3778 = vand.u32 %v3777, 4294901760
    %3779 = vmatpush1.msra.mxu0 %v3778
    %3780 = vmatprep.subr.mxu0 0.0
    %v3781 = vand.u32 %v3280, 4294901760
    %v3782 = vsub.f32 %v3280, %v3781
    %v3783 = vand.u32 %v3782, 4294901760
    %3784 = vmatpush1.msra.mxu0 %v3783
    %3785 = vmatprep.subr.mxu0 0.0
    %v3786 = vand.u32 %v3281, 4294901760
    %v3787 = vsub.f32 %v3281, %v3786
    %v3788 = vand.u32 %v3787, 4294901760
    %3789 = vmatpush1.msra.mxu0 %v3788
    %3790 = vmatprep.subr.mxu0 0.0
    %v3791 = vand.u32 %v3282, 4294901760
    %v3792 = vsub.f32 %v3282, %v3791
    %v3793 = vand.u32 %v3792, 4294901760
    %3794 = vmatpush1.msra.mxu0 %v3793
    %3795 = vmatprep.subr.mxu0 0.0
    %v3796 = vand.u32 %v3283, 4294901760
    %v3797 = vsub.f32 %v3283, %v3796
    %v3798 = vand.u32 %v3797, 4294901760
    %3799 = vmatpush1.msra.mxu0 %v3798
    %3800 = vmatprep.subr.mxu0 0.0
    %v3801 = vand.u32 %v3284, 4294901760
    %v3802 = vsub.f32 %v3284, %v3801
    %v3803 = vand.u32 %v3802, 4294901760
    %3804 = vmatpush1.msra.mxu0 %v3803
    %3805 = vmatprep.subr.mxu0 0.0
    %3806 = vmatpush1.msra.mxu0 0.0
    %3807 = vmatprep.subr.mxu0 0.0
    %3808 = vmatpush1.msra.mxu0 0.0
    %3809 = vmatprep.subr.mxu0 0.0
    %3810 = vmatpush1.msra.mxu0 0.0
    %3811 = vmatprep.subr.mxu0 0.0
    %3812 = vmatpush1.msra.mxu0 0.0
    %3813 = vmatprep.subr.mxu0 0.0
    %3814 = vmatpush1.msra.mxu0 0.0
    %3815 = vmatprep.subr.mxu0 0.0
    %3816 = vmatpush1.msra.mxu0 0.0
    %3817 = vmatprep.subr.mxu0 0.0
    %3818 = vmatpush1.msra.mxu0 0.0
    %3819 = vmatprep.subr.mxu0 0.0
    %3820 = vmatpush1.msra.mxu0 0.0
    %3821 = vmatprep.subr.mxu0 0.0
    %3822 = vmatpush1.msra.mxu0 0.0
    %3823 = vmatprep.subr.mxu0 0.0
    %3824 = vmatpush1.msra.mxu0 0.0
    %3825 = vmatprep.subr.mxu0 0.0
    %3826 = vmatpush1.msra.mxu0 0.0
    %3827 = vmatprep.subr.mxu0 0.0
    %3828 = vmatpush1.msra.mxu0 0.0
    %3829 = vmatprep.subr.mxu0 0.0
    %3830 = vmatpush1.msra.mxu0 0.0
    %3831 = vmatprep.subr.mxu0 0.0
    %3832 = vmatpush1.msra.mxu0 0.0
    %3833 = vmatprep.subr.mxu0 0.0
    %3834 = vmatpush1.msra.mxu0 0.0
    %3835 = vmatprep.subr.mxu0 0.0
    %3836 = vmatpush1.msra.mxu0 0.0
    %3837 = vmatprep.mubr.f32.mxu0 0.0
    %v3838 = vand.u32 %v3268, 4294901760
    %3839 = vmatmul.mubr.f32.gmra.mrb[0].mxu0 %v3838
    %v3840 = vpop.f32.mrb[0].mxu0
    %v3841 = vadd.f32 %v3722, %v3840
    %v3842 = vpop.f32.mrb[0].mxu0
    %3843 = vdwg.mxu0
    %3844 = vmatprep.subr.mxu0 0.0
    %v3845 = vand.u32 %v3269, 4294901760
    %3846 = vmatpush1.msra.mxu0 %v3845
    %3847 = vmatprep.subr.mxu0 0.0
    %v3848 = vand.u32 %v3270, 4294901760
    %3849 = vmatpush1.msra.mxu0 %v3848
    %3850 = vmatprep.subr.mxu0 0.0
    %v3851 = vand.u32 %v3271, 4294901760
    %3852 = vmatpush1.msra.mxu0 %v3851
    %3853 = vmatprep.subr.mxu0 0.0
    %v3854 = vand.u32 %v3272, 4294901760
    %3855 = vmatpush1.msra.mxu0 %v3854
    %3856 = vmatprep.subr.mxu0 0.0
    %v3857 = vand.u32 %v3273, 4294901760
    %3858 = vmatpush1.msra.mxu0 %v3857
    %3859 = vmatprep.subr.mxu0 0.0
    %v3860 = vand.u32 %v3274, 4294901760
    %3861 = vmatpush1.msra.mxu0 %v3860
    %3862 = vmatprep.subr.mxu0 0.0
    %v3863 = vand.u32 %v3275, 4294901760
    %3864 = vmatpush1.msra.mxu0 %v3863
    %3865 = vmatprep.subr.mxu0 0.0
    %v3866 = vand.u32 %v3276, 4294901760
    %3867 = vmatpush1.msra.mxu0 %v3866
    %3868 = vmatprep.subr.mxu0 0.0
    %v3869 = vand.u32 %v3277, 4294901760
    %3870 = vmatpush1.msra.mxu0 %v3869
    %3871 = vmatprep.subr.mxu0 0.0
    %v3872 = vand.u32 %v3278, 4294901760
    %3873 = vmatpush1.msra.mxu0 %v3872
    %3874 = vmatprep.subr.mxu0 0.0
    %v3875 = vand.u32 %v3279, 4294901760
    %3876 = vmatpush1.msra.mxu0 %v3875
    %3877 = vmatprep.subr.mxu0 0.0
    %v3878 = vand.u32 %v3280, 4294901760
    %3879 = vmatpush1.msra.mxu0 %v3878
    %3880 = vmatprep.subr.mxu0 0.0
    %v3881 = vand.u32 %v3281, 4294901760
    %3882 = vmatpush1.msra.mxu0 %v3881
    %3883 = vmatprep.subr.mxu0 0.0
    %v3884 = vand.u32 %v3282, 4294901760
    %3885 = vmatpush1.msra.mxu0 %v3884
    %3886 = vmatprep.subr.mxu0 0.0
    %v3887 = vand.u32 %v3283, 4294901760
    %3888 = vmatpush1.msra.mxu0 %v3887
    %3889 = vmatprep.subr.mxu0 0.0
    %v3890 = vand.u32 %v3284, 4294901760
    %3891 = vmatpush1.msra.mxu0 %v3890
    %3892 = vmatprep.subr.mxu0 0.0
    %3893 = vmatpush1.msra.mxu0 0.0
    %3894 = vmatprep.subr.mxu0 0.0
    %3895 = vmatpush1.msra.mxu0 0.0
    %3896 = vmatprep.subr.mxu0 0.0
    %3897 = vmatpush1.msra.mxu0 0.0
    %3898 = vmatprep.subr.mxu0 0.0
    %3899 = vmatpush1.msra.mxu0 0.0
    %3900 = vmatprep.subr.mxu0 0.0
    %3901 = vmatpush1.msra.mxu0 0.0
    %3902 = vmatprep.subr.mxu0 0.0
    %3903 = vmatpush1.msra.mxu0 0.0
    %3904 = vmatprep.subr.mxu0 0.0
    %3905 = vmatpush1.msra.mxu0 0.0
    %3906 = vmatprep.subr.mxu0 0.0
    %3907 = vmatpush1.msra.mxu0 0.0
    %3908 = vmatprep.subr.mxu0 0.0
    %3909 = vmatpush1.msra.mxu0 0.0
    %3910 = vmatprep.subr.mxu0 0.0
    %3911 = vmatpush1.msra.mxu0 0.0
    %3912 = vmatprep.subr.mxu0 0.0
    %3913 = vmatpush1.msra.mxu0 0.0
    %3914 = vmatprep.subr.mxu0 0.0
    %3915 = vmatpush1.msra.mxu0 0.0
    %3916 = vmatprep.subr.mxu0 0.0
    %3917 = vmatpush1.msra.mxu0 0.0
    %3918 = vmatprep.subr.mxu0 0.0
    %3919 = vmatpush1.msra.mxu0 0.0
    %3920 = vmatprep.subr.mxu0 0.0
    %3921 = vmatpush1.msra.mxu0 0.0
    %3922 = vmatprep.subr.mxu0 0.0
    %3923 = vmatpush1.msra.mxu0 0.0
    %3924 = vmatprep.mubr.f32.mxu0 0.0
    %v3925 = vand.u32 %v3268, 4294901760
    %3926 = vmatmul.mubr.f32.gmra.mrb[0].mxu0 %v3925
    %v3927 = vpop.f32.mrb[0].mxu0
    %v3928 = vadd.f32 %v3841, %v3927
    %v3929 = vpop.f32.mrb[0].mxu0
    %3930 = vdwg.mxu0
    %v3931 = vtanh.pop %v3928
    %s3932 = scalar_lea.vmem [#allocation5], 128
    %v3933 = vld [vmem:[%s3932] sm:$0xff]
    %v3934 = vld [vmem:[%s3932 + $0x8] sm:$0xff]
    %v3935 = vld [vmem:[%s3932 + $0x10] sm:$0xff]
    %v3936 = vld [vmem:[%s3932 + $0x18] sm:$0xff]
    %v3937 = vld [vmem:[%s3932 + $0x20] sm:$0xff]
    %v3938 = vld [vmem:[%s3932 + $0x28] sm:$0xff]
    %v3939 = vld [vmem:[%s3932 + $0x30] sm:$0xff]
    %v3940 = vld [vmem:[%s3932 + $0x38] sm:$0xff]
    %v3941 = vld [vmem:[%s3932 + $0x40] sm:$0xff]
    %v3942 = vld [vmem:[%s3932 + $0x48] sm:$0xff]
    %v3943 = vld [vmem:[%s3932 + $0x50] sm:$0xff]
    %v3944 = vld [vmem:[%s3932 + $0x58] sm:$0xff]
    %v3945 = vld [vmem:[%s3932 + $0x60] sm:$0xff]
    %v3946 = vld [vmem:[%s3932 + $0x68] sm:$0xff]
    %v3947 = vld [vmem:[%s3932 + $0x70] sm:$0xff]
    %v3948 = vld [vmem:[%s3932 + $0x78] sm:$0xff]
    %v3949 = vld [vmem:[%s3 + $0x2] sm:$0x1]
    %v3950 = vlaneseq
    %v3951 = vshrl.u32 %v3950, 7
    %v3952 = vsub.s32 0, %v3951
    %v3953 = vrot.slane %v3949, %v3952
    %3954 = vmatprep.subr.mxu0 0.0
    %v3955 = vand.u32 %v3933, 4294901760
    %3956 = vmatpush1.msra.mxu0 %v3955
    %3957 = vmatprep.subr.mxu0 0.0
    %v3958 = vand.u32 %v3934, 4294901760
    %3959 = vmatpush1.msra.mxu0 %v3958
    %3960 = vmatprep.subr.mxu0 0.0
    %v3961 = vand.u32 %v3935, 4294901760
    %3962 = vmatpush1.msra.mxu0 %v3961
    %3963 = vmatprep.subr.mxu0 0.0
    %v3964 = vand.u32 %v3936, 4294901760
    %3965 = vmatpush1.msra.mxu0 %v3964
    %3966 = vmatprep.subr.mxu0 0.0
    %v3967 = vand.u32 %v3937, 4294901760
    %3968 = vmatpush1.msra.mxu0 %v3967
    %3969 = vmatprep.subr.mxu0 0.0
    %v3970 = vand.u32 %v3938, 4294901760
    %3971 = vmatpush1.msra.mxu0 %v3970
    %3972 = vmatprep.subr.mxu0 0.0
    %v3973 = vand.u32 %v3939, 4294901760
    %3974 = vmatpush1.msra.mxu0 %v3973
    %3975 = vmatprep.subr.mxu0 0.0
    %v3976 = vand.u32 %v3940, 4294901760
    %3977 = vmatpush1.msra.mxu0 %v3976
    %3978 = vmatprep.subr.mxu0 0.0
    %v3979 = vand.u32 %v3941, 4294901760
    %3980 = vmatpush1.msra.mxu0 %v3979
    %3981 = vmatprep.subr.mxu0 0.0
    %v3982 = vand.u32 %v3942, 4294901760
    %3983 = vmatpush1.msra.mxu0 %v3982
    %3984 = vmatprep.subr.mxu0 0.0
    %v3985 = vand.u32 %v3943, 4294901760
    %3986 = vmatpush1.msra.mxu0 %v3985
    %3987 = vmatprep.subr.mxu0 0.0
    %v3988 = vand.u32 %v3944, 4294901760
    %3989 = vmatpush1.msra.mxu0 %v3988
    %3990 = vmatprep.subr.mxu0 0.0
    %v3991 = vand.u32 %v3945, 4294901760
    %3992 = vmatpush1.msra.mxu0 %v3991
    %3993 = vmatprep.subr.mxu0 0.0
    %v3994 = vand.u32 %v3946, 4294901760
    %3995 = vmatpush1.msra.mxu0 %v3994
    %3996 = vmatprep.subr.mxu0 0.0
    %v3997 = vand.u32 %v3947, 4294901760
    %3998 = vmatpush1.msra.mxu0 %v3997
    %3999 = vmatprep.subr.mxu0 0.0
    %v4000 = vand.u32 %v3948, 4294901760
    %4001 = vmatpush1.msra.mxu0 %v4000
    %4002 = vmatprep.subr.mxu0 0.0
    %4003 = vmatpush1.msra.mxu0 0.0
    %4004 = vmatprep.subr.mxu0 0.0
    %4005 = vmatpush1.msra.mxu0 0.0
    %4006 = vmatprep.subr.mxu0 0.0
    %4007 = vmatpush1.msra.mxu0 0.0
    %4008 = vmatprep.subr.mxu0 0.0
    %4009 = vmatpush1.msra.mxu0 0.0
    %4010 = vmatprep.subr.mxu0 0.0
    %4011 = vmatpush1.msra.mxu0 0.0
    %4012 = vmatprep.subr.mxu0 0.0
    %4013 = vmatpush1.msra.mxu0 0.0
    %4014 = vmatprep.subr.mxu0 0.0
    %4015 = vmatpush1.msra.mxu0 0.0
    %4016 = vmatprep.subr.mxu0 0.0
    %4017 = vmatpush1.msra.mxu0 0.0
    %4018 = vmatprep.subr.mxu0 0.0
    %4019 = vmatpush1.msra.mxu0 0.0
    %4020 = vmatprep.subr.mxu0 0.0
    %4021 = vmatpush1.msra.mxu0 0.0
    %4022 = vmatprep.subr.mxu0 0.0
    %4023 = vmatpush1.msra.mxu0 0.0
    %4024 = vmatprep.subr.mxu0 0.0
    %4025 = vmatpush1.msra.mxu0 0.0
    %4026 = vmatprep.subr.mxu0 0.0
    %4027 = vmatpush1.msra.mxu0 0.0
    %4028 = vmatprep.subr.mxu0 0.0
    %4029 = vmatpush1.msra.mxu0 0.0
    %4030 = vmatprep.subr.mxu0 0.0
    %4031 = vmatpush1.msra.mxu0 0.0
    %4032 = vmatprep.subr.mxu0 0.0
    %4033 = vmatpush1.msra.mxu0 0.0
    %4034 = vmatprep.mubr.f32.mxu0 0.0
    %v4035 = vand.u32 %v3931, 4294901760
    %v4036 = vsub.f32 %v3931, %v4035
    %v4037 = vand.u32 %v4036, 4294901760
    %v4038 = vsub.f32 %v4036, %v4037
    %v4039 = vand.u32 %v4038, 4294901760
    %4040 = vmatmul.mubr.f32.gmra.mrb[0].mxu0 %v4039
    %v4041 = vpop.f32.mrb[0].mxu0
    %v4042 = vadd.f32 %v3953, %v4041
    %v4043 = vpop.f32.mrb[0].mxu0
    %4044 = vdwg.mxu0
    %4045 = vmatprep.subr.mxu0 0.0
    %v4046 = vand.u32 %v3933, 4294901760
    %v4047 = vsub.f32 %v3933, %v4046
    %v4048 = vand.u32 %v4047, 4294901760
    %v4049 = vsub.f32 %v4047, %v4048
    %v4050 = vand.u32 %v4049, 4294901760
    %4051 = vmatpush1.msra.mxu0 %v4050
    %4052 = vmatprep.subr.mxu0 0.0
    %v4053 = vand.u32 %v3934, 4294901760
    %v4054 = vsub.f32 %v3934, %v4053
    %v4055 = vand.u32 %v4054, 4294901760
    %v4056 = vsub.f32 %v4054, %v4055
    %v4057 = vand.u32 %v4056, 4294901760
    %4058 = vmatpush1.msra.mxu0 %v4057
    %4059 = vmatprep.subr.mxu0 0.0
    %v4060 = vand.u32 %v3935, 4294901760
    %v4061 = vsub.f32 %v3935, %v4060
    %v4062 = vand.u32 %v4061, 4294901760
    %v4063 = vsub.f32 %v4061, %v4062
    %v4064 = vand.u32 %v4063, 4294901760
    %4065 = vmatpush1.msra.mxu0 %v4064
    %4066 = vmatprep.subr.mxu0 0.0
    %v4067 = vand.u32 %v3936, 4294901760
    %v4068 = vsub.f32 %v3936, %v4067
    %v4069 = vand.u32 %v4068, 4294901760
    %v4070 = vsub.f32 %v4068, %v4069
    %v4071 = vand.u32 %v4070, 4294901760
    %4072 = vmatpush1.msra.mxu0 %v4071
    %4073 = vmatprep.subr.mxu0 0.0
    %v4074 = vand.u32 %v3937, 4294901760
    %v4075 = vsub.f32 %v3937, %v4074
    %v4076 = vand.u32 %v4075, 4294901760
    %v4077 = vsub.f32 %v4075, %v4076
    %v4078 = vand.u32 %v4077, 4294901760
    %4079 = vmatpush1.msra.mxu0 %v4078
    %4080 = vmatprep.subr.mxu0 0.0
    %v4081 = vand.u32 %v3938, 4294901760
    %v4082 = vsub.f32 %v3938, %v4081
    %v4083 = vand.u32 %v4082, 4294901760
    %v4084 = vsub.f32 %v4082, %v4083
    %v4085 = vand.u32 %v4084, 4294901760
    %4086 = vmatpush1.msra.mxu0 %v4085
    %4087 = vmatprep.subr.mxu0 0.0
    %v4088 = vand.u32 %v3939, 4294901760
    %v4089 = vsub.f32 %v3939, %v4088
    %v4090 = vand.u32 %v4089, 4294901760
    %v4091 = vsub.f32 %v4089, %v4090
    %v4092 = vand.u32 %v4091, 4294901760
    %4093 = vmatpush1.msra.mxu0 %v4092
    %4094 = vmatprep.subr.mxu0 0.0
    %v4095 = vand.u32 %v3940, 4294901760
    %v4096 = vsub.f32 %v3940, %v4095
    %v4097 = vand.u32 %v4096, 4294901760
    %v4098 = vsub.f32 %v4096, %v4097
    %v4099 = vand.u32 %v4098, 4294901760
    %4100 = vmatpush1.msra.mxu0 %v4099
    %4101 = vmatprep.subr.mxu0 0.0
    %v4102 = vand.u32 %v3941, 4294901760
    %v4103 = vsub.f32 %v3941, %v4102
    %v4104 = vand.u32 %v4103, 4294901760
    %v4105 = vsub.f32 %v4103, %v4104
    %v4106 = vand.u32 %v4105, 4294901760
    %4107 = vmatpush1.msra.mxu0 %v4106
    %4108 = vmatprep.subr.mxu0 0.0
    %v4109 = vand.u32 %v3942, 4294901760
    %v4110 = vsub.f32 %v3942, %v4109
    %v4111 = vand.u32 %v4110, 4294901760
    %v4112 = vsub.f32 %v4110, %v4111
    %v4113 = vand.u32 %v4112, 4294901760
    %4114 = vmatpush1.msra.mxu0 %v4113
    %4115 = vmatprep.subr.mxu0 0.0
    %v4116 = vand.u32 %v3943, 4294901760
    %v4117 = vsub.f32 %v3943, %v4116
    %v4118 = vand.u32 %v4117, 4294901760
    %v4119 = vsub.f32 %v4117, %v4118
    %v4120 = vand.u32 %v4119, 4294901760
    %4121 = vmatpush1.msra.mxu0 %v4120
    %4122 = vmatprep.subr.mxu0 0.0
    %v4123 = vand.u32 %v3944, 4294901760
    %v4124 = vsub.f32 %v3944, %v4123
    %v4125 = vand.u32 %v4124, 4294901760
    %v4126 = vsub.f32 %v4124, %v4125
    %v4127 = vand.u32 %v4126, 4294901760
    %4128 = vmatpush1.msra.mxu0 %v4127
    %4129 = vmatprep.subr.mxu0 0.0
    %v4130 = vand.u32 %v3945, 4294901760
    %v4131 = vsub.f32 %v3945, %v4130
    %v4132 = vand.u32 %v4131, 4294901760
    %v4133 = vsub.f32 %v4131, %v4132
    %v4134 = vand.u32 %v4133, 4294901760
    %4135 = vmatpush1.msra.mxu0 %v4134
    %4136 = vmatprep.subr.mxu0 0.0
    %v4137 = vand.u32 %v3946, 4294901760
    %v4138 = vsub.f32 %v3946, %v4137
    %v4139 = vand.u32 %v4138, 4294901760
    %v4140 = vsub.f32 %v4138, %v4139
    %v4141 = vand.u32 %v4140, 4294901760
    %4142 = vmatpush1.msra.mxu0 %v4141
    %4143 = vmatprep.subr.mxu0 0.0
    %v4144 = vand.u32 %v3947, 4294901760
    %v4145 = vsub.f32 %v3947, %v4144
    %v4146 = vand.u32 %v4145, 4294901760
    %v4147 = vsub.f32 %v4145, %v4146
    %v4148 = vand.u32 %v4147, 4294901760
    %4149 = vmatpush1.msra.mxu0 %v4148
    %4150 = vmatprep.subr.mxu0 0.0
    %v4151 = vand.u32 %v3948, 4294901760
    %v4152 = vsub.f32 %v3948, %v4151
    %v4153 = vand.u32 %v4152, 4294901760
    %v4154 = vsub.f32 %v4152, %v4153
    %v4155 = vand.u32 %v4154, 4294901760
    %4156 = vmatpush1.msra.mxu0 %v4155
    %4157 = vmatprep.subr.mxu0 0.0
    %4158 = vmatpush1.msra.mxu0 0.0
    %4159 = vmatprep.subr.mxu0 0.0
    %4160 = vmatpush1.msra.mxu0 0.0
    %4161 = vmatprep.subr.mxu0 0.0
    %4162 = vmatpush1.msra.mxu0 0.0
    %4163 = vmatprep.subr.mxu0 0.0
    %4164 = vmatpush1.msra.mxu0 0.0
    %4165 = vmatprep.subr.mxu0 0.0
    %4166 = vmatpush1.msra.mxu0 0.0
    %4167 = vmatprep.subr.mxu0 0.0
    %4168 = vmatpush1.msra.mxu0 0.0
    %4169 = vmatprep.subr.mxu0 0.0
    %4170 = vmatpush1.msra.mxu0 0.0
    %4171 = vmatprep.subr.mxu0 0.0
    %4172 = vmatpush1.msra.mxu0 0.0
    %4173 = vmatprep.subr.mxu0 0.0
    %4174 = vmatpush1.msra.mxu0 0.0
    %4175 = vmatprep.subr.mxu0 0.0
    %4176 = vmatpush1.msra.mxu0 0.0
    %4177 = vmatprep.subr.mxu0 0.0
    %4178 = vmatpush1.msra.mxu0 0.0
    %4179 = vmatprep.subr.mxu0 0.0
    %4180 = vmatpush1.msra.mxu0 0.0
    %4181 = vmatprep.subr.mxu0 0.0
    %4182 = vmatpush1.msra.mxu0 0.0
    %4183 = vmatprep.subr.mxu0 0.0
    %4184 = vmatpush1.msra.mxu0 0.0
    %4185 = vmatprep.subr.mxu0 0.0
    %4186 = vmatpush1.msra.mxu0 0.0
    %4187 = vmatprep.subr.mxu0 0.0
    %4188 = vmatpush1.msra.mxu0 0.0
    %4189 = vmatprep.mubr.f32.mxu0 0.0
    %v4190 = vand.u32 %v3931, 4294901760
    %4191 = vmatmul.mubr.f32.gmra.mrb[0].mxu0 %v4190
    %v4192 = vpop.f32.mrb[0].mxu0
    %v4193 = vadd.f32 %v4042, %v4192
    %v4194 = vpop.f32.mrb[0].mxu0
    %4195 = vdwg.mxu0
    %4196 = vmatprep.subr.mxu0 0.0
    %v4197 = vand.u32 %v3933, 4294901760
    %v4198 = vsub.f32 %v3933, %v4197
    %4199 = vmatpush1.msra.mxu0 %v4198
    %4200 = vmatprep.subr.mxu0 0.0
    %v4201 = vand.u32 %v3934, 4294901760
    %v4202 = vsub.f32 %v3934, %v4201
    %4203 = vmatpush1.msra.mxu0 %v4202
    %4204 = vmatprep.subr.mxu0 0.0
    %v4205 = vand.u32 %v3935, 4294901760
    %v4206 = vsub.f32 %v3935, %v4205
    %4207 = vmatpush1.msra.mxu0 %v4206
    %4208 = vmatprep.subr.mxu0 0.0
    %v4209 = vand.u32 %v3936, 4294901760
    %v4210 = vsub.f32 %v3936, %v4209
    %4211 = vmatpush1.msra.mxu0 %v4210
    %4212 = vmatprep.subr.mxu0 0.0
    %v4213 = vand.u32 %v3937, 4294901760
    %v4214 = vsub.f32 %v3937, %v4213
    %4215 = vmatpush1.msra.mxu0 %v4214
    %4216 = vmatprep.subr.mxu0 0.0
    %v4217 = vand.u32 %v3938, 4294901760
    %v4218 = vsub.f32 %v3938, %v4217
    %4219 = vmatpush1.msra.mxu0 %v4218
    %4220 = vmatprep.subr.mxu0 0.0
    %v4221 = vand.u32 %v3939, 4294901760
    %v4222 = vsub.f32 %v3939, %v4221
    %4223 = vmatpush1.msra.mxu0 %v4222
    %4224 = vmatprep.subr.mxu0 0.0
    %v4225 = vand.u32 %v3940, 4294901760
    %v4226 = vsub.f32 %v3940, %v4225
    %4227 = vmatpush1.msra.mxu0 %v4226
    %4228 = vmatprep.subr.mxu0 0.0
    %v4229 = vand.u32 %v3941, 4294901760
    %v4230 = vsub.f32 %v3941, %v4229
    %4231 = vmatpush1.msra.mxu0 %v4230
    %4232 = vmatprep.subr.mxu0 0.0
    %v4233 = vand.u32 %v3942, 4294901760
    %v4234 = vsub.f32 %v3942, %v4233
    %4235 = vmatpush1.msra.mxu0 %v4234
    %4236 = vmatprep.subr.mxu0 0.0
    %v4237 = vand.u32 %v3943, 4294901760
    %v4238 = vsub.f32 %v3943, %v4237
    %4239 = vmatpush1.msra.mxu0 %v4238
    %4240 = vmatprep.subr.mxu0 0.0
    %v4241 = vand.u32 %v3944, 4294901760
    %v4242 = vsub.f32 %v3944, %v4241
    %4243 = vmatpush1.msra.mxu0 %v4242
    %4244 = vmatprep.subr.mxu0 0.0
    %v4245 = vand.u32 %v3945, 4294901760
    %v4246 = vsub.f32 %v3945, %v4245
    %4247 = vmatpush1.msra.mxu0 %v4246
    %4248 = vmatprep.subr.mxu0 0.0
    %v4249 = vand.u32 %v3946, 4294901760
    %v4250 = vsub.f32 %v3946, %v4249
    %4251 = vmatpush1.msra.mxu0 %v4250
    %4252 = vmatprep.subr.mxu0 0.0
    %v4253 = vand.u32 %v3947, 4294901760
    %v4254 = vsub.f32 %v3947, %v4253
    %4255 = vmatpush1.msra.mxu0 %v4254
    %4256 = vmatprep.subr.mxu0 0.0
    %v4257 = vand.u32 %v3948, 4294901760
    %v4258 = vsub.f32 %v3948, %v4257
    %4259 = vmatpush1.msra.mxu0 %v4258
    %4260 = vmatprep.subr.mxu0 0.0
    %4261 = vmatpush1.msra.mxu0 0.0
    %4262 = vmatprep.subr.mxu0 0.0
    %4263 = vmatpush1.msra.mxu0 0.0
    %4264 = vmatprep.subr.mxu0 0.0
    %4265 = vmatpush1.msra.mxu0 0.0
    %4266 = vmatprep.subr.mxu0 0.0
    %4267 = vmatpush1.msra.mxu0 0.0
    %4268 = vmatprep.subr.mxu0 0.0
    %4269 = vmatpush1.msra.mxu0 0.0
    %4270 = vmatprep.subr.mxu0 0.0
    %4271 = vmatpush1.msra.mxu0 0.0
    %4272 = vmatprep.subr.mxu0 0.0
    %4273 = vmatpush1.msra.mxu0 0.0
    %4274 = vmatprep.subr.mxu0 0.0
    %4275 = vmatpush1.msra.mxu0 0.0
    %4276 = vmatprep.subr.mxu0 0.0
    %4277 = vmatpush1.msra.mxu0 0.0
    %4278 = vmatprep.subr.mxu0 0.0
    %4279 = vmatpush1.msra.mxu0 0.0
    %4280 = vmatprep.subr.mxu0 0.0
    %4281 = vmatpush1.msra.mxu0 0.0
    %4282 = vmatprep.subr.mxu0 0.0
    %4283 = vmatpush1.msra.mxu0 0.0
    %4284 = vmatprep.subr.mxu0 0.0
    %4285 = vmatpush1.msra.mxu0 0.0
    %4286 = vmatprep.subr.mxu0 0.0
    %4287 = vmatpush1.msra.mxu0 0.0
    %4288 = vmatprep.subr.mxu0 0.0
    %4289 = vmatpush1.msra.mxu0 0.0
    %4290 = vmatprep.subr.mxu0 0.0
    %4291 = vmatpush1.msra.mxu0 0.0
    %4292 = vmatprep.mubr.f32.mxu0 0.0
    %v4293 = vand.u32 %v3931, 4294901760
    %v4294 = vsub.f32 %v3931, %v4293
    %4295 = vmatmul.mubr.f32.gmra.mrb[0].mxu0 %v4294
    %v4296 = vpop.f32.mrb[0].mxu0
    %v4297 = vadd.f32 %v4193, %v4296
    %v4298 = vpop.f32.mrb[0].mxu0
    %4299 = vdwg.mxu0
    %4300 = vmatprep.subr.mxu0 0.0
    %v4301 = vand.u32 %v3933, 4294901760
    %4302 = vmatpush1.msra.mxu0 %v4301
    %4303 = vmatprep.subr.mxu0 0.0
    %v4304 = vand.u32 %v3934, 4294901760
    %4305 = vmatpush1.msra.mxu0 %v4304
    %4306 = vmatprep.subr.mxu0 0.0
    %v4307 = vand.u32 %v3935, 4294901760
    %4308 = vmatpush1.msra.mxu0 %v4307
    %4309 = vmatprep.subr.mxu0 0.0
    %v4310 = vand.u32 %v3936, 4294901760
    %4311 = vmatpush1.msra.mxu0 %v4310
    %4312 = vmatprep.subr.mxu0 0.0
    %v4313 = vand.u32 %v3937, 4294901760
    %4314 = vmatpush1.msra.mxu0 %v4313
    %4315 = vmatprep.subr.mxu0 0.0
    %v4316 = vand.u32 %v3938, 4294901760
    %4317 = vmatpush1.msra.mxu0 %v4316
    %4318 = vmatprep.subr.mxu0 0.0
    %v4319 = vand.u32 %v3939, 4294901760
    %4320 = vmatpush1.msra.mxu0 %v4319
    %4321 = vmatprep.subr.mxu0 0.0
    %v4322 = vand.u32 %v3940, 4294901760
    %4323 = vmatpush1.msra.mxu0 %v4322
    %4324 = vmatprep.subr.mxu0 0.0
    %v4325 = vand.u32 %v3941, 4294901760
    %4326 = vmatpush1.msra.mxu0 %v4325
    %4327 = vmatprep.subr.mxu0 0.0
    %v4328 = vand.u32 %v3942, 4294901760
    %4329 = vmatpush1.msra.mxu0 %v4328
    %4330 = vmatprep.subr.mxu0 0.0
    %v4331 = vand.u32 %v3943, 4294901760
    %4332 = vmatpush1.msra.mxu0 %v4331
    %4333 = vmatprep.subr.mxu0 0.0
    %v4334 = vand.u32 %v3944, 4294901760
    %4335 = vmatpush1.msra.mxu0 %v4334
    %4336 = vmatprep.subr.mxu0 0.0
    %v4337 = vand.u32 %v3945, 4294901760
    %4338 = vmatpush1.msra.mxu0 %v4337
    %4339 = vmatprep.subr.mxu0 0.0
    %v4340 = vand.u32 %v3946, 4294901760
    %4341 = vmatpush1.msra.mxu0 %v4340
    %4342 = vmatprep.subr.mxu0 0.0
    %v4343 = vand.u32 %v3947, 4294901760
    %4344 = vmatpush1.msra.mxu0 %v4343
    %4345 = vmatprep.subr.mxu0 0.0
    %v4346 = vand.u32 %v3948, 4294901760
    %4347 = vmatpush1.msra.mxu0 %v4346
    %4348 = vmatprep.subr.mxu0 0.0
    %4349 = vmatpush1.msra.mxu0 0.0
    %4350 = vmatprep.subr.mxu0 0.0
    %4351 = vmatpush1.msra.mxu0 0.0
    %4352 = vmatprep.subr.mxu0 0.0
    %4353 = vmatpush1.msra.mxu0 0.0
    %4354 = vmatprep.subr.mxu0 0.0
    %4355 = vmatpush1.msra.mxu0 0.0
    %4356 = vmatprep.subr.mxu0 0.0
    %4357 = vmatpush1.msra.mxu0 0.0
    %4358 = vmatprep.subr.mxu0 0.0
    %4359 = vmatpush1.msra.mxu0 0.0
    %4360 = vmatprep.subr.mxu0 0.0
    %4361 = vmatpush1.msra.mxu0 0.0
    %4362 = vmatprep.subr.mxu0 0.0
    %4363 = vmatpush1.msra.mxu0 0.0
    %4364 = vmatprep.subr.mxu0 0.0
    %4365 = vmatpush1.msra.mxu0 0.0
    %4366 = vmatprep.subr.mxu0 0.0
    %4367 = vmatpush1.msra.mxu0 0.0
    %4368 = vmatprep.subr.mxu0 0.0
    %4369 = vmatpush1.msra.mxu0 0.0
    %4370 = vmatprep.subr.mxu0 0.0
    %4371 = vmatpush1.msra.mxu0 0.0
    %4372 = vmatprep.subr.mxu0 0.0
    %4373 = vmatpush1.msra.mxu0 0.0
    %4374 = vmatprep.subr.mxu0 0.0
    %4375 = vmatpush1.msra.mxu0 0.0
    %4376 = vmatprep.subr.mxu0 0.0
    %4377 = vmatpush1.msra.mxu0 0.0
    %4378 = vmatprep.subr.mxu0 0.0
    %4379 = vmatpush1.msra.mxu0 0.0
    %4380 = vmatprep.mubr.f32.mxu0 0.0
    %v4381 = vand.u32 %v3931, 4294901760
    %v4382 = vsub.f32 %v3931, %v4381
    %v4383 = vand.u32 %v4382, 4294901760
    %4384 = vmatmul.mubr.f32.gmra.mrb[0].mxu0 %v4383
    %v4385 = vpop.f32.mrb[0].mxu0
    %v4386 = vadd.f32 %v4297, %v4385
    %v4387 = vpop.f32.mrb[0].mxu0
    %4388 = vdwg.mxu0
    %4389 = vmatprep.subr.mxu0 0.0
    %v4390 = vand.u32 %v3933, 4294901760
    %v4391 = vsub.f32 %v3933, %v4390
    %v4392 = vand.u32 %v4391, 4294901760
    %4393 = vmatpush1.msra.mxu0 %v4392
    %4394 = vmatprep.subr.mxu0 0.0
    %v4395 = vand.u32 %v3934, 4294901760
    %v4396 = vsub.f32 %v3934, %v4395
    %v4397 = vand.u32 %v4396, 4294901760
    %4398 = vmatpush1.msra.mxu0 %v4397
    %4399 = vmatprep.subr.mxu0 0.0
    %v4400 = vand.u32 %v3935, 4294901760
    %v4401 = vsub.f32 %v3935, %v4400
    %v4402 = vand.u32 %v4401, 4294901760
    %4403 = vmatpush1.msra.mxu0 %v4402
    %4404 = vmatprep.subr.mxu0 0.0
    %v4405 = vand.u32 %v3936, 4294901760
    %v4406 = vsub.f32 %v3936, %v4405
    %v4407 = vand.u32 %v4406, 4294901760
    %4408 = vmatpush1.msra.mxu0 %v4407
    %4409 = vmatprep.subr.mxu0 0.0
    %v4410 = vand.u32 %v3937, 4294901760
    %v4411 = vsub.f32 %v3937, %v4410
    %v4412 = vand.u32 %v4411, 4294901760
    %4413 = vmatpush1.msra.mxu0 %v4412
    %4414 = vmatprep.subr.mxu0 0.0
    %v4415 = vand.u32 %v3938, 4294901760
    %v4416 = vsub.f32 %v3938, %v4415
    %v4417 = vand.u32 %v4416, 4294901760
    %4418 = vmatpush1.msra.mxu0 %v4417
    %4419 = vmatprep.subr.mxu0 0.0
    %v4420 = vand.u32 %v3939, 4294901760
    %v4421 = vsub.f32 %v3939, %v4420
    %v4422 = vand.u32 %v4421, 4294901760
    %4423 = vmatpush1.msra.mxu0 %v4422
    %4424 = vmatprep.subr.mxu0 0.0
    %v4425 = vand.u32 %v3940, 4294901760
    %v4426 = vsub.f32 %v3940, %v4425
    %v4427 = vand.u32 %v4426, 4294901760
    %4428 = vmatpush1.msra.mxu0 %v4427
    %4429 = vmatprep.subr.mxu0 0.0
    %v4430 = vand.u32 %v3941, 4294901760
    %v4431 = vsub.f32 %v3941, %v4430
    %v4432 = vand.u32 %v4431, 4294901760
    %4433 = vmatpush1.msra.mxu0 %v4432
    %4434 = vmatprep.subr.mxu0 0.0
    %v4435 = vand.u32 %v3942, 4294901760
    %v4436 = vsub.f32 %v3942, %v4435
    %v4437 = vand.u32 %v4436, 4294901760
    %4438 = vmatpush1.msra.mxu0 %v4437
    %4439 = vmatprep.subr.mxu0 0.0
    %v4440 = vand.u32 %v3943, 4294901760
    %v4441 = vsub.f32 %v3943, %v4440
    %v4442 = vand.u32 %v4441, 4294901760
    %4443 = vmatpush1.msra.mxu0 %v4442
    %4444 = vmatprep.subr.mxu0 0.0
    %v4445 = vand.u32 %v3944, 4294901760
    %v4446 = vsub.f32 %v3944, %v4445
    %v4447 = vand.u32 %v4446, 4294901760
    %4448 = vmatpush1.msra.mxu0 %v4447
    %4449 = vmatprep.subr.mxu0 0.0
    %v4450 = vand.u32 %v3945, 4294901760
    %v4451 = vsub.f32 %v3945, %v4450
    %v4452 = vand.u32 %v4451, 4294901760
    %4453 = vmatpush1.msra.mxu0 %v4452
    %4454 = vmatprep.subr.mxu0 0.0
    %v4455 = vand.u32 %v3946, 4294901760
    %v4456 = vsub.f32 %v3946, %v4455
    %v4457 = vand.u32 %v4456, 4294901760
    %4458 = vmatpush1.msra.mxu0 %v4457
    %4459 = vmatprep.subr.mxu0 0.0
    %v4460 = vand.u32 %v3947, 4294901760
    %v4461 = vsub.f32 %v3947, %v4460
    %v4462 = vand.u32 %v4461, 4294901760
    %4463 = vmatpush1.msra.mxu0 %v4462
    %4464 = vmatprep.subr.mxu0 0.0
    %v4465 = vand.u32 %v3948, 4294901760
    %v4466 = vsub.f32 %v3948, %v4465
    %v4467 = vand.u32 %v4466, 4294901760
    %4468 = vmatpush1.msra.mxu0 %v4467
    %4469 = vmatprep.subr.mxu0 0.0
    %4470 = vmatpush1.msra.mxu0 0.0
    %4471 = vmatprep.subr.mxu0 0.0
    %4472 = vmatpush1.msra.mxu0 0.0
    %4473 = vmatprep.subr.mxu0 0.0
    %4474 = vmatpush1.msra.mxu0 0.0
    %4475 = vmatprep.subr.mxu0 0.0
    %4476 = vmatpush1.msra.mxu0 0.0
    %4477 = vmatprep.subr.mxu0 0.0
    %4478 = vmatpush1.msra.mxu0 0.0
    %4479 = vmatprep.subr.mxu0 0.0
    %4480 = vmatpush1.msra.mxu0 0.0
    %4481 = vmatprep.subr.mxu0 0.0
    %4482 = vmatpush1.msra.mxu0 0.0
    %4483 = vmatprep.subr.mxu0 0.0
    %4484 = vmatpush1.msra.mxu0 0.0
    %4485 = vmatprep.subr.mxu0 0.0
    %4486 = vmatpush1.msra.mxu0 0.0
    %4487 = vmatprep.subr.mxu0 0.0
    %4488 = vmatpush1.msra.mxu0 0.0
    %4489 = vmatprep.subr.mxu0 0.0
    %4490 = vmatpush1.msra.mxu0 0.0
    %4491 = vmatprep.subr.mxu0 0.0
    %4492 = vmatpush1.msra.mxu0 0.0
    %4493 = vmatprep.subr.mxu0 0.0
    %4494 = vmatpush1.msra.mxu0 0.0
    %4495 = vmatprep.subr.mxu0 0.0
    %4496 = vmatpush1.msra.mxu0 0.0
    %4497 = vmatprep.subr.mxu0 0.0
    %4498 = vmatpush1.msra.mxu0 0.0
    %4499 = vmatprep.subr.mxu0 0.0
    %4500 = vmatpush1.msra.mxu0 0.0
    %4501 = vmatprep.mubr.f32.mxu0 0.0
    %v4502 = vand.u32 %v3931, 4294901760
    %4503 = vmatmul.mubr.f32.gmra.mrb[0].mxu0 %v4502
    %v4504 = vpop.f32.mrb[0].mxu0
    %v4505 = vadd.f32 %v4386, %v4504
    %v4506 = vpop.f32.mrb[0].mxu0
    %4507 = vdwg.mxu0
    %4508 = vmatprep.subr.mxu0 0.0
    %v4509 = vand.u32 %v3933, 4294901760
    %4510 = vmatpush1.msra.mxu0 %v4509
    %4511 = vmatprep.subr.mxu0 0.0
    %v4512 = vand.u32 %v3934, 4294901760
    %4513 = vmatpush1.msra.mxu0 %v4512
    %4514 = vmatprep.subr.mxu0 0.0
    %v4515 = vand.u32 %v3935, 4294901760
    %4516 = vmatpush1.msra.mxu0 %v4515
    %4517 = vmatprep.subr.mxu0 0.0
    %v4518 = vand.u32 %v3936, 4294901760
    %4519 = vmatpush1.msra.mxu0 %v4518
    %4520 = vmatprep.subr.mxu0 0.0
    %v4521 = vand.u32 %v3937, 4294901760
    %4522 = vmatpush1.msra.mxu0 %v4521
    %4523 = vmatprep.subr.mxu0 0.0
    %v4524 = vand.u32 %v3938, 4294901760
    %4525 = vmatpush1.msra.mxu0 %v4524
    %4526 = vmatprep.subr.mxu0 0.0
    %v4527 = vand.u32 %v3939, 4294901760
    %4528 = vmatpush1.msra.mxu0 %v4527
    %4529 = vmatprep.subr.mxu0 0.0
    %v4530 = vand.u32 %v3940, 4294901760
    %4531 = vmatpush1.msra.mxu0 %v4530
    %4532 = vmatprep.subr.mxu0 0.0
    %v4533 = vand.u32 %v3941, 4294901760
    %4534 = vmatpush1.msra.mxu0 %v4533
    %4535 = vmatprep.subr.mxu0 0.0
    %v4536 = vand.u32 %v3942, 4294901760
    %4537 = vmatpush1.msra.mxu0 %v4536
    %4538 = vmatprep.subr.mxu0 0.0
    %v4539 = vand.u32 %v3943, 4294901760
    %4540 = vmatpush1.msra.mxu0 %v4539
    %4541 = vmatprep.subr.mxu0 0.0
    %v4542 = vand.u32 %v3944, 4294901760
    %4543 = vmatpush1.msra.mxu0 %v4542
    %4544 = vmatprep.subr.mxu0 0.0
    %v4545 = vand.u32 %v3945, 4294901760
    %4546 = vmatpush1.msra.mxu0 %v4545
    %4547 = vmatprep.subr.mxu0 0.0
    %v4548 = vand.u32 %v3946, 4294901760
    %4549 = vmatpush1.msra.mxu0 %v4548
    %4550 = vmatprep.subr.mxu0 0.0
    %v4551 = vand.u32 %v3947, 4294901760
    %4552 = vmatpush1.msra.mxu0 %v4551
    %4553 = vmatprep.subr.mxu0 0.0
    %v4554 = vand.u32 %v3948, 4294901760
    %4555 = vmatpush1.msra.mxu0 %v4554
    %4556 = vmatprep.subr.mxu0 0.0
    %4557 = vmatpush1.msra.mxu0 0.0
    %4558 = vmatprep.subr.mxu0 0.0
    %4559 = vmatpush1.msra.mxu0 0.0
    %4560 = vmatprep.subr.mxu0 0.0
    %4561 = vmatpush1.msra.mxu0 0.0
    %4562 = vmatprep.subr.mxu0 0.0
    %4563 = vmatpush1.msra.mxu0 0.0
    %4564 = vmatprep.subr.mxu0 0.0
    %4565 = vmatpush1.msra.mxu0 0.0
    %4566 = vmatprep.subr.mxu0 0.0
    %4567 = vmatpush1.msra.mxu0 0.0
    %4568 = vmatprep.subr.mxu0 0.0
    %4569 = vmatpush1.msra.mxu0 0.0
    %4570 = vmatprep.subr.mxu0 0.0
    %4571 = vmatpush1.msra.mxu0 0.0
    %4572 = vmatprep.subr.mxu0 0.0
    %4573 = vmatpush1.msra.mxu0 0.0
    %4574 = vmatprep.subr.mxu0 0.0
    %4575 = vmatpush1.msra.mxu0 0.0
    %4576 = vmatprep.subr.mxu0 0.0
    %4577 = vmatpush1.msra.mxu0 0.0
    %4578 = vmatprep.subr.mxu0 0.0
    %4579 = vmatpush1.msra.mxu0 0.0
    %4580 = vmatprep.subr.mxu0 0.0
    %4581 = vmatpush1.msra.mxu0 0.0
    %4582 = vmatprep.subr.mxu0 0.0
    %4583 = vmatpush1.msra.mxu0 0.0
    %4584 = vmatprep.subr.mxu0 0.0
    %4585 = vmatpush1.msra.mxu0 0.0
    %4586 = vmatprep.subr.mxu0 0.0
    %4587 = vmatpush1.msra.mxu0 0.0
    %4588 = vmatprep.mubr.f32.mxu0 0.0
    %v4589 = vand.u32 %v3931, 4294901760
    %4590 = vmatmul.mubr.f32.gmra.mrb[0].mxu0 %v4589
    %v4591 = vpop.f32.mrb[0].mxu0
    %v4592 = vadd.f32 %v4505, %v4591
    %v4593 = vpop.f32.mrb[0].mxu0
    %4594 = vdwg.mxu0
    %vm4595 = vcmask 156672
    %4596 = vst.msk [vmem:[#allocation7] sm:$0x3] %vm4595, %v4592
    // Predicated region
    $region26: #{_model_forward.1} parent=1 // pred_check
      _
    $region27: #{_model_forward.1} parent=1 // pred_check_branch
      %4598 = sbr.rel (0) target = $region29
    $region28: #{_model_forward.1} parent=1 // pred_region
      %s4600 = ssub.s32 32, 32
      %4601 = vsyncadd [#allocation4], %s4600
      %s4603 = sshll.u32 [#allocation7], 4
      %s4604 = int_to_ptr.vmem [resolvable:$true] %s4603
      %4606 = dma.vmem_to_hbm [thread:$0]  %s4604, 32, %s4, [#allocation4]
    $region29: #{_model_forward.1} parent=1 // pred_fallthru
      _
    // Predicated region
    $region30: #{_model_forward.1} parent=1 // pred_check
      _
    $region31: #{_model_forward.1} parent=1 // pred_check_branch
      %4608 = sbr.rel (0) target = $region33
    $region32: #{_model_forward.1} parent=1 // pred_region
      %4609 = dma.done [#allocation4], 32
    $region33: #{_model_forward.1} parent=1 // pred_fallthru
      _
    %4610 = vsyncpa [#allocation3], 1
    %4611 = vsyncpa [#allocation6], 1
    %4612 = vsyncpa [#allocation4], 1

</llo_original>
